<compile_context>
chip_gen: v6e
topology: v6e:2x2x1
jax: 0.10.0
libtpu: 0.0.40
codegen_flags: <defaults>
</compile_context>

<pallas_src>
import functools

import jax
import jax.numpy as jnp
from jax.experimental import pallas as pl
from jax.experimental.pallas import tpu as pltpu  # noqa: F401  (kept for TPU-specific extensions)


# ------------------------------ fused kernel --------------------------------

def _mash_fused_kernel(pos_ref, x_ref, ctx_ref,
                       mw0_ref, mb0_ref, mw1_ref, mb1_ref,
                       pin_ref, ada_w_ref, ada_b_ref,
                       qkv_w_ref, aout_w_ref, aout_b_ref,
                       xv_w_ref, xout_w_ref, xout_b_ref,
                       ffp_w_ref, ffp_b_ref, ffo_w_ref, ffo_b_ref,
                       nw_ref, nb_ref, pout_ref,
                       o_ref, *, B, L, depth, n_heads, d_head, inner, ff_inner, eps):
    f32 = jnp.float32

    def rd(ref):
        return ref[...].astype(f32)

    def silu(v):
        return v * jax.nn.sigmoid(v)

    def ln(v):
        mean = jnp.mean(v, axis=-1, keepdims=True)
        var = jnp.mean(jnp.square(v - mean), axis=-1, keepdims=True)
        return (v - mean) * jax.lax.rsqrt(var + eps)

    def bcast_rows(v):
        # (B, N) -> (B*L, N): batch row b repeated for the L tokens of batch b.
        # Sublane broadcast + row (sublane) concat — no lane movement.
        return jnp.concatenate(
            [jnp.broadcast_to(v[b:b + 1, :], (L, v.shape[1])) for b in range(B)],
            axis=0)

    # ---- EDM time-MLP + all depth*3 AdaLN (scale|shift) pairs, once per batch ----
    pe = rd(pos_ref)                                                       # (B, t_ch)
    t1 = silu(jnp.dot(pe, rd(mw0_ref), preferred_element_type=f32) + rd(mb0_ref))
    t_emb = silu(jnp.dot(t1, rd(mw1_ref), preferred_element_type=f32) + rd(mb1_ref))
    ada = (jnp.dot(silu(t_emb), rd(ada_w_ref), preferred_element_type=f32)
           + rd(ada_b_ref))                                                # (B, depth*6*inner)
    ada_full = bcast_rows(ada)                                             # (B*L, depth*6*inner)

    x = rd(x_ref)                                                          # (B*L, C_in)
    ctx = rd(ctx_ref)                                                      # (B, ctx_dim)

    # proj_in (no bias) — whole batch in one matmul
    h = jnp.dot(x, rd(pin_ref), preferred_element_type=f32)               # (B*L, inner)

    inv_sqrt_d = d_head ** -0.5

    def modulate(v, base):
        # AdaLayerNorm: LN (no affine), then x*(1+scale)+shift (per-batch scale/shift,
        # pre-broadcast to all tokens).
        scale = ada_full[:, base:base + inner]
        shift = ada_full[:, base + inner:base + 2 * inner]
        return ln(v) * (1.0 + scale) + shift

    # Depth statically unrolled (depth=2 here).  At real MASH depth, switch to a
    # pipelined 'arbitrary' grid axis with per-layer weight streaming (see header note).
    for d in range(depth):
        base = d * 6 * inner

        # --- AdaLN(norm1) + self-attention (fused QKV projection) ---
        ha = modulate(h, base)
        qkv = jnp.dot(ha, qkv_w_ref[d].astype(f32),
                      preferred_element_type=f32)                          # (B*L, 3*inner)
        aout_w = aout_w_ref[d].astype(f32)                                 # (inner, inner)
        projs = []
        for b in range(B):
            r0 = b * L
            qkv_b = qkv[r0:r0 + L, :]                                      # (L, 3*inner)
            acc = None
            for hd in range(n_heads):
                c0 = hd * d_head
                qh = qkv_b[:, c0:c0 + d_head]
                kh = qkv_b[:, inner + c0:inner + c0 + d_head]
                vh = qkv_b[:, 2 * inner + c0:2 * inner + c0 + d_head]
                # Q·K^T contracting last dims — no materialized K transpose.
                s = jax.lax.dot_general(qh, kh, (((1,), (1,)), ((), ())),
                                        preferred_element_type=f32) * inv_sqrt_d
                p = jnp.exp(s - jnp.max(s, axis=-1, keepdims=True))
                p = p * pl.reciprocal(jnp.sum(p, axis=-1, keepdims=True), approx=True)
                o = jnp.dot(p, vh, preferred_element_type=f32)             # (L, d_head)
                # Fold the head concat into the output projection: accumulate
                # (p·v) @ W_out[d_head rows of this head] — no lane concat.
                contrib = jnp.dot(o, aout_w[c0:c0 + d_head, :],
                                  preferred_element_type=f32)              # (L, inner)
                acc = contrib if acc is None else acc + contrib
            projs.append(acc)
        h = h + jnp.concatenate(projs, axis=0) + aout_b_ref[d].astype(f32)

        # --- cross-attention: context length == 1, so softmax == 1 and the output is
        #     independent of Q/K; norm2 + to_q + QK^T + softmax are dead and skipped. ---
        xv = jnp.dot(ctx, xv_w_ref[d].astype(f32), preferred_element_type=f32)   # (B, inner)
        xproj = (jnp.dot(xv, xout_w_ref[d].astype(f32), preferred_element_type=f32)
                 + xout_b_ref[d].astype(f32))                              # (B, inner)
        h = h + bcast_rows(xproj)

        # --- AdaLN(norm3) + GEGLU feed-forward (fused) ---
        hc = modulate(h, base + 4 * inner)
        ffh = (jnp.dot(hc, ffp_w_ref[d].astype(f32), preferred_element_type=f32)
               + ffp_b_ref[d].astype(f32))                                 # (B*L, 2*ff_inner)
        gx = ffh[:, :ff_inner]
        gate = ffh[:, ff_inner:]
        ffa = gx * jax.nn.gelu(gate, approximate=True)                     # tanh gelu -> EUP
        h = h + (jnp.dot(ffa, ffo_w_ref[d].astype(f32), preferred_element_type=f32)
                 + ffo_b_ref[d].astype(f32))

    # final LayerNorm (affine) + proj_out (no bias, zero-padded to 128 lanes so the
    # output store is lane-dense / unmasked).
    hn = ln(h) * rd(nw_ref) + rd(nb_ref)
    o_ref[...] = jnp.dot(hn, rd(pout_ref), preferred_element_type=f32).astype(o_ref.dtype)


# --------------------------- model composition ------------------------------

def positional_embedding(t, num_channels, max_positions=10000):
    # EDM-style PositionalEmbedding (tiny plain-JAX glue: cos/sin outer product).
    half = num_channels // 2
    freqs = jnp.arange(half, dtype=jnp.float32) / half
    freqs = (1.0 / max_positions) ** freqs
    x = t.astype(jnp.float32)[:, None] * freqs[None, :]
    return jnp.concatenate([jnp.cos(x), jnp.sin(x)], axis=1)               # (B, num_channels)


def latent_array_transformer(params, x, t, cond, *, t_channels, n_heads, d_head):
    B, L, C_in = x.shape
    inner = n_heads * d_head
    depth = params['qkv_w'].shape[0]
    ff_inner = params['ff_out_w'].shape[1]
    C_out = params['proj_out_w'].shape[1]
    c_pad = ((C_out + 127) // 128) * 128                                   # lane-dense output

    if t.shape[0] == 1 and B > 1:
        t = jnp.broadcast_to(t, (B,))
    pos = positional_embedding(t, t_channels)                              # (B, t_channels)

    # MashNet always supplies exactly ONE context token; the cross-attn simplification
    # in the kernel is only valid in that case.
    assert cond.shape[1] == 1, "cross-attn fast path requires context seq len == 1"
    ctx = cond[:, 0, :]                                                    # (B, ctx_dim)

    # Only the V half of the fused [Wk | Wv] cross-attention projection is live.
    xv_w = params['xkv_w'][:, :, inner:]                                   # (depth, ctx_dim, inner)
    # Zero-pad proj_out columns to a 128-lane multiple (sliced back below).
    pout_pad = jnp.pad(params['proj_out_w'], ((0, 0), (0, c_pad - C_out)))

    x_flat = x.reshape(B * L, C_in)                                        # token-flattened

    kernel = functools.partial(
        _mash_fused_kernel, B=B, L=L, depth=depth, n_heads=n_heads, d_head=d_head,
        inner=inner, ff_inner=ff_inner, eps=1e-5)

    # No grid: single kernel invocation, every operand whole-array VMEM-resident.
    out = pl.pallas_call(
        kernel,
        out_shape=jax.ShapeDtypeStruct((B * L, c_pad), x.dtype),
    )(pos, x_flat, ctx,
      params['map_w0'], params['map_b0'], params['map_w1'], params['map_b1'],
      params['proj_in_w'], params['adaln_w'], params['adaln_b'],
      params['qkv_w'], params['attn_out_w'], params['attn_out_b'],
      xv_w, params['xout_w'], params['xout_b'],
      params['ff_proj_w'], params['ff_proj_b'], params['ff_out_w'], params['ff_out_b'],
      params['norm_w'], params['norm_b'], pout_pad)

    return out[:, :C_out].reshape(B, L, C_out)


def mash_net_forward(params, mash_params, condition, t,
                     condition_drop_prob=0.0, *, config):
    # emb_category: nn.Embedding gather (plain-JAX glue), then unsqueeze(1).
    if jnp.issubdtype(condition.dtype, jnp.floating):
        cond = condition
        if cond.ndim == 2:                       # accept (B, ctx_dim) or (B, 1, ctx_dim)
            cond = cond[:, None, :]
        # torch adds `+ 0.0 * emb_category(zeros)` here — a mathematical no-op; omitted.
    else:
        cond = jnp.take(params['category_emb'], condition, axis=0)[:, None, :]
    if t.ndim == 0:
        t = t[None]
    # context_mask = bernoulli(1 - drop_prob); with drop_prob == 0.0 the mask is
    # deterministically all-ones, so it is a no-op and is omitted.
    # TODO(synk): stochastic Bernoulli condition dropout for condition_drop_prob > 0
    # is not implemented.
    return latent_array_transformer(params, mash_params, t, cond, **config)


# ------------------------------ parameters ----------------------------------

def init_params(key, *, channels, inner, context_dim, t_channels, depth):
    keys = iter(jax.random.split(key, 64 + depth * 16))

    def w(shape, scale=0.05):
        return scale * jax.random.normal(next(keys), shape, dtype=jnp.float32)

    def zeros(shape):
        return jnp.zeros(shape, jnp.float32)

    ff_inner = inner * 4
    params = {
        'category_emb': w((55, context_dim)),
        'map_w0': w((t_channels, inner)), 'map_b0': zeros((1, inner)),
        'map_w1': w((inner, inner)),      'map_b1': zeros((1, inner)),
        'proj_in_w': w((channels, inner)),
        # AdaLN weights fused across depth and the 3 norms per block:
        # column layout [blk d: (norm1 scale|shift, norm2 scale|shift, norm3 scale|shift)]
        'adaln_w': w((inner, depth * 6 * inner)),
        'adaln_b': zeros((1, depth * 6 * inner)),
        # self-attention: fused [Wq | Wk | Wv]
        'qkv_w': w((depth, inner, 3 * inner)),
        'attn_out_w': w((depth, inner, inner)), 'attn_out_b': zeros((depth, 1, inner)),
        # cross-attention: to_q exists in the torch module but is mathematically dead
        # for a single-token context; kept here only for parameter-set fidelity.
        'xq_w': w((depth, inner, inner)),
        'xkv_w': w((depth, context_dim, 2 * inner)),   # fused [Wk | Wv]; only Wv is live
        'xout_w': w((depth, inner, inner)), 'xout_b': zeros((depth, 1, inner)),
        # GEGLU feed-forward
        'ff_proj_w': w((depth, inner, 2 * ff_inner)), 'ff_proj_b': zeros((depth, 1, 2 * ff_inner)),
        'ff_out_w': w((depth, ff_inner, inner)),      'ff_out_b': zeros((depth, 1, inner)),
        'norm_w': jnp.ones((1, inner), jnp.float32), 'norm_b': zeros((1, inner)),
        # torch uses zero_module(proj_out); small random here so the demo output is non-trivial.
        'proj_out_w': w((inner, channels)),
    }
    return params


# ---------------------------------- main -------------------------------------

if __name__ == "__main__":
    # Small shapes consistent with MashNet(n_latents=8, mask_degree=3, sh_degree=2,
    #                                      context_dim=32, n_heads=2, d_head=16, depth=2)
    B = 2
    L = 8                                    # n_latents
    mask_degree, sh_degree = 3, 2
    channels = 9 + (2 * mask_degree + 1) + (sh_degree + 1) ** 2   # 25
    n_heads, d_head, depth = 2, 16, 2
    inner = n_heads * d_head                 # 32
    context_dim = 32
    t_channels = 256                         # hard-coded in MashNet.__init__

    key = jax.random.PRNGKey(0)
    k_x, k_t, k_c, k_p = jax.random.split(key, 4)
    mash_params = jax.random.normal(k_x, (B, L, channels), dtype=jnp.float32)
    t = jax.random.uniform(k_t, (B,), dtype=jnp.float32)
    condition = jax.random.randint(k_c, (B,), 0, 55, dtype=jnp.int32)   # class labels

    params = init_params(k_p, channels=channels, inner=inner,
                         context_dim=context_dim, t_channels=t_channels, depth=depth)

    config = dict(t_channels=t_channels, n_heads=n_heads, d_head=d_head)
    out = mash_net_forward(params, mash_params, condition, t, 0.0, config=config)
    out = jax.block_until_ready(out)

    assert out.shape == (B, L, channels), out.shape
    assert bool(jnp.all(jnp.isfinite(out)))
    print("KERNEL_OK")
</pallas_src>

<mosaic_0001>
module attributes {stable_mosaic.version = 11 : i64} {
  func.func @_mash_fused_kernel(%arg0: memref<2x256xf32, #tpu.memory_space<vmem>>, %arg1: memref<16x25xf32, #tpu.memory_space<vmem>>, %arg2: memref<2x32xf32, #tpu.memory_space<vmem>>, %arg3: memref<256x32xf32, #tpu.memory_space<vmem>>, %arg4: memref<1x32xf32, #tpu.memory_space<vmem>>, %arg5: memref<32x32xf32, #tpu.memory_space<vmem>>, %arg6: memref<1x32xf32, #tpu.memory_space<vmem>>, %arg7: memref<25x32xf32, #tpu.memory_space<vmem>>, %arg8: memref<32x384xf32, #tpu.memory_space<vmem>>, %arg9: memref<1x384xf32, #tpu.memory_space<vmem>>, %arg10: memref<2x32x96xf32, #tpu.memory_space<vmem>>, %arg11: memref<2x32x32xf32, #tpu.memory_space<vmem>>, %arg12: memref<2x1x32xf32, #tpu.memory_space<vmem>>, %arg13: memref<2x32x32xf32, #tpu.memory_space<vmem>>, %arg14: memref<2x32x32xf32, #tpu.memory_space<vmem>>, %arg15: memref<2x1x32xf32, #tpu.memory_space<vmem>>, %arg16: memref<2x32x256xf32, #tpu.memory_space<vmem>>, %arg17: memref<2x1x256xf32, #tpu.memory_space<vmem>>, %arg18: memref<2x128x32xf32, #tpu.memory_space<vmem>>, %arg19: memref<2x1x32xf32, #tpu.memory_space<vmem>>, %arg20: memref<1x32xf32, #tpu.memory_space<vmem>>, %arg21: memref<1x32xf32, #tpu.memory_space<vmem>>, %arg22: memref<32x128xf32, #tpu.memory_space<vmem>>, %arg23: memref<16x128xf32, #tpu.memory_space<vmem>>) attributes {dimension_semantics = [], scalar_prefetch = 0 : i64, scratch_operands = 0 : i64, tpu.core_type = #tpu.core_type<tc>} {
    %c0 = arith.constant 0 : index
    %c0_0 = arith.constant 0 : index
    %0 = vector.load %arg0[%c0, %c0_0] : memref<2x256xf32, #tpu.memory_space<vmem>>, vector<2x256xf32>
    %c0_1 = arith.constant 0 : index
    %c0_2 = arith.constant 0 : index
    %1 = vector.load %arg3[%c0_1, %c0_2] : memref<256x32xf32, #tpu.memory_space<vmem>>, vector<256x32xf32>
    %cst = arith.constant dense<0.000000e+00> : vector<2x32xf32>
    %2 = tpu.matmul %0, %1, %cst {dimension_numbers = #tpu.dot_dimension_numbers<[1], [0], [0], [1], [0, 0, 1, 1], [], []>} : vector<2x256xf32>, vector<256x32xf32>, vector<2x32xf32> -> vector<2x32xf32>
    %c0_3 = arith.constant 0 : index
    %c0_4 = arith.constant 0 : index
    %3 = vector.load %arg4[%c0_3, %c0_4] : memref<1x32xf32, #tpu.memory_space<vmem>>, vector<1x32xf32>
    %4 = vector.broadcast %3 : vector<1x32xf32> to vector<2x32xf32>
    %5 = arith.addf %2, %4 : vector<2x32xf32>
    %6 = arith.negf %5 : vector<2x32xf32>
    %7 = math.exp %6 : vector<2x32xf32>
    %cst_5 = arith.constant 1.000000e+00 : f32
    %8 = vector.broadcast %cst_5 : f32 to vector<2x32xf32>
    %9 = arith.addf %8, %7 : vector<2x32xf32>
    %10 = arith.divf %8, %9 : vector<2x32xf32>
    %11 = arith.mulf %5, %10 : vector<2x32xf32>
    %c0_6 = arith.constant 0 : index
    %c0_7 = arith.constant 0 : index
    %12 = vector.load %arg5[%c0_6, %c0_7] : memref<32x32xf32, #tpu.memory_space<vmem>>, vector<32x32xf32>
    %cst_8 = arith.constant dense<0.000000e+00> : vector<2x32xf32>
    %13 = tpu.matmul %11, %12, %cst_8 {dimension_numbers = #tpu.dot_dimension_numbers<[1], [0], [0], [1], [0, 0, 1, 1], [], []>} : vector<2x32xf32>, vector<32x32xf32>, vector<2x32xf32> -> vector<2x32xf32>
    %c0_9 = arith.constant 0 : index
    %c0_10 = arith.constant 0 : index
    %14 = vector.load %arg6[%c0_9, %c0_10] : memref<1x32xf32, #tpu.memory_space<vmem>>, vector<1x32xf32>
    %15 = vector.broadcast %14 : vector<1x32xf32> to vector<2x32xf32>
    %16 = arith.addf %13, %15 : vector<2x32xf32>
    %17 = arith.negf %16 : vector<2x32xf32>
    %18 = math.exp %17 : vector<2x32xf32>
    %cst_11 = arith.constant 1.000000e+00 : f32
    %19 = vector.broadcast %cst_11 : f32 to vector<2x32xf32>
    %20 = arith.addf %19, %18 : vector<2x32xf32>
    %21 = arith.divf %19, %20 : vector<2x32xf32>
    %22 = arith.mulf %16, %21 : vector<2x32xf32>
    %23 = arith.negf %22 : vector<2x32xf32>
    %24 = math.exp %23 : vector<2x32xf32>
    %cst_12 = arith.constant 1.000000e+00 : f32
    %25 = vector.broadcast %cst_12 : f32 to vector<2x32xf32>
    %26 = arith.addf %25, %24 : vector<2x32xf32>
    %27 = arith.divf %25, %26 : vector<2x32xf32>
    %28 = arith.mulf %22, %27 : vector<2x32xf32>
    %c0_13 = arith.constant 0 : index
    %c0_14 = arith.constant 0 : index
    %29 = vector.load %arg8[%c0_13, %c0_14] : memref<32x384xf32, #tpu.memory_space<vmem>>, vector<32x384xf32>
    %cst_15 = arith.constant dense<0.000000e+00> : vector<2x384xf32>
    %30 = tpu.matmul %28, %29, %cst_15 {dimension_numbers = #tpu.dot_dimension_numbers<[1], [0], [0], [1], [0, 0, 1, 1], [], []>} : vector<2x32xf32>, vector<32x384xf32>, vector<2x384xf32> -> vector<2x384xf32>
    %c0_16 = arith.constant 0 : index
    %c0_17 = arith.constant 0 : index
    %31 = vector.load %arg9[%c0_16, %c0_17] : memref<1x384xf32, #tpu.memory_space<vmem>>, vector<1x384xf32>
    %32 = vector.broadcast %31 : vector<1x384xf32> to vector<2x384xf32>
    %33 = arith.addf %30, %32 : vector<2x384xf32>
    %34 = vector.extract_strided_slice %33 {offsets = [0, 0], sizes = [1, 384], strides = [1, 1]} : vector<2x384xf32> to vector<1x384xf32>
    %35 = vector.shape_cast %34 : vector<1x384xf32> to vector<1x384xf32>
    %36 = vector.broadcast %35 : vector<1x384xf32> to vector<8x384xf32>
    %37 = vector.extract_strided_slice %33 {offsets = [1, 0], sizes = [1, 384], strides = [1, 1]} : vector<2x384xf32> to vector<1x384xf32>
    %38 = vector.shape_cast %37 : vector<1x384xf32> to vector<1x384xf32>
    %39 = vector.broadcast %38 : vector<1x384xf32> to vector<8x384xf32>
    %40 = tpu.concatenate %36, %39 in 0 : vector<8x384xf32>, vector<8x384xf32> -> vector<16x384xf32>
    %c0_18 = arith.constant 0 : index
    %c0_19 = arith.constant 0 : index
    %41 = vector.load %arg1[%c0_18, %c0_19] : memref<16x25xf32, #tpu.memory_space<vmem>>, vector<16x25xf32>
    %c0_20 = arith.constant 0 : index
    %c0_21 = arith.constant 0 : index
    %42 = vector.load %arg2[%c0_20, %c0_21] : memref<2x32xf32, #tpu.memory_space<vmem>>, vector<2x32xf32>
    %c0_22 = arith.constant 0 : index
    %c0_23 = arith.constant 0 : index
    %43 = vector.load %arg7[%c0_22, %c0_23] : memref<25x32xf32, #tpu.memory_space<vmem>>, vector<25x32xf32>
    %cst_24 = arith.constant dense<0.000000e+00> : vector<16x32xf32>
    %44 = tpu.matmul %41, %43, %cst_24 {dimension_numbers = #tpu.dot_dimension_numbers<[1], [0], [0], [1], [0, 0, 1, 1], [], []>} : vector<16x25xf32>, vector<25x32xf32>, vector<16x32xf32> -> vector<16x32xf32>
    %45 = vector.extract_strided_slice %40 {offsets = [0, 0], sizes = [16, 32], strides = [1, 1]} : vector<16x384xf32> to vector<16x32xf32>
    %46 = vector.extract_strided_slice %40 {offsets = [0, 32], sizes = [16, 32], strides = [1, 1]} : vector<16x384xf32> to vector<16x32xf32>
    %cst_25 = arith.constant dense<0.000000e+00> : vector<16xf32>
    %47 = vector.multi_reduction <add>, %44, %cst_25 [1] : vector<16x32xf32> to vector<16xf32>
    %48 = vector.shape_cast %47 : vector<16xf32> to vector<16x1xf32>
    %cst_26 = arith.constant 3.200000e+01 : f32
    %49 = vector.broadcast %cst_26 : f32 to vector<16x1xf32>
    %50 = arith.divf %48, %49 : vector<16x1xf32>
    %51 = vector.broadcast %50 : vector<16x1xf32> to vector<16x32xf32>
    %52 = arith.subf %44, %51 : vector<16x32xf32>
    %53 = arith.mulf %52, %52 : vector<16x32xf32>
    %cst_27 = arith.constant dense<0.000000e+00> : vector<16xf32>
    %54 = vector.multi_reduction <add>, %53, %cst_27 [1] : vector<16x32xf32> to vector<16xf32>
    %55 = vector.shape_cast %54 : vector<16xf32> to vector<16x1xf32>
    %cst_28 = arith.constant 3.200000e+01 : f32
    %56 = vector.broadcast %cst_28 : f32 to vector<16x1xf32>
    %57 = arith.divf %55, %56 : vector<16x1xf32>
    %58 = vector.broadcast %50 : vector<16x1xf32> to vector<16x32xf32>
    %59 = arith.subf %44, %58 : vector<16x32xf32>
    %cst_29 = arith.constant 9.99999974E-6 : f32
    %60 = vector.broadcast %cst_29 : f32 to vector<16x1xf32>
    %61 = arith.addf %57, %60 : vector<16x1xf32>
    %62 = math.rsqrt %61 : vector<16x1xf32>
    %63 = vector.broadcast %62 : vector<16x1xf32> to vector<16x32xf32>
    %64 = arith.mulf %59, %63 : vector<16x32xf32>
    %cst_30 = arith.constant 1.000000e+00 : f32
    %65 = vector.broadcast %cst_30 : f32 to vector<16x32xf32>
    %66 = arith.addf %65, %45 : vector<16x32xf32>
    %67 = arith.mulf %64, %66 : vector<16x32xf32>
    %68 = arith.addf %67, %46 : vector<16x32xf32>
    %c0_31 = arith.constant 0 : index
    %c0_32 = arith.constant 0 : index
    %c0_33 = arith.constant 0 : index
    %69 = vector.load %arg10[%c0_31, %c0_32, %c0_33] : memref<2x32x96xf32, #tpu.memory_space<vmem>>, vector<1x32x96xf32>
    %70 = vector.shape_cast %69 : vector<1x32x96xf32> to vector<32x96xf32>
    %cst_34 = arith.constant dense<0.000000e+00> : vector<16x96xf32>
    %71 = tpu.matmul %68, %70, %cst_34 {dimension_numbers = #tpu.dot_dimension_numbers<[1], [0], [0], [1], [0, 0, 1, 1], [], []>} : vector<16x32xf32>, vector<32x96xf32>, vector<16x96xf32> -> vector<16x96xf32>
    %c0_35 = arith.constant 0 : index
    %c0_36 = arith.constant 0 : index
    %c0_37 = arith.constant 0 : index
    %72 = vector.load %arg11[%c0_35, %c0_36, %c0_37] : memref<2x32x32xf32, #tpu.memory_space<vmem>>, vector<1x32x32xf32>
    %73 = vector.shape_cast %72 : vector<1x32x32xf32> to vector<32x32xf32>
    %74 = vector.extract_strided_slice %71 {offsets = [0, 0], sizes = [8, 96], strides = [1, 1]} : vector<16x96xf32> to vector<8x96xf32>
    %75 = vector.extract_strided_slice %74 {offsets = [0, 0], sizes = [8, 16], strides = [1, 1]} : vector<8x96xf32> to vector<8x16xf32>
    %76 = vector.extract_strided_slice %74 {offsets = [0, 32], sizes = [8, 16], strides = [1, 1]} : vector<8x96xf32> to vector<8x16xf32>
    %77 = vector.extract_strided_slice %74 {offsets = [0, 64], sizes = [8, 16], strides = [1, 1]} : vector<8x96xf32> to vector<8x16xf32>
    %cst_38 = arith.constant dense<0.000000e+00> : vector<8x8xf32>
    %78 = tpu.matmul %75, %76, %cst_38 {dimension_numbers = #tpu.dot_dimension_numbers<[1], [1], [0], [0], [0, 0, 1, 0], [], []>} : vector<8x16xf32>, vector<8x16xf32>, vector<8x8xf32> -> vector<8x8xf32>
    %cst_39 = arith.constant 2.500000e-01 : f32
    %79 = vector.broadcast %cst_39 : f32 to vector<8x8xf32>
    %80 = arith.mulf %78, %79 : vector<8x8xf32>
    %cst_40 = arith.constant dense<0xFF800000> : vector<8xf32>
    %81 = vector.multi_reduction <maximumf>, %80, %cst_40 [1] : vector<8x8xf32> to vector<8xf32>
    %82 = vector.shape_cast %81 : vector<8xf32> to vector<8x1xf32>
    %83 = vector.broadcast %82 : vector<8x1xf32> to vector<8x8xf32>
    %84 = arith.subf %80, %83 : vector<8x8xf32>
    %85 = math.exp %84 : vector<8x8xf32>
    %cst_41 = arith.constant dense<0.000000e+00> : vector<8xf32>
    %86 = vector.multi_reduction <add>, %85, %cst_41 [1] : vector<8x8xf32> to vector<8xf32>
    %87 = vector.shape_cast %86 : vector<8xf32> to vector<8x1xf32>
    %88 = tpu.reciprocal %87 {approx = true} : vector<8x1xf32> -> vector<8x1xf32>
    %89 = vector.broadcast %88 : vector<8x1xf32> to vector<8x8xf32>
    %90 = arith.mulf %85, %89 : vector<8x8xf32>
    %cst_42 = arith.constant dense<0.000000e+00> : vector<8x16xf32>
    %91 = tpu.matmul %90, %77, %cst_42 {dimension_numbers = #tpu.dot_dimension_numbers<[1], [0], [0], [1], [0, 0, 1, 1], [], []>} : vector<8x8xf32>, vector<8x16xf32>, vector<8x16xf32> -> vector<8x16xf32>
    %92 = vector.extract_strided_slice %73 {offsets = [0, 0], sizes = [16, 32], strides = [1, 1]} : vector<32x32xf32> to vector<16x32xf32>
    %cst_43 = arith.constant dense<0.000000e+00> : vector<8x32xf32>
    %93 = tpu.matmul %91, %92, %cst_43 {dimension_numbers = #tpu.dot_dimension_numbers<[1], [0], [0], [1], [0, 0, 1, 1], [], []>} : vector<8x16xf32>, vector<16x32xf32>, vector<8x32xf32> -> vector<8x32xf32>
    %94 = vector.extract_strided_slice %74 {offsets = [0, 16], sizes = [8, 16], strides = [1, 1]} : vector<8x96xf32> to vector<8x16xf32>
    %95 = vector.extract_strided_slice %74 {offsets = [0, 48], sizes = [8, 16], strides = [1, 1]} : vector<8x96xf32> to vector<8x16xf32>
    %96 = vector.extract_strided_slice %74 {offsets = [0, 80], sizes = [8, 16], strides = [1, 1]} : vector<8x96xf32> to vector<8x16xf32>
    %cst_44 = arith.constant dense<0.000000e+00> : vector<8x8xf32>
    %97 = tpu.matmul %94, %95, %cst_44 {dimension_numbers = #tpu.dot_dimension_numbers<[1], [1], [0], [0], [0, 0, 1, 0], [], []>} : vector<8x16xf32>, vector<8x16xf32>, vector<8x8xf32> -> vector<8x8xf32>
    %cst_45 = arith.constant 2.500000e-01 : f32
    %98 = vector.broadcast %cst_45 : f32 to vector<8x8xf32>
    %99 = arith.mulf %97, %98 : vector<8x8xf32>
    %cst_46 = arith.constant dense<0xFF800000> : vector<8xf32>
    %100 = vector.multi_reduction <maximumf>, %99, %cst_46 [1] : vector<8x8xf32> to vector<8xf32>
    %101 = vector.shape_cast %100 : vector<8xf32> to vector<8x1xf32>
    %102 = vector.broadcast %101 : vector<8x1xf32> to vector<8x8xf32>
    %103 = arith.subf %99, %102 : vector<8x8xf32>
    %104 = math.exp %103 : vector<8x8xf32>
    %cst_47 = arith.constant dense<0.000000e+00> : vector<8xf32>
    %105 = vector.multi_reduction <add>, %104, %cst_47 [1] : vector<8x8xf32> to vector<8xf32>
    %106 = vector.shape_cast %105 : vector<8xf32> to vector<8x1xf32>
    %107 = tpu.reciprocal %106 {approx = true} : vector<8x1xf32> -> vector<8x1xf32>
    %108 = vector.broadcast %107 : vector<8x1xf32> to vector<8x8xf32>
    %109 = arith.mulf %104, %108 : vector<8x8xf32>
    %cst_48 = arith.constant dense<0.000000e+00> : vector<8x16xf32>
    %110 = tpu.matmul %109, %96, %cst_48 {dimension_numbers = #tpu.dot_dimension_numbers<[1], [0], [0], [1], [0, 0, 1, 1], [], []>} : vector<8x8xf32>, vector<8x16xf32>, vector<8x16xf32> -> vector<8x16xf32>
    %111 = vector.extract_strided_slice %73 {offsets = [16, 0], sizes = [16, 32], strides = [1, 1]} : vector<32x32xf32> to vector<16x32xf32>
    %cst_49 = arith.constant dense<0.000000e+00> : vector<8x32xf32>
    %112 = tpu.matmul %110, %111, %cst_49 {dimension_numbers = #tpu.dot_dimension_numbers<[1], [0], [0], [1], [0, 0, 1, 1], [], []>} : vector<8x16xf32>, vector<16x32xf32>, vector<8x32xf32> -> vector<8x32xf32>
    %113 = arith.addf %93, %112 : vector<8x32xf32>
    %114 = vector.extract_strided_slice %71 {offsets = [8, 0], sizes = [8, 96], strides = [1, 1]} : vector<16x96xf32> to vector<8x96xf32>
    %115 = vector.extract_strided_slice %114 {offsets = [0, 0], sizes = [8, 16], strides = [1, 1]} : vector<8x96xf32> to vector<8x16xf32>
    %116 = vector.extract_strided_slice %114 {offsets = [0, 32], sizes = [8, 16], strides = [1, 1]} : vector<8x96xf32> to vector<8x16xf32>
    %117 = vector.extract_strided_slice %114 {offsets = [0, 64], sizes = [8, 16], strides = [1, 1]} : vector<8x96xf32> to vector<8x16xf32>
    %cst_50 = arith.constant dense<0.000000e+00> : vector<8x8xf32>
    %118 = tpu.matmul %115, %116, %cst_50 {dimension_numbers = #tpu.dot_dimension_numbers<[1], [1], [0], [0], [0, 0, 1, 0], [], []>} : vector<8x16xf32>, vector<8x16xf32>, vector<8x8xf32> -> vector<8x8xf32>
    %cst_51 = arith.constant 2.500000e-01 : f32
    %119 = vector.broadcast %cst_51 : f32 to vector<8x8xf32>
    %120 = arith.mulf %118, %119 : vector<8x8xf32>
    %cst_52 = arith.constant dense<0xFF800000> : vector<8xf32>
    %121 = vector.multi_reduction <maximumf>, %120, %cst_52 [1] : vector<8x8xf32> to vector<8xf32>
    %122 = vector.shape_cast %121 : vector<8xf32> to vector<8x1xf32>
    %123 = vector.broadcast %122 : vector<8x1xf32> to vector<8x8xf32>
    %124 = arith.subf %120, %123 : vector<8x8xf32>
    %125 = math.exp %124 : vector<8x8xf32>
    %cst_53 = arith.constant dense<0.000000e+00> : vector<8xf32>
    %126 = vector.multi_reduction <add>, %125, %cst_53 [1] : vector<8x8xf32> to vector<8xf32>
    %127 = vector.shape_cast %126 : vector<8xf32> to vector<8x1xf32>
    %128 = tpu.reciprocal %127 {approx = true} : vector<8x1xf32> -> vector<8x1xf32>
    %129 = vector.broadcast %128 : vector<8x1xf32> to vector<8x8xf32>
    %130 = arith.mulf %125, %129 : vector<8x8xf32>
    %cst_54 = arith.constant dense<0.000000e+00> : vector<8x16xf32>
    %131 = tpu.matmul %130, %117, %cst_54 {dimension_numbers = #tpu.dot_dimension_numbers<[1], [0], [0], [1], [0, 0, 1, 1], [], []>} : vector<8x8xf32>, vector<8x16xf32>, vector<8x16xf32> -> vector<8x16xf32>
    %132 = vector.extract_strided_slice %73 {offsets = [0, 0], sizes = [16, 32], strides = [1, 1]} : vector<32x32xf32> to vector<16x32xf32>
    %cst_55 = arith.constant dense<0.000000e+00> : vector<8x32xf32>
    %133 = tpu.matmul %131, %132, %cst_55 {dimension_numbers = #tpu.dot_dimension_numbers<[1], [0], [0], [1], [0, 0, 1, 1], [], []>} : vector<8x16xf32>, vector<16x32xf32>, vector<8x32xf32> -> vector<8x32xf32>
    %134 = vector.extract_strided_slice %114 {offsets = [0, 16], sizes = [8, 16], strides = [1, 1]} : vector<8x96xf32> to vector<8x16xf32>
    %135 = vector.extract_strided_slice %114 {offsets = [0, 48], sizes = [8, 16], strides = [1, 1]} : vector<8x96xf32> to vector<8x16xf32>
    %136 = vector.extract_strided_slice %114 {offsets = [0, 80], sizes = [8, 16], strides = [1, 1]} : vector<8x96xf32> to vector<8x16xf32>
    %cst_56 = arith.constant dense<0.000000e+00> : vector<8x8xf32>
    %137 = tpu.matmul %134, %135, %cst_56 {dimension_numbers = #tpu.dot_dimension_numbers<[1], [1], [0], [0], [0, 0, 1, 0], [], []>} : vector<8x16xf32>, vector<8x16xf32>, vector<8x8xf32> -> vector<8x8xf32>
    %cst_57 = arith.constant 2.500000e-01 : f32
    %138 = vector.broadcast %cst_57 : f32 to vector<8x8xf32>
    %139 = arith.mulf %137, %138 : vector<8x8xf32>
    %cst_58 = arith.constant dense<0xFF800000> : vector<8xf32>
    %140 = vector.multi_reduction <maximumf>, %139, %cst_58 [1] : vector<8x8xf32> to vector<8xf32>
    %141 = vector.shape_cast %140 : vector<8xf32> to vector<8x1xf32>
    %142 = vector.broadcast %141 : vector<8x1xf32> to vector<8x8xf32>
    %143 = arith.subf %139, %142 : vector<8x8xf32>
    %144 = math.exp %143 : vector<8x8xf32>
    %cst_59 = arith.constant dense<0.000000e+00> : vector<8xf32>
    %145 = vector.multi_reduction <add>, %144, %cst_59 [1] : vector<8x8xf32> to vector<8xf32>
    %146 = vector.shape_cast %145 : vector<8xf32> to vector<8x1xf32>
    %147 = tpu.reciprocal %146 {approx = true} : vector<8x1xf32> -> vector<8x1xf32>
    %148 = vector.broadcast %147 : vector<8x1xf32> to vector<8x8xf32>
    %149 = arith.mulf %144, %148 : vector<8x8xf32>
    %cst_60 = arith.constant dense<0.000000e+00> : vector<8x16xf32>
    %150 = tpu.matmul %149, %136, %cst_60 {dimension_numbers = #tpu.dot_dimension_numbers<[1], [0], [0], [1], [0, 0, 1, 1], [], []>} : vector<8x8xf32>, vector<8x16xf32>, vector<8x16xf32> -> vector<8x16xf32>
    %151 = vector.extract_strided_slice %73 {offsets = [16, 0], sizes = [16, 32], strides = [1, 1]} : vector<32x32xf32> to vector<16x32xf32>
    %cst_61 = arith.constant dense<0.000000e+00> : vector<8x32xf32>
    %152 = tpu.matmul %150, %151, %cst_61 {dimension_numbers = #tpu.dot_dimension_numbers<[1], [0], [0], [1], [0, 0, 1, 1], [], []>} : vector<8x16xf32>, vector<16x32xf32>, vector<8x32xf32> -> vector<8x32xf32>
    %153 = arith.addf %133, %152 : vector<8x32xf32>
    %154 = tpu.concatenate %113, %153 in 0 : vector<8x32xf32>, vector<8x32xf32> -> vector<16x32xf32>
    %155 = arith.addf %44, %154 : vector<16x32xf32>
    %c0_62 = arith.constant 0 : index
    %c0_63 = arith.constant 0 : index
    %c0_64 = arith.constant 0 : index
    %156 = vector.load %arg12[%c0_62, %c0_63, %c0_64] : memref<2x1x32xf32, #tpu.memory_space<vmem>>, vector<1x1x32xf32>
    %157 = vector.shape_cast %156 : vector<1x1x32xf32> to vector<1x32xf32>
    %158 = vector.broadcast %157 : vector<1x32xf32> to vector<16x32xf32>
    %159 = arith.addf %155, %158 : vector<16x32xf32>
    %c0_65 = arith.constant 0 : index
    %c0_66 = arith.constant 0 : index
    %c0_67 = arith.constant 0 : index
    %160 = vector.load %arg13[%c0_65, %c0_66, %c0_67] : memref<2x32x32xf32, #tpu.memory_space<vmem>>, vector<1x32x32xf32>
    %161 = vector.shape_cast %160 : vector<1x32x32xf32> to vector<32x32xf32>
    %cst_68 = arith.constant dense<0.000000e+00> : vector<2x32xf32>
    %162 = tpu.matmul %42, %161, %cst_68 {dimension_numbers = #tpu.dot_dimension_numbers<[1], [0], [0], [1], [0, 0, 1, 1], [], []>} : vector<2x32xf32>, vector<32x32xf32>, vector<2x32xf32> -> vector<2x32xf32>
    %c0_69 = arith.constant 0 : index
    %c0_70 = arith.constant 0 : index
    %c0_71 = arith.constant 0 : index
    %163 = vector.load %arg14[%c0_69, %c0_70, %c0_71] : memref<2x32x32xf32, #tpu.memory_space<vmem>>, vector<1x32x32xf32>
    %164 = vector.shape_cast %163 : vector<1x32x32xf32> to vector<32x32xf32>
    %cst_72 = arith.constant dense<0.000000e+00> : vector<2x32xf32>
    %165 = tpu.matmul %162, %164, %cst_72 {dimension_numbers = #tpu.dot_dimension_numbers<[1], [0], [0], [1], [0, 0, 1, 1], [], []>} : vector<2x32xf32>, vector<32x32xf32>, vector<2x32xf32> -> vector<2x32xf32>
    %c0_73 = arith.constant 0 : index
    %c0_74 = arith.constant 0 : index
    %c0_75 = arith.constant 0 : index
    %166 = vector.load %arg15[%c0_73, %c0_74, %c0_75] : memref<2x1x32xf32, #tpu.memory_space<vmem>>, vector<1x1x32xf32>
    %167 = vector.shape_cast %166 : vector<1x1x32xf32> to vector<1x32xf32>
    %168 = vector.broadcast %167 : vector<1x32xf32> to vector<2x32xf32>
    %169 = arith.addf %165, %168 : vector<2x32xf32>
    %170 = vector.extract_strided_slice %169 {offsets = [0, 0], sizes = [1, 32], strides = [1, 1]} : vector<2x32xf32> to vector<1x32xf32>
    %171 = vector.shape_cast %170 : vector<1x32xf32> to vector<1x32xf32>
    %172 = vector.broadcast %171 : vector<1x32xf32> to vector<8x32xf32>
    %173 = vector.extract_strided_slice %169 {offsets = [1, 0], sizes = [1, 32], strides = [1, 1]} : vector<2x32xf32> to vector<1x32xf32>
    %174 = vector.shape_cast %173 : vector<1x32xf32> to vector<1x32xf32>
    %175 = vector.broadcast %174 : vector<1x32xf32> to vector<8x32xf32>
    %176 = tpu.concatenate %172, %175 in 0 : vector<8x32xf32>, vector<8x32xf32> -> vector<16x32xf32>
    %177 = arith.addf %159, %176 : vector<16x32xf32>
    %178 = vector.extract_strided_slice %40 {offsets = [0, 128], sizes = [16, 32], strides = [1, 1]} : vector<16x384xf32> to vector<16x32xf32>
    %179 = vector.extract_strided_slice %40 {offsets = [0, 160], sizes = [16, 32], strides = [1, 1]} : vector<16x384xf32> to vector<16x32xf32>
    %cst_76 = arith.constant dense<0.000000e+00> : vector<16xf32>
    %180 = vector.multi_reduction <add>, %177, %cst_76 [1] : vector<16x32xf32> to vector<16xf32>
    %181 = vector.shape_cast %180 : vector<16xf32> to vector<16x1xf32>
    %cst_77 = arith.constant 3.200000e+01 : f32
    %182 = vector.broadcast %cst_77 : f32 to vector<16x1xf32>
    %183 = arith.divf %181, %182 : vector<16x1xf32>
    %184 = vector.broadcast %183 : vector<16x1xf32> to vector<16x32xf32>
    %185 = arith.subf %177, %184 : vector<16x32xf32>
    %186 = arith.mulf %185, %185 : vector<16x32xf32>
    %cst_78 = arith.constant dense<0.000000e+00> : vector<16xf32>
    %187 = vector.multi_reduction <add>, %186, %cst_78 [1] : vector<16x32xf32> to vector<16xf32>
    %188 = vector.shape_cast %187 : vector<16xf32> to vector<16x1xf32>
    %cst_79 = arith.constant 3.200000e+01 : f32
    %189 = vector.broadcast %cst_79 : f32 to vector<16x1xf32>
    %190 = arith.divf %188, %189 : vector<16x1xf32>
    %191 = vector.broadcast %183 : vector<16x1xf32> to vector<16x32xf32>
    %192 = arith.subf %177, %191 : vector<16x32xf32>
    %cst_80 = arith.constant 9.99999974E-6 : f32
    %193 = vector.broadcast %cst_80 : f32 to vector<16x1xf32>
    %194 = arith.addf %190, %193 : vector<16x1xf32>
    %195 = math.rsqrt %194 : vector<16x1xf32>
    %196 = vector.broadcast %195 : vector<16x1xf32> to vector<16x32xf32>
    %197 = arith.mulf %192, %196 : vector<16x32xf32>
    %cst_81 = arith.constant 1.000000e+00 : f32
    %198 = vector.broadcast %cst_81 : f32 to vector<16x32xf32>
    %199 = arith.addf %198, %178 : vector<16x32xf32>
    %200 = arith.mulf %197, %199 : vector<16x32xf32>
    %201 = arith.addf %200, %179 : vector<16x32xf32>
    %c0_82 = arith.constant 0 : index
    %c0_83 = arith.constant 0 : index
    %c0_84 = arith.constant 0 : index
    %202 = vector.load %arg16[%c0_82, %c0_83, %c0_84] : memref<2x32x256xf32, #tpu.memory_space<vmem>>, vector<1x32x256xf32>
    %203 = vector.shape_cast %202 : vector<1x32x256xf32> to vector<32x256xf32>
    %cst_85 = arith.constant dense<0.000000e+00> : vector<16x256xf32>
    %204 = tpu.matmul %201, %203, %cst_85 {dimension_numbers = #tpu.dot_dimension_numbers<[1], [0], [0], [1], [0, 0, 1, 1], [], []>} : vector<16x32xf32>, vector<32x256xf32>, vector<16x256xf32> -> vector<16x256xf32>
    %c0_86 = arith.constant 0 : index
    %c0_87 = arith.constant 0 : index
    %c0_88 = arith.constant 0 : index
    %205 = vector.load %arg17[%c0_86, %c0_87, %c0_88] : memref<2x1x256xf32, #tpu.memory_space<vmem>>, vector<1x1x256xf32>
    %206 = vector.shape_cast %205 : vector<1x1x256xf32> to vector<1x256xf32>
    %207 = vector.broadcast %206 : vector<1x256xf32> to vector<16x256xf32>
    %208 = arith.addf %204, %207 : vector<16x256xf32>
    %209 = vector.extract_strided_slice %208 {offsets = [0, 0], sizes = [16, 128], strides = [1, 1]} : vector<16x256xf32> to vector<16x128xf32>
    %210 = vector.extract_strided_slice %208 {offsets = [0, 128], sizes = [16, 128], strides = [1, 1]} : vector<16x256xf32> to vector<16x128xf32>
    %211 = arith.mulf %210, %210 : vector<16x128xf32>
    %212 = arith.mulf %210, %211 : vector<16x128xf32>
    %cst_89 = arith.constant 4.471500e-02 : f32
    %213 = vector.broadcast %cst_89 : f32 to vector<16x128xf32>
    %214 = arith.mulf %213, %212 : vector<16x128xf32>
    %215 = arith.addf %210, %214 : vector<16x128xf32>
    %cst_90 = arith.constant 0.797884583 : f32
    %216 = vector.broadcast %cst_90 : f32 to vector<16x128xf32>
    %217 = arith.mulf %216, %215 : vector<16x128xf32>
    %218 = math.tanh %217 : vector<16x128xf32>
    %cst_91 = arith.constant 1.000000e+00 : f32
    %219 = vector.broadcast %cst_91 : f32 to vector<16x128xf32>
    %220 = arith.addf %219, %218 : vector<16x128xf32>
    %cst_92 = arith.constant 5.000000e-01 : f32
    %221 = vector.broadcast %cst_92 : f32 to vector<16x128xf32>
    %222 = arith.mulf %221, %220 : vector<16x128xf32>
    %223 = arith.mulf %210, %222 : vector<16x128xf32>
    %224 = arith.mulf %209, %223 : vector<16x128xf32>
    %c0_93 = arith.constant 0 : index
    %c0_94 = arith.constant 0 : index
    %c0_95 = arith.constant 0 : index
    %225 = vector.load %arg18[%c0_93, %c0_94, %c0_95] : memref<2x128x32xf32, #tpu.memory_space<vmem>>, vector<1x128x32xf32>
    %226 = vector.shape_cast %225 : vector<1x128x32xf32> to vector<128x32xf32>
    %cst_96 = arith.constant dense<0.000000e+00> : vector<16x32xf32>
    %227 = tpu.matmul %224, %226, %cst_96 {dimension_numbers = #tpu.dot_dimension_numbers<[1], [0], [0], [1], [0, 0, 1, 1], [], []>} : vector<16x128xf32>, vector<128x32xf32>, vector<16x32xf32> -> vector<16x32xf32>
    %c0_97 = arith.constant 0 : index
    %c0_98 = arith.constant 0 : index
    %c0_99 = arith.constant 0 : index
    %228 = vector.load %arg19[%c0_97, %c0_98, %c0_99] : memref<2x1x32xf32, #tpu.memory_space<vmem>>, vector<1x1x32xf32>
    %229 = vector.shape_cast %228 : vector<1x1x32xf32> to vector<1x32xf32>
    %230 = vector.broadcast %229 : vector<1x32xf32> to vector<16x32xf32>
    %231 = arith.addf %227, %230 : vector<16x32xf32>
    %232 = arith.addf %177, %231 : vector<16x32xf32>
    %233 = vector.extract_strided_slice %40 {offsets = [0, 192], sizes = [16, 32], strides = [1, 1]} : vector<16x384xf32> to vector<16x32xf32>
    %234 = vector.extract_strided_slice %40 {offsets = [0, 224], sizes = [16, 32], strides = [1, 1]} : vector<16x384xf32> to vector<16x32xf32>
    %cst_100 = arith.constant dense<0.000000e+00> : vector<16xf32>
    %235 = vector.multi_reduction <add>, %232, %cst_100 [1] : vector<16x32xf32> to vector<16xf32>
    %236 = vector.shape_cast %235 : vector<16xf32> to vector<16x1xf32>
    %cst_101 = arith.constant 3.200000e+01 : f32
    %237 = vector.broadcast %cst_101 : f32 to vector<16x1xf32>
    %238 = arith.divf %236, %237 : vector<16x1xf32>
    %239 = vector.broadcast %238 : vector<16x1xf32> to vector<16x32xf32>
    %240 = arith.subf %232, %239 : vector<16x32xf32>
    %241 = arith.mulf %240, %240 : vector<16x32xf32>
    %cst_102 = arith.constant dense<0.000000e+00> : vector<16xf32>
    %242 = vector.multi_reduction <add>, %241, %cst_102 [1] : vector<16x32xf32> to vector<16xf32>
    %243 = vector.shape_cast %242 : vector<16xf32> to vector<16x1xf32>
    %cst_103 = arith.constant 3.200000e+01 : f32
    %244 = vector.broadcast %cst_103 : f32 to vector<16x1xf32>
    %245 = arith.divf %243, %244 : vector<16x1xf32>
    %246 = vector.broadcast %238 : vector<16x1xf32> to vector<16x32xf32>
    %247 = arith.subf %232, %246 : vector<16x32xf32>
    %cst_104 = arith.constant 9.99999974E-6 : f32
    %248 = vector.broadcast %cst_104 : f32 to vector<16x1xf32>
    %249 = arith.addf %245, %248 : vector<16x1xf32>
    %250 = math.rsqrt %249 : vector<16x1xf32>
    %251 = vector.broadcast %250 : vector<16x1xf32> to vector<16x32xf32>
    %252 = arith.mulf %247, %251 : vector<16x32xf32>
    %cst_105 = arith.constant 1.000000e+00 : f32
    %253 = vector.broadcast %cst_105 : f32 to vector<16x32xf32>
    %254 = arith.addf %253, %233 : vector<16x32xf32>
    %255 = arith.mulf %252, %254 : vector<16x32xf32>
    %256 = arith.addf %255, %234 : vector<16x32xf32>
    %c1 = arith.constant 1 : index
    %c0_106 = arith.constant 0 : index
    %c0_107 = arith.constant 0 : index
    %257 = vector.load %arg10[%c1, %c0_106, %c0_107] : memref<2x32x96xf32, #tpu.memory_space<vmem>>, vector<1x32x96xf32>
    %258 = vector.shape_cast %257 : vector<1x32x96xf32> to vector<32x96xf32>
    %cst_108 = arith.constant dense<0.000000e+00> : vector<16x96xf32>
    %259 = tpu.matmul %256, %258, %cst_108 {dimension_numbers = #tpu.dot_dimension_numbers<[1], [0], [0], [1], [0, 0, 1, 1], [], []>} : vector<16x32xf32>, vector<32x96xf32>, vector<16x96xf32> -> vector<16x96xf32>
    %c1_109 = arith.constant 1 : index
    %c0_110 = arith.constant 0 : index
    %c0_111 = arith.constant 0 : index
    %260 = vector.load %arg11[%c1_109, %c0_110, %c0_111] : memref<2x32x32xf32, #tpu.memory_space<vmem>>, vector<1x32x32xf32>
    %261 = vector.shape_cast %260 : vector<1x32x32xf32> to vector<32x32xf32>
    %262 = vector.extract_strided_slice %259 {offsets = [0, 0], sizes = [8, 96], strides = [1, 1]} : vector<16x96xf32> to vector<8x96xf32>
    %263 = vector.extract_strided_slice %262 {offsets = [0, 0], sizes = [8, 16], strides = [1, 1]} : vector<8x96xf32> to vector<8x16xf32>
    %264 = vector.extract_strided_slice %262 {offsets = [0, 32], sizes = [8, 16], strides = [1, 1]} : vector<8x96xf32> to vector<8x16xf32>
    %265 = vector.extract_strided_slice %262 {offsets = [0, 64], sizes = [8, 16], strides = [1, 1]} : vector<8x96xf32> to vector<8x16xf32>
    %cst_112 = arith.constant dense<0.000000e+00> : vector<8x8xf32>
    %266 = tpu.matmul %263, %264, %cst_112 {dimension_numbers = #tpu.dot_dimension_numbers<[1], [1], [0], [0], [0, 0, 1, 0], [], []>} : vector<8x16xf32>, vector<8x16xf32>, vector<8x8xf32> -> vector<8x8xf32>
    %cst_113 = arith.constant 2.500000e-01 : f32
    %267 = vector.broadcast %cst_113 : f32 to vector<8x8xf32>
    %268 = arith.mulf %266, %267 : vector<8x8xf32>
    %cst_114 = arith.constant dense<0xFF800000> : vector<8xf32>
    %269 = vector.multi_reduction <maximumf>, %268, %cst_114 [1] : vector<8x8xf32> to vector<8xf32>
    %270 = vector.shape_cast %269 : vector<8xf32> to vector<8x1xf32>
    %271 = vector.broadcast %270 : vector<8x1xf32> to vector<8x8xf32>
    %272 = arith.subf %268, %271 : vector<8x8xf32>
    %273 = math.exp %272 : vector<8x8xf32>
    %cst_115 = arith.constant dense<0.000000e+00> : vector<8xf32>
    %274 = vector.multi_reduction <add>, %273, %cst_115 [1] : vector<8x8xf32> to vector<8xf32>
    %275 = vector.shape_cast %274 : vector<8xf32> to vector<8x1xf32>
    %276 = tpu.reciprocal %275 {approx = true} : vector<8x1xf32> -> vector<8x1xf32>
    %277 = vector.broadcast %276 : vector<8x1xf32> to vector<8x8xf32>
    %278 = arith.mulf %273, %277 : vector<8x8xf32>
    %cst_116 = arith.constant dense<0.000000e+00> : vector<8x16xf32>
    %279 = tpu.matmul %278, %265, %cst_116 {dimension_numbers = #tpu.dot_dimension_numbers<[1], [0], [0], [1], [0, 0, 1, 1], [], []>} : vector<8x8xf32>, vector<8x16xf32>, vector<8x16xf32> -> vector<8x16xf32>
    %280 = vector.extract_strided_slice %261 {offsets = [0, 0], sizes = [16, 32], strides = [1, 1]} : vector<32x32xf32> to vector<16x32xf32>
    %cst_117 = arith.constant dense<0.000000e+00> : vector<8x32xf32>
    %281 = tpu.matmul %279, %280, %cst_117 {dimension_numbers = #tpu.dot_dimension_numbers<[1], [0], [0], [1], [0, 0, 1, 1], [], []>} : vector<8x16xf32>, vector<16x32xf32>, vector<8x32xf32> -> vector<8x32xf32>
    %282 = vector.extract_strided_slice %262 {offsets = [0, 16], sizes = [8, 16], strides = [1, 1]} : vector<8x96xf32> to vector<8x16xf32>
    %283 = vector.extract_strided_slice %262 {offsets = [0, 48], sizes = [8, 16], strides = [1, 1]} : vector<8x96xf32> to vector<8x16xf32>
    %284 = vector.extract_strided_slice %262 {offsets = [0, 80], sizes = [8, 16], strides = [1, 1]} : vector<8x96xf32> to vector<8x16xf32>
    %cst_118 = arith.constant dense<0.000000e+00> : vector<8x8xf32>
    %285 = tpu.matmul %282, %283, %cst_118 {dimension_numbers = #tpu.dot_dimension_numbers<[1], [1], [0], [0], [0, 0, 1, 0], [], []>} : vector<8x16xf32>, vector<8x16xf32>, vector<8x8xf32> -> vector<8x8xf32>
    %cst_119 = arith.constant 2.500000e-01 : f32
    %286 = vector.broadcast %cst_119 : f32 to vector<8x8xf32>
    %287 = arith.mulf %285, %286 : vector<8x8xf32>
    %cst_120 = arith.constant dense<0xFF800000> : vector<8xf32>
    %288 = vector.multi_reduction <maximumf>, %287, %cst_120 [1] : vector<8x8xf32> to vector<8xf32>
    %289 = vector.shape_cast %288 : vector<8xf32> to vector<8x1xf32>
    %290 = vector.broadcast %289 : vector<8x1xf32> to vector<8x8xf32>
    %291 = arith.subf %287, %290 : vector<8x8xf32>
    %292 = math.exp %291 : vector<8x8xf32>
    %cst_121 = arith.constant dense<0.000000e+00> : vector<8xf32>
    %293 = vector.multi_reduction <add>, %292, %cst_121 [1] : vector<8x8xf32> to vector<8xf32>
    %294 = vector.shape_cast %293 : vector<8xf32> to vector<8x1xf32>
    %295 = tpu.reciprocal %294 {approx = true} : vector<8x1xf32> -> vector<8x1xf32>
    %296 = vector.broadcast %295 : vector<8x1xf32> to vector<8x8xf32>
    %297 = arith.mulf %292, %296 : vector<8x8xf32>
    %cst_122 = arith.constant dense<0.000000e+00> : vector<8x16xf32>
    %298 = tpu.matmul %297, %284, %cst_122 {dimension_numbers = #tpu.dot_dimension_numbers<[1], [0], [0], [1], [0, 0, 1, 1], [], []>} : vector<8x8xf32>, vector<8x16xf32>, vector<8x16xf32> -> vector<8x16xf32>
    %299 = vector.extract_strided_slice %261 {offsets = [16, 0], sizes = [16, 32], strides = [1, 1]} : vector<32x32xf32> to vector<16x32xf32>
    %cst_123 = arith.constant dense<0.000000e+00> : vector<8x32xf32>
    %300 = tpu.matmul %298, %299, %cst_123 {dimension_numbers = #tpu.dot_dimension_numbers<[1], [0], [0], [1], [0, 0, 1, 1], [], []>} : vector<8x16xf32>, vector<16x32xf32>, vector<8x32xf32> -> vector<8x32xf32>
    %301 = arith.addf %281, %300 : vector<8x32xf32>
    %302 = vector.extract_strided_slice %259 {offsets = [8, 0], sizes = [8, 96], strides = [1, 1]} : vector<16x96xf32> to vector<8x96xf32>
    %303 = vector.extract_strided_slice %302 {offsets = [0, 0], sizes = [8, 16], strides = [1, 1]} : vector<8x96xf32> to vector<8x16xf32>
    %304 = vector.extract_strided_slice %302 {offsets = [0, 32], sizes = [8, 16], strides = [1, 1]} : vector<8x96xf32> to vector<8x16xf32>
    %305 = vector.extract_strided_slice %302 {offsets = [0, 64], sizes = [8, 16], strides = [1, 1]} : vector<8x96xf32> to vector<8x16xf32>
    %cst_124 = arith.constant dense<0.000000e+00> : vector<8x8xf32>
    %306 = tpu.matmul %303, %304, %cst_124 {dimension_numbers = #tpu.dot_dimension_numbers<[1], [1], [0], [0], [0, 0, 1, 0], [], []>} : vector<8x16xf32>, vector<8x16xf32>, vector<8x8xf32> -> vector<8x8xf32>
    %cst_125 = arith.constant 2.500000e-01 : f32
    %307 = vector.broadcast %cst_125 : f32 to vector<8x8xf32>
    %308 = arith.mulf %306, %307 : vector<8x8xf32>
    %cst_126 = arith.constant dense<0xFF800000> : vector<8xf32>
    %309 = vector.multi_reduction <maximumf>, %308, %cst_126 [1] : vector<8x8xf32> to vector<8xf32>
    %310 = vector.shape_cast %309 : vector<8xf32> to vector<8x1xf32>
    %311 = vector.broadcast %310 : vector<8x1xf32> to vector<8x8xf32>
    %312 = arith.subf %308, %311 : vector<8x8xf32>
    %313 = math.exp %312 : vector<8x8xf32>
    %cst_127 = arith.constant dense<0.000000e+00> : vector<8xf32>
    %314 = vector.multi_reduction <add>, %313, %cst_127 [1] : vector<8x8xf32> to vector<8xf32>
    %315 = vector.shape_cast %314 : vector<8xf32> to vector<8x1xf32>
    %316 = tpu.reciprocal %315 {approx = true} : vector<8x1xf32> -> vector<8x1xf32>
    %317 = vector.broadcast %316 : vector<8x1xf32> to vector<8x8xf32>
    %318 = arith.mulf %313, %317 : vector<8x8xf32>
    %cst_128 = arith.constant dense<0.000000e+00> : vector<8x16xf32>
    %319 = tpu.matmul %318, %305, %cst_128 {dimension_numbers = #tpu.dot_dimension_numbers<[1], [0], [0], [1], [0, 0, 1, 1], [], []>} : vector<8x8xf32>, vector<8x16xf32>, vector<8x16xf32> -> vector<8x16xf32>
    %320 = vector.extract_strided_slice %261 {offsets = [0, 0], sizes = [16, 32], strides = [1, 1]} : vector<32x32xf32> to vector<16x32xf32>
    %cst_129 = arith.constant dense<0.000000e+00> : vector<8x32xf32>
    %321 = tpu.matmul %319, %320, %cst_129 {dimension_numbers = #tpu.dot_dimension_numbers<[1], [0], [0], [1], [0, 0, 1, 1], [], []>} : vector<8x16xf32>, vector<16x32xf32>, vector<8x32xf32> -> vector<8x32xf32>
    %322 = vector.extract_strided_slice %302 {offsets = [0, 16], sizes = [8, 16], strides = [1, 1]} : vector<8x96xf32> to vector<8x16xf32>
    %323 = vector.extract_strided_slice %302 {offsets = [0, 48], sizes = [8, 16], strides = [1, 1]} : vector<8x96xf32> to vector<8x16xf32>
    %324 = vector.extract_strided_slice %302 {offsets = [0, 80], sizes = [8, 16], strides = [1, 1]} : vector<8x96xf32> to vector<8x16xf32>
    %cst_130 = arith.constant dense<0.000000e+00> : vector<8x8xf32>
    %325 = tpu.matmul %322, %323, %cst_130 {dimension_numbers = #tpu.dot_dimension_numbers<[1], [1], [0], [0], [0, 0, 1, 0], [], []>} : vector<8x16xf32>, vector<8x16xf32>, vector<8x8xf32> -> vector<8x8xf32>
    %cst_131 = arith.constant 2.500000e-01 : f32
    %326 = vector.broadcast %cst_131 : f32 to vector<8x8xf32>
    %327 = arith.mulf %325, %326 : vector<8x8xf32>
    %cst_132 = arith.constant dense<0xFF800000> : vector<8xf32>
    %328 = vector.multi_reduction <maximumf>, %327, %cst_132 [1] : vector<8x8xf32> to vector<8xf32>
    %329 = vector.shape_cast %328 : vector<8xf32> to vector<8x1xf32>
    %330 = vector.broadcast %329 : vector<8x1xf32> to vector<8x8xf32>
    %331 = arith.subf %327, %330 : vector<8x8xf32>
    %332 = math.exp %331 : vector<8x8xf32>
    %cst_133 = arith.constant dense<0.000000e+00> : vector<8xf32>
    %333 = vector.multi_reduction <add>, %332, %cst_133 [1] : vector<8x8xf32> to vector<8xf32>
    %334 = vector.shape_cast %333 : vector<8xf32> to vector<8x1xf32>
    %335 = tpu.reciprocal %334 {approx = true} : vector<8x1xf32> -> vector<8x1xf32>
    %336 = vector.broadcast %335 : vector<8x1xf32> to vector<8x8xf32>
    %337 = arith.mulf %332, %336 : vector<8x8xf32>
    %cst_134 = arith.constant dense<0.000000e+00> : vector<8x16xf32>
    %338 = tpu.matmul %337, %324, %cst_134 {dimension_numbers = #tpu.dot_dimension_numbers<[1], [0], [0], [1], [0, 0, 1, 1], [], []>} : vector<8x8xf32>, vector<8x16xf32>, vector<8x16xf32> -> vector<8x16xf32>
    %339 = vector.extract_strided_slice %261 {offsets = [16, 0], sizes = [16, 32], strides = [1, 1]} : vector<32x32xf32> to vector<16x32xf32>
    %cst_135 = arith.constant dense<0.000000e+00> : vector<8x32xf32>
    %340 = tpu.matmul %338, %339, %cst_135 {dimension_numbers = #tpu.dot_dimension_numbers<[1], [0], [0], [1], [0, 0, 1, 1], [], []>} : vector<8x16xf32>, vector<16x32xf32>, vector<8x32xf32> -> vector<8x32xf32>
    %341 = arith.addf %321, %340 : vector<8x32xf32>
    %342 = tpu.concatenate %301, %341 in 0 : vector<8x32xf32>, vector<8x32xf32> -> vector<16x32xf32>
    %343 = arith.addf %232, %342 : vector<16x32xf32>
    %c1_136 = arith.constant 1 : index
    %c0_137 = arith.constant 0 : index
    %c0_138 = arith.constant 0 : index
    %344 = vector.load %arg12[%c1_136, %c0_137, %c0_138] : memref<2x1x32xf32, #tpu.memory_space<vmem>>, vector<1x1x32xf32>
    %345 = vector.shape_cast %344 : vector<1x1x32xf32> to vector<1x32xf32>
    %346 = vector.broadcast %345 : vector<1x32xf32> to vector<16x32xf32>
    %347 = arith.addf %343, %346 : vector<16x32xf32>
    %c1_139 = arith.constant 1 : index
    %c0_140 = arith.constant 0 : index
    %c0_141 = arith.constant 0 : index
    %348 = vector.load %arg13[%c1_139, %c0_140, %c0_141] : memref<2x32x32xf32, #tpu.memory_space<vmem>>, vector<1x32x32xf32>
    %349 = vector.shape_cast %348 : vector<1x32x32xf32> to vector<32x32xf32>
    %cst_142 = arith.constant dense<0.000000e+00> : vector<2x32xf32>
    %350 = tpu.matmul %42, %349, %cst_142 {dimension_numbers = #tpu.dot_dimension_numbers<[1], [0], [0], [1], [0, 0, 1, 1], [], []>} : vector<2x32xf32>, vector<32x32xf32>, vector<2x32xf32> -> vector<2x32xf32>
    %c1_143 = arith.constant 1 : index
    %c0_144 = arith.constant 0 : index
    %c0_145 = arith.constant 0 : index
    %351 = vector.load %arg14[%c1_143, %c0_144, %c0_145] : memref<2x32x32xf32, #tpu.memory_space<vmem>>, vector<1x32x32xf32>
    %352 = vector.shape_cast %351 : vector<1x32x32xf32> to vector<32x32xf32>
    %cst_146 = arith.constant dense<0.000000e+00> : vector<2x32xf32>
    %353 = tpu.matmul %350, %352, %cst_146 {dimension_numbers = #tpu.dot_dimension_numbers<[1], [0], [0], [1], [0, 0, 1, 1], [], []>} : vector<2x32xf32>, vector<32x32xf32>, vector<2x32xf32> -> vector<2x32xf32>
    %c1_147 = arith.constant 1 : index
    %c0_148 = arith.constant 0 : index
    %c0_149 = arith.constant 0 : index
    %354 = vector.load %arg15[%c1_147, %c0_148, %c0_149] : memref<2x1x32xf32, #tpu.memory_space<vmem>>, vector<1x1x32xf32>
    %355 = vector.shape_cast %354 : vector<1x1x32xf32> to vector<1x32xf32>
    %356 = vector.broadcast %355 : vector<1x32xf32> to vector<2x32xf32>
    %357 = arith.addf %353, %356 : vector<2x32xf32>
    %358 = vector.extract_strided_slice %357 {offsets = [0, 0], sizes = [1, 32], strides = [1, 1]} : vector<2x32xf32> to vector<1x32xf32>
    %359 = vector.shape_cast %358 : vector<1x32xf32> to vector<1x32xf32>
    %360 = vector.broadcast %359 : vector<1x32xf32> to vector<8x32xf32>
    %361 = vector.extract_strided_slice %357 {offsets = [1, 0], sizes = [1, 32], strides = [1, 1]} : vector<2x32xf32> to vector<1x32xf32>
    %362 = vector.shape_cast %361 : vector<1x32xf32> to vector<1x32xf32>
    %363 = vector.broadcast %362 : vector<1x32xf32> to vector<8x32xf32>
    %364 = tpu.concatenate %360, %363 in 0 : vector<8x32xf32>, vector<8x32xf32> -> vector<16x32xf32>
    %365 = arith.addf %347, %364 : vector<16x32xf32>
    %366 = vector.extract_strided_slice %40 {offsets = [0, 320], sizes = [16, 32], strides = [1, 1]} : vector<16x384xf32> to vector<16x32xf32>
    %367 = vector.extract_strided_slice %40 {offsets = [0, 352], sizes = [16, 32], strides = [1, 1]} : vector<16x384xf32> to vector<16x32xf32>
    %cst_150 = arith.constant dense<0.000000e+00> : vector<16xf32>
    %368 = vector.multi_reduction <add>, %365, %cst_150 [1] : vector<16x32xf32> to vector<16xf32>
    %369 = vector.shape_cast %368 : vector<16xf32> to vector<16x1xf32>
    %cst_151 = arith.constant 3.200000e+01 : f32
    %370 = vector.broadcast %cst_151 : f32 to vector<16x1xf32>
    %371 = arith.divf %369, %370 : vector<16x1xf32>
    %372 = vector.broadcast %371 : vector<16x1xf32> to vector<16x32xf32>
    %373 = arith.subf %365, %372 : vector<16x32xf32>
    %374 = arith.mulf %373, %373 : vector<16x32xf32>
    %cst_152 = arith.constant dense<0.000000e+00> : vector<16xf32>
    %375 = vector.multi_reduction <add>, %374, %cst_152 [1] : vector<16x32xf32> to vector<16xf32>
    %376 = vector.shape_cast %375 : vector<16xf32> to vector<16x1xf32>
    %cst_153 = arith.constant 3.200000e+01 : f32
    %377 = vector.broadcast %cst_153 : f32 to vector<16x1xf32>
    %378 = arith.divf %376, %377 : vector<16x1xf32>
    %379 = vector.broadcast %371 : vector<16x1xf32> to vector<16x32xf32>
    %380 = arith.subf %365, %379 : vector<16x32xf32>
    %cst_154 = arith.constant 9.99999974E-6 : f32
    %381 = vector.broadcast %cst_154 : f32 to vector<16x1xf32>
    %382 = arith.addf %378, %381 : vector<16x1xf32>
    %383 = math.rsqrt %382 : vector<16x1xf32>
    %384 = vector.broadcast %383 : vector<16x1xf32> to vector<16x32xf32>
    %385 = arith.mulf %380, %384 : vector<16x32xf32>
    %cst_155 = arith.constant 1.000000e+00 : f32
    %386 = vector.broadcast %cst_155 : f32 to vector<16x32xf32>
    %387 = arith.addf %386, %366 : vector<16x32xf32>
    %388 = arith.mulf %385, %387 : vector<16x32xf32>
    %389 = arith.addf %388, %367 : vector<16x32xf32>
    %c1_156 = arith.constant 1 : index
    %c0_157 = arith.constant 0 : index
    %c0_158 = arith.constant 0 : index
    %390 = vector.load %arg16[%c1_156, %c0_157, %c0_158] : memref<2x32x256xf32, #tpu.memory_space<vmem>>, vector<1x32x256xf32>
    %391 = vector.shape_cast %390 : vector<1x32x256xf32> to vector<32x256xf32>
    %cst_159 = arith.constant dense<0.000000e+00> : vector<16x256xf32>
    %392 = tpu.matmul %389, %391, %cst_159 {dimension_numbers = #tpu.dot_dimension_numbers<[1], [0], [0], [1], [0, 0, 1, 1], [], []>} : vector<16x32xf32>, vector<32x256xf32>, vector<16x256xf32> -> vector<16x256xf32>
    %c1_160 = arith.constant 1 : index
    %c0_161 = arith.constant 0 : index
    %c0_162 = arith.constant 0 : index
    %393 = vector.load %arg17[%c1_160, %c0_161, %c0_162] : memref<2x1x256xf32, #tpu.memory_space<vmem>>, vector<1x1x256xf32>
    %394 = vector.shape_cast %393 : vector<1x1x256xf32> to vector<1x256xf32>
    %395 = vector.broadcast %394 : vector<1x256xf32> to vector<16x256xf32>
    %396 = arith.addf %392, %395 : vector<16x256xf32>
    %397 = vector.extract_strided_slice %396 {offsets = [0, 0], sizes = [16, 128], strides = [1, 1]} : vector<16x256xf32> to vector<16x128xf32>
    %398 = vector.extract_strided_slice %396 {offsets = [0, 128], sizes = [16, 128], strides = [1, 1]} : vector<16x256xf32> to vector<16x128xf32>
    %399 = arith.mulf %398, %398 : vector<16x128xf32>
    %400 = arith.mulf %398, %399 : vector<16x128xf32>
    %cst_163 = arith.constant 4.471500e-02 : f32
    %401 = vector.broadcast %cst_163 : f32 to vector<16x128xf32>
    %402 = arith.mulf %401, %400 : vector<16x128xf32>
    %403 = arith.addf %398, %402 : vector<16x128xf32>
    %cst_164 = arith.constant 0.797884583 : f32
    %404 = vector.broadcast %cst_164 : f32 to vector<16x128xf32>
    %405 = arith.mulf %404, %403 : vector<16x128xf32>
    %406 = math.tanh %405 : vector<16x128xf32>
    %cst_165 = arith.constant 1.000000e+00 : f32
    %407 = vector.broadcast %cst_165 : f32 to vector<16x128xf32>
    %408 = arith.addf %407, %406 : vector<16x128xf32>
    %cst_166 = arith.constant 5.000000e-01 : f32
    %409 = vector.broadcast %cst_166 : f32 to vector<16x128xf32>
    %410 = arith.mulf %409, %408 : vector<16x128xf32>
    %411 = arith.mulf %398, %410 : vector<16x128xf32>
    %412 = arith.mulf %397, %411 : vector<16x128xf32>
    %c1_167 = arith.constant 1 : index
    %c0_168 = arith.constant 0 : index
    %c0_169 = arith.constant 0 : index
    %413 = vector.load %arg18[%c1_167, %c0_168, %c0_169] : memref<2x128x32xf32, #tpu.memory_space<vmem>>, vector<1x128x32xf32>
    %414 = vector.shape_cast %413 : vector<1x128x32xf32> to vector<128x32xf32>
    %cst_170 = arith.constant dense<0.000000e+00> : vector<16x32xf32>
    %415 = tpu.matmul %412, %414, %cst_170 {dimension_numbers = #tpu.dot_dimension_numbers<[1], [0], [0], [1], [0, 0, 1, 1], [], []>} : vector<16x128xf32>, vector<128x32xf32>, vector<16x32xf32> -> vector<16x32xf32>
    %c1_171 = arith.constant 1 : index
    %c0_172 = arith.constant 0 : index
    %c0_173 = arith.constant 0 : index
    %416 = vector.load %arg19[%c1_171, %c0_172, %c0_173] : memref<2x1x32xf32, #tpu.memory_space<vmem>>, vector<1x1x32xf32>
    %417 = vector.shape_cast %416 : vector<1x1x32xf32> to vector<1x32xf32>
    %418 = vector.broadcast %417 : vector<1x32xf32> to vector<16x32xf32>
    %419 = arith.addf %415, %418 : vector<16x32xf32>
    %420 = arith.addf %365, %419 : vector<16x32xf32>
    %cst_174 = arith.constant dense<0.000000e+00> : vector<16xf32>
    %421 = vector.multi_reduction <add>, %420, %cst_174 [1] : vector<16x32xf32> to vector<16xf32>
    %422 = vector.shape_cast %421 : vector<16xf32> to vector<16x1xf32>
    %cst_175 = arith.constant 3.200000e+01 : f32
    %423 = vector.broadcast %cst_175 : f32 to vector<16x1xf32>
    %424 = arith.divf %422, %423 : vector<16x1xf32>
    %425 = vector.broadcast %424 : vector<16x1xf32> to vector<16x32xf32>
    %426 = arith.subf %420, %425 : vector<16x32xf32>
    %427 = arith.mulf %426, %426 : vector<16x32xf32>
    %cst_176 = arith.constant dense<0.000000e+00> : vector<16xf32>
    %428 = vector.multi_reduction <add>, %427, %cst_176 [1] : vector<16x32xf32> to vector<16xf32>
    %429 = vector.shape_cast %428 : vector<16xf32> to vector<16x1xf32>
    %cst_177 = arith.constant 3.200000e+01 : f32
    %430 = vector.broadcast %cst_177 : f32 to vector<16x1xf32>
    %431 = arith.divf %429, %430 : vector<16x1xf32>
    %432 = vector.broadcast %424 : vector<16x1xf32> to vector<16x32xf32>
    %433 = arith.subf %420, %432 : vector<16x32xf32>
    %cst_178 = arith.constant 9.99999974E-6 : f32
    %434 = vector.broadcast %cst_178 : f32 to vector<16x1xf32>
    %435 = arith.addf %431, %434 : vector<16x1xf32>
    %436 = math.rsqrt %435 : vector<16x1xf32>
    %437 = vector.broadcast %436 : vector<16x1xf32> to vector<16x32xf32>
    %438 = arith.mulf %433, %437 : vector<16x32xf32>
    %c0_179 = arith.constant 0 : index
    %c0_180 = arith.constant 0 : index
    %439 = vector.load %arg20[%c0_179, %c0_180] : memref<1x32xf32, #tpu.memory_space<vmem>>, vector<1x32xf32>
    %440 = vector.broadcast %439 : vector<1x32xf32> to vector<16x32xf32>
    %441 = arith.mulf %438, %440 : vector<16x32xf32>
    %c0_181 = arith.constant 0 : index
    %c0_182 = arith.constant 0 : index
    %442 = vector.load %arg21[%c0_181, %c0_182] : memref<1x32xf32, #tpu.memory_space<vmem>>, vector<1x32xf32>
    %443 = vector.broadcast %442 : vector<1x32xf32> to vector<16x32xf32>
    %444 = arith.addf %441, %443 : vector<16x32xf32>
    %c0_183 = arith.constant 0 : index
    %c0_184 = arith.constant 0 : index
    %445 = vector.load %arg22[%c0_183, %c0_184] : memref<32x128xf32, #tpu.memory_space<vmem>>, vector<32x128xf32>
    %cst_185 = arith.constant dense<0.000000e+00> : vector<16x128xf32>
    %446 = tpu.matmul %444, %445, %cst_185 {dimension_numbers = #tpu.dot_dimension_numbers<[1], [0], [0], [1], [0, 0, 1, 1], [], []>} : vector<16x32xf32>, vector<32x128xf32>, vector<16x128xf32> -> vector<16x128xf32>
    %c0_186 = arith.constant 0 : index
    %c0_187 = arith.constant 0 : index
    %447 = vector.load %arg23[%c0_186, %c0_187] : memref<16x128xf32, #tpu.memory_space<vmem>>, vector<16x128xf32>
    tpu.vector_store %arg23[%c0_186, %c0_187], %446 {strides = array<i32>} : memref<16x128xf32, #tpu.memory_space<vmem>>, vector<16x128xf32>,
    return
  }
}

</mosaic_0001>

<llo_original>
// kernel: tpu_custom_call.1
$region0: #{tpu_custom_call.1}
  #allocation0 [shape = 'u32[]', space=smem, size = 0x4, offset = 0x4, fixed_abs, tag = 'smem constant byte address 0x4 - core index']
  #allocation1 [shape = 'u32[144,128]{1,0:T(1,128)}', space=vmem, size = 0x12000, scoped, tag = 'internal scratch']
  %s0 = inlined_call_operand.hbm [shape: f32[2,256], index: 0, kind: input, shape index: {}]
  %s1 = inlined_call_operand.hbm [shape: f32[16,25], index: 1, kind: input, shape index: {}]
  %s2 = inlined_call_operand.hbm [shape: f32[2,32], index: 2, kind: input, shape index: {}]
  %s3 = inlined_call_operand.vmem [shape: f32[256,32], index: 3, kind: input, shape index: {}]
  %s4 = inlined_call_operand.hbm [shape: f32[1,32], index: 4, kind: input, shape index: {}]
  %s5 = inlined_call_operand.vmem [shape: f32[32,32], index: 5, kind: input, shape index: {}]
  %s6 = inlined_call_operand.hbm [shape: f32[1,32], index: 6, kind: input, shape index: {}]
  %s7 = inlined_call_operand.vmem [shape: f32[25,32], index: 7, kind: input, shape index: {}]
  %s8 = inlined_call_operand.vmem [shape: f32[32,384], index: 8, kind: input, shape index: {}]
  %s9 = inlined_call_operand.vmem [shape: f32[1,384], index: 9, kind: input, shape index: {}]
  %s10 = inlined_call_operand.vmem [shape: f32[2,32,96], index: 10, kind: input, shape index: {}]
  %s11 = inlined_call_operand.vmem [shape: f32[2,32,32], index: 11, kind: input, shape index: {}]
  %s12 = inlined_call_operand.vmem [shape: f32[2,1,32], index: 12, kind: input, shape index: {}]
  %s13 = inlined_call_operand.vmem [shape: f32[2,32,32], index: 13, kind: input, shape index: {}]
  %s14 = inlined_call_operand.vmem [shape: f32[2,32,32], index: 14, kind: input, shape index: {}]
  %s15 = inlined_call_operand.vmem [shape: f32[2,1,32], index: 15, kind: input, shape index: {}]
  %s16 = inlined_call_operand.vmem [shape: f32[2,32,256], index: 16, kind: input, shape index: {}]
  %s17 = inlined_call_operand.vmem [shape: f32[2,1,256], index: 17, kind: input, shape index: {}]
  %s18 = inlined_call_operand.vmem [shape: f32[2,128,32], index: 18, kind: input, shape index: {}]
  %s19 = inlined_call_operand.vmem [shape: f32[2,1,32], index: 19, kind: input, shape index: {}]
  %s20 = inlined_call_operand.vmem [shape: f32[1,32], index: 20, kind: input, shape index: {}]
  %s21 = inlined_call_operand.vmem [shape: f32[1,32], index: 21, kind: input, shape index: {}]
  %s22 = inlined_call_operand.vmem [shape: f32[32,128], index: 22, kind: input, shape index: {}]
  %s23 = inlined_call_operand.hbm [shape: f32[16,128], index: 23, kind: output, shape index: {}]
  %s24 = sld [smem:[#allocation0]]
  $region122: #{tpu_custom_call.1} parent=0
    _
  %s26 = ssub.s32 1, %s24
  %s27 = scalar_select 0, %s26, %s24
  $region1: #{tpu_custom_call.1} parent=0
    #allocation2 [shape = 'u8[2048]{0}', space=vmem, size = 0x800, scoped, tag = 'input window, operand 0, single buffered']
    #allocation3 [shape = 's32[1]{0}', space=sflag, size = 0x4, scoped, tag = 'scoped memory for tpu_custom_call.1']
    #allocation4 [shape = 's32[1]{0}', space=sflag, size = 0x4, scoped, tag = 'scoped memory for tpu_custom_call.1']
    #allocation5 [shape = 'u8[8192]{0}', space=vmem, size = 0x2000, scoped, tag = 'input window, operand 1, single buffered']
    #allocation6 [shape = 's32[1]{0}', space=sflag, size = 0x4, scoped, tag = 'scoped memory for tpu_custom_call.1']
    #allocation7 [shape = 'u8[1024]{0}', space=vmem, size = 0x400, scoped, tag = 'input window, operand 2, single buffered']
    #allocation8 [shape = 'u8[512]{0}', space=vmem, size = 0x400, scoped, tag = 'input window, operand 4, single buffered']
    #allocation9 [shape = 's32[1]{0}', space=sflag, size = 0x4, scoped, tag = 'scoped memory for tpu_custom_call.1']
    #allocation10 [shape = 'u8[512]{0}', space=vmem, size = 0x400, scoped, tag = 'input window, operand 6, single buffered']
    #allocation11 [shape = 'u8[8192]{0}', space=vmem, size = 0x2000, scoped, tag = 'output window, operand 0, single buffered']
    %28 = vsyncpa [#allocation3], 0
    %29 = vsyncpa [#allocation6], 0
    %30 = vsyncpa [#allocation9], 0
    %31 = vsyncpa [#allocation4], 0
    // Predicated region
    $region2: #{tpu_custom_call.1} parent=1 // pred_check
      _
    $region3: #{tpu_custom_call.1} parent=1 // pred_check_branch
      %33 = sbr.rel (0) target = $region5
    $region4: #{tpu_custom_call.1} parent=1 // pred_region
      %s35 = ssub.s32 64, 64
      %36 = vsyncadd [#allocation3], %s35
      %s38 = sshll.u32 [#allocation2], 4
      %s39 = int_to_ptr.vmem [resolvable:$true] %s38
      %41 = dma.hbm_to_vmem [thread:$0]  %s0, 64, %s39, [#allocation3]
    $region5: #{tpu_custom_call.1} parent=1 // pred_fallthru
      _
    // Predicated region
    $region6: #{tpu_custom_call.1} parent=1 // pred_check
      _
    $region7: #{tpu_custom_call.1} parent=1 // pred_check_branch
      %43 = sbr.rel (0) target = $region9
    $region8: #{tpu_custom_call.1} parent=1 // pred_region
      %s45 = ssub.s32 256, 256
      %46 = vsyncadd [#allocation6], %s45
      %s47 = sshll.u32 [#allocation5], 4
      %s48 = int_to_ptr.vmem [resolvable:$true] %s47
      %53 = dma.hbm_to_vmem [thread:$0]  %s1, 256, %s48, [#allocation6], 128, 128, 8
    $region9: #{tpu_custom_call.1} parent=1 // pred_fallthru
      _
    // Predicated region
    $region10: #{tpu_custom_call.1} parent=1 // pred_check
      _
    $region11: #{tpu_custom_call.1} parent=1 // pred_check_branch
      %55 = sbr.rel (0) target = $region13
    $region12: #{tpu_custom_call.1} parent=1 // pred_region
      %s57 = ssub.s32 32, 32
      %58 = vsyncadd [#allocation6], %s57
      %s60 = sshll.u32 [#allocation7], 4
      %s61 = int_to_ptr.vmem [resolvable:$true] %s60
      %63 = dma.hbm_to_vmem [thread:$0]  %s2, 32, %s61, [#allocation6]
    $region13: #{tpu_custom_call.1} parent=1 // pred_fallthru
      _
    // Predicated region
    $region14: #{tpu_custom_call.1} parent=1 // pred_check
      _
    $region15: #{tpu_custom_call.1} parent=1 // pred_check_branch
      %65 = sbr.rel (0) target = $region17
    $region16: #{tpu_custom_call.1} parent=1 // pred_region
      _
    $region17: #{tpu_custom_call.1} parent=1 // pred_fallthru
      _
    // Predicated region
    $region18: #{tpu_custom_call.1} parent=1 // pred_check
      _
    $region19: #{tpu_custom_call.1} parent=1 // pred_check_branch
      %67 = sbr.rel (0) target = $region21
    $region20: #{tpu_custom_call.1} parent=1 // pred_region
      %s69 = ssub.s32 16, 16
      %70 = vsyncadd [#allocation9], %s69
      %s72 = sshll.u32 [#allocation8], 4
      %s73 = int_to_ptr.vmem [resolvable:$true] %s72
      %75 = dma.hbm_to_vmem [thread:$0]  %s4, 16, %s73, [#allocation9]
    $region21: #{tpu_custom_call.1} parent=1 // pred_fallthru
      _
    // Predicated region
    $region22: #{tpu_custom_call.1} parent=1 // pred_check
      _
    $region23: #{tpu_custom_call.1} parent=1 // pred_check_branch
      %77 = sbr.rel (0) target = $region25
    $region24: #{tpu_custom_call.1} parent=1 // pred_region
      _
    $region25: #{tpu_custom_call.1} parent=1 // pred_fallthru
      _
    // Predicated region
    $region26: #{tpu_custom_call.1} parent=1 // pred_check
      _
    $region27: #{tpu_custom_call.1} parent=1 // pred_check_branch
      %79 = sbr.rel (0) target = $region29
    $region28: #{tpu_custom_call.1} parent=1 // pred_region
      %s81 = ssub.s32 16, 16
      %82 = vsyncadd [#allocation9], %s81
      %s84 = sshll.u32 [#allocation10], 4
      %s85 = int_to_ptr.vmem [resolvable:$true] %s84
      %87 = dma.hbm_to_vmem [thread:$0]  %s6, 16, %s85, [#allocation9]
    $region29: #{tpu_custom_call.1} parent=1 // pred_fallthru
      _
    // Predicated region
    $region30: #{tpu_custom_call.1} parent=1 // pred_check
      _
    $region31: #{tpu_custom_call.1} parent=1 // pred_check_branch
      %89 = sbr.rel (0) target = $region33
    $region32: #{tpu_custom_call.1} parent=1 // pred_region
      _
    $region33: #{tpu_custom_call.1} parent=1 // pred_fallthru
      _
    // Predicated region
    $region34: #{tpu_custom_call.1} parent=1 // pred_check
      _
    $region35: #{tpu_custom_call.1} parent=1 // pred_check_branch
      %91 = sbr.rel (0) target = $region37
    $region36: #{tpu_custom_call.1} parent=1 // pred_region
      _
    $region37: #{tpu_custom_call.1} parent=1 // pred_fallthru
      _
    // Predicated region
    $region38: #{tpu_custom_call.1} parent=1 // pred_check
      _
    $region39: #{tpu_custom_call.1} parent=1 // pred_check_branch
      %93 = sbr.rel (0) target = $region41
    $region40: #{tpu_custom_call.1} parent=1 // pred_region
      _
    $region41: #{tpu_custom_call.1} parent=1 // pred_fallthru
      _
    // Predicated region
    $region42: #{tpu_custom_call.1} parent=1 // pred_check
      _
    $region43: #{tpu_custom_call.1} parent=1 // pred_check_branch
      %95 = sbr.rel (0) target = $region45
    $region44: #{tpu_custom_call.1} parent=1 // pred_region
      _
    $region45: #{tpu_custom_call.1} parent=1 // pred_fallthru
      _
    // Predicated region
    $region46: #{tpu_custom_call.1} parent=1 // pred_check
      _
    $region47: #{tpu_custom_call.1} parent=1 // pred_check_branch
      %97 = sbr.rel (0) target = $region49
    $region48: #{tpu_custom_call.1} parent=1 // pred_region
      _
    $region49: #{tpu_custom_call.1} parent=1 // pred_fallthru
      _
    // Predicated region
    $region50: #{tpu_custom_call.1} parent=1 // pred_check
      _
    $region51: #{tpu_custom_call.1} parent=1 // pred_check_branch
      %99 = sbr.rel (0) target = $region53
    $region52: #{tpu_custom_call.1} parent=1 // pred_region
      _
    $region53: #{tpu_custom_call.1} parent=1 // pred_fallthru
      _
    // Predicated region
    $region54: #{tpu_custom_call.1} parent=1 // pred_check
      _
    $region55: #{tpu_custom_call.1} parent=1 // pred_check_branch
      %101 = sbr.rel (0) target = $region57
    $region56: #{tpu_custom_call.1} parent=1 // pred_region
      _
    $region57: #{tpu_custom_call.1} parent=1 // pred_fallthru
      _
    // Predicated region
    $region58: #{tpu_custom_call.1} parent=1 // pred_check
      _
    $region59: #{tpu_custom_call.1} parent=1 // pred_check_branch
      %103 = sbr.rel (0) target = $region61
    $region60: #{tpu_custom_call.1} parent=1 // pred_region
      _
    $region61: #{tpu_custom_call.1} parent=1 // pred_fallthru
      _
    // Predicated region
    $region62: #{tpu_custom_call.1} parent=1 // pred_check
      _
    $region63: #{tpu_custom_call.1} parent=1 // pred_check_branch
      %105 = sbr.rel (0) target = $region65
    $region64: #{tpu_custom_call.1} parent=1 // pred_region
      _
    $region65: #{tpu_custom_call.1} parent=1 // pred_fallthru
      _
    // Predicated region
    $region66: #{tpu_custom_call.1} parent=1 // pred_check
      _
    $region67: #{tpu_custom_call.1} parent=1 // pred_check_branch
      %107 = sbr.rel (0) target = $region69
    $region68: #{tpu_custom_call.1} parent=1 // pred_region
      _
    $region69: #{tpu_custom_call.1} parent=1 // pred_fallthru
      _
    // Predicated region
    $region70: #{tpu_custom_call.1} parent=1 // pred_check
      _
    $region71: #{tpu_custom_call.1} parent=1 // pred_check_branch
      %109 = sbr.rel (0) target = $region73
    $region72: #{tpu_custom_call.1} parent=1 // pred_region
      _
    $region73: #{tpu_custom_call.1} parent=1 // pred_fallthru
      _
    // Predicated region
    $region74: #{tpu_custom_call.1} parent=1 // pred_check
      _
    $region75: #{tpu_custom_call.1} parent=1 // pred_check_branch
      %111 = sbr.rel (0) target = $region77
    $region76: #{tpu_custom_call.1} parent=1 // pred_region
      _
    $region77: #{tpu_custom_call.1} parent=1 // pred_fallthru
      _
    // Predicated region
    $region78: #{tpu_custom_call.1} parent=1 // pred_check
      _
    $region79: #{tpu_custom_call.1} parent=1 // pred_check_branch
      %113 = sbr.rel (0) target = $region81
    $region80: #{tpu_custom_call.1} parent=1 // pred_region
      _
    $region81: #{tpu_custom_call.1} parent=1 // pred_fallthru
      _
    // Predicated region
    $region82: #{tpu_custom_call.1} parent=1 // pred_check
      _
    $region83: #{tpu_custom_call.1} parent=1 // pred_check_branch
      %115 = sbr.rel (0) target = $region85
    $region84: #{tpu_custom_call.1} parent=1 // pred_region
      _
    $region85: #{tpu_custom_call.1} parent=1 // pred_fallthru
      _
    // Predicated region
    $region86: #{tpu_custom_call.1} parent=1 // pred_check
      _
    $region87: #{tpu_custom_call.1} parent=1 // pred_check_branch
      %117 = sbr.rel (0) target = $region89
    $region88: #{tpu_custom_call.1} parent=1 // pred_region
      _
    $region89: #{tpu_custom_call.1} parent=1 // pred_fallthru
      _
    // Predicated region
    $region90: #{tpu_custom_call.1} parent=1 // pred_check
      _
    $region91: #{tpu_custom_call.1} parent=1 // pred_check_branch
      %119 = sbr.rel (0) target = $region93
    $region92: #{tpu_custom_call.1} parent=1 // pred_region
      _
    $region93: #{tpu_custom_call.1} parent=1 // pred_fallthru
      _
    // Predicated region
    $region94: #{tpu_custom_call.1} parent=1 // pred_check
      _
    $region95: #{tpu_custom_call.1} parent=1 // pred_check_branch
      %121 = sbr.rel (0) target = $region97
    $region96: #{tpu_custom_call.1} parent=1 // pred_region
      %122 = dma.done [#allocation3], 64
    $region97: #{tpu_custom_call.1} parent=1 // pred_fallthru
      _
    // Predicated region
    $region98: #{tpu_custom_call.1} parent=1 // pred_check
      _
    $region99: #{tpu_custom_call.1} parent=1 // pred_check_branch
      %124 = sbr.rel (0) target = $region101
    $region100: #{tpu_custom_call.1} parent=1 // pred_region
      %125 = dma.done [#allocation6], 256
    $region101: #{tpu_custom_call.1} parent=1 // pred_fallthru
      _
    // Predicated region
    $region102: #{tpu_custom_call.1} parent=1 // pred_check
      _
    $region103: #{tpu_custom_call.1} parent=1 // pred_check_branch
      %127 = sbr.rel (0) target = $region105
    $region104: #{tpu_custom_call.1} parent=1 // pred_region
      %128 = dma.done [#allocation6], 32
    $region105: #{tpu_custom_call.1} parent=1 // pred_fallthru
      _
    // Predicated region
    $region106: #{tpu_custom_call.1} parent=1 // pred_check
      _
    $region107: #{tpu_custom_call.1} parent=1 // pred_check_branch
      %130 = sbr.rel (0) target = $region109
    $region108: #{tpu_custom_call.1} parent=1 // pred_region
      %131 = dma.done [#allocation9], 16
    $region109: #{tpu_custom_call.1} parent=1 // pred_fallthru
      _
    // Predicated region
    $region110: #{tpu_custom_call.1} parent=1 // pred_check
      _
    $region111: #{tpu_custom_call.1} parent=1 // pred_check_branch
      %133 = sbr.rel (0) target = $region113
    $region112: #{tpu_custom_call.1} parent=1 // pred_region
      %134 = dma.done [#allocation9], 16
    $region113: #{tpu_custom_call.1} parent=1 // pred_fallthru
      _
    %v135 = vld [vmem:[#allocation2] sm:$0xf]
    %v136 = vld [vmem:[%s3] sm:$0xff]
    %v137 = vld [vmem:[%s3 + $0x8] sm:$0xff]
    %v138 = vld [vmem:[%s3 + $0x10] sm:$0xff]
    %v139 = vld [vmem:[%s3 + $0x18] sm:$0xff]
    %v140 = vld [vmem:[%s3 + $0x20] sm:$0xff]
    %v141 = vld [vmem:[%s3 + $0x28] sm:$0xff]
    %v142 = vld [vmem:[%s3 + $0x30] sm:$0xff]
    %v143 = vld [vmem:[%s3 + $0x38] sm:$0xff]
    %v144 = vld [vmem:[%s3 + $0x40] sm:$0xff]
    %v145 = vld [vmem:[%s3 + $0x48] sm:$0xff]
    %v146 = vld [vmem:[%s3 + $0x50] sm:$0xff]
    %v147 = vld [vmem:[%s3 + $0x58] sm:$0xff]
    %v148 = vld [vmem:[%s3 + $0x60] sm:$0xff]
    %v149 = vld [vmem:[%s3 + $0x68] sm:$0xff]
    %v150 = vld [vmem:[%s3 + $0x70] sm:$0xff]
    %v151 = vld [vmem:[%s3 + $0x78] sm:$0xff]
    %v152 = vld [vmem:[%s3 + $0x80] sm:$0xff]
    %v153 = vld [vmem:[%s3 + $0x88] sm:$0xff]
    %v154 = vld [vmem:[%s3 + $0x90] sm:$0xff]
    %v155 = vld [vmem:[%s3 + $0x98] sm:$0xff]
    %v156 = vld [vmem:[%s3 + $0xa0] sm:$0xff]
    %v157 = vld [vmem:[%s3 + $0xa8] sm:$0xff]
    %v158 = vld [vmem:[%s3 + $0xb0] sm:$0xff]
    %v159 = vld [vmem:[%s3 + $0xb8] sm:$0xff]
    %v160 = vld [vmem:[%s3 + $0xc0] sm:$0xff]
    %v161 = vld [vmem:[%s3 + $0xc8] sm:$0xff]
    %v162 = vld [vmem:[%s3 + $0xd0] sm:$0xff]
    %v163 = vld [vmem:[%s3 + $0xd8] sm:$0xff]
    %v164 = vld [vmem:[%s3 + $0xe0] sm:$0xff]
    %v165 = vld [vmem:[%s3 + $0xe8] sm:$0xff]
    %v166 = vld [vmem:[%s3 + $0xf0] sm:$0xff]
    %v167 = vld [vmem:[%s3 + $0xf8] sm:$0xff]
    %v168 = vld [vmem:[#allocation8] sm:$0x1]
    %v170 = vlaneseq
    %v171 = vshrl.u32 %v170, 7
    %v172 = vsub.s32 0, %v171
    %v173 = vrot.slane %v168, %v172
    %v177 = vunpack.c.l.s4 1983009808
    %v178 = vunpack.c.0.s8 %v177
    %v179 = vlaneseq
    %v180 = vshrl.u32 %v179, 7
    %v181 = vsub.s32 %v178, %v180
    %v182 = vrot.slane %v135, %v181
    %v183 = vcombine.high %v182, %v182
    %186 = vmatprep.subr.mxu0 0.0
    %187 = vmatpush1.msra.mxu0 %v151
    %188 = vmatprep.subr.mxu0 0.0
    %189 = vmatpush1.msra.mxu0 %v150
    %190 = vmatprep.subr.mxu0 0.0
    %191 = vmatpush1.msra.mxu0 %v149
    %192 = vmatprep.subr.mxu0 0.0
    %193 = vmatpush1.msra.mxu0 %v148
    %194 = vmatprep.subr.mxu0 0.0
    %195 = vmatpush1.msra.mxu0 %v147
    %196 = vmatprep.subr.mxu0 0.0
    %197 = vmatpush1.msra.mxu0 %v146
    %198 = vmatprep.subr.mxu0 0.0
    %199 = vmatpush1.msra.mxu0 %v145
    %200 = vmatprep.subr.mxu0 0.0
    %201 = vmatpush1.msra.mxu0 %v144
    %202 = vmatprep.subr.mxu0 0.0
    %203 = vmatpush1.msra.mxu0 %v143
    %204 = vmatprep.subr.mxu0 0.0
    %205 = vmatpush1.msra.mxu0 %v142
    %206 = vmatprep.subr.mxu0 0.0
    %207 = vmatpush1.msra.mxu0 %v141
    %208 = vmatprep.subr.mxu0 0.0
    %209 = vmatpush1.msra.mxu0 %v140
    %210 = vmatprep.subr.mxu0 0.0
    %211 = vmatpush1.msra.mxu0 %v139
    %212 = vmatprep.subr.mxu0 0.0
    %213 = vmatpush1.msra.mxu0 %v138
    %214 = vmatprep.subr.mxu0 0.0
    %215 = vmatpush1.msra.mxu0 %v137
    %216 = vmatprep.subr.mxu0 0.0
    %217 = vmatpush1.msra.mxu0 %v136
    %218 = vmatprep.subr.mxu0 0.0
    %219 = vmatpush2.msra.mxu0 %v167
    %220 = vmatprep.subr.mxu0 0.0
    %221 = vmatpush2.msra.mxu0 %v166
    %222 = vmatprep.subr.mxu0 0.0
    %223 = vmatpush2.msra.mxu0 %v165
    %224 = vmatprep.subr.mxu0 0.0
    %225 = vmatpush2.msra.mxu0 %v164
    %226 = vmatprep.subr.mxu0 0.0
    %227 = vmatpush2.msra.mxu0 %v163
    %228 = vmatprep.subr.mxu0 0.0
    %229 = vmatpush2.msra.mxu0 %v162
    %230 = vmatprep.subr.mxu0 0.0
    %231 = vmatpush2.msra.mxu0 %v161
    %232 = vmatprep.subr.mxu0 0.0
    %233 = vmatpush2.msra.mxu0 %v160
    %234 = vmatprep.subr.mxu0 0.0
    %235 = vmatpush2.msra.mxu0 %v159
    %236 = vmatprep.subr.mxu0 0.0
    %237 = vmatpush2.msra.mxu0 %v158
    %238 = vmatprep.subr.mxu0 0.0
    %239 = vmatpush2.msra.mxu0 %v157
    %240 = vmatprep.subr.mxu0 0.0
    %241 = vmatpush2.msra.mxu0 %v156
    %242 = vmatprep.subr.mxu0 0.0
    %243 = vmatpush2.msra.mxu0 %v155
    %244 = vmatprep.subr.mxu0 0.0
    %245 = vmatpush2.msra.mxu0 %v154
    %246 = vmatprep.subr.mxu0 0.0
    %247 = vmatpush2.msra.mxu0 %v153
    %248 = vmatprep.subr.mxu0 0.0
    %249 = vmatpush2.msra.mxu0 %v152
    %250 = vmatprep.mubr.f32.mxu0 %v183
    %251 = vmatmul.mubr.f32.gmra.mxu0 %v182
    %v252 = vpop.f32.mrf.mxu0
    %v253 = vadd.f32 %v173, %v252
    %v254 = vpop.f32.mrf.mxu0
    %255 = vdwg.mxu0
    %v256 = vxor.u32 %v253, 2147483648
    %v257 = vmul.f32 %v256, 1.442695
    %v258 = vpow.pop %v257
    %v259 = vadd.f32 %v258, 1.0
    %v260 = vrcp.pop %v259
    %v261 = vmul.f32 1.0, %v260
    %v262 = vmul.f32 %v253, %v261
    %v263 = vld [vmem:[%s5] sm:$0xff]
    %v264 = vld [vmem:[%s5 + $0x8] sm:$0xff]
    %v265 = vld [vmem:[%s5 + $0x10] sm:$0xff]
    %v266 = vld [vmem:[%s5 + $0x18] sm:$0xff]
    %v267 = vld [vmem:[#allocation10] sm:$0x1]
    %v269 = vlaneseq
    %v270 = vshrl.u32 %v269, 7
    %v271 = vsub.s32 0, %v270
    %v272 = vrot.slane %v267, %v271
    %vm274 = vcmask 261120
    %v276 = vsel %vm274, %v262, 0
    %278 = vmatprep.subr.mxu0 0.0
    %279 = vmatpush1.msra.mxu0 0.0
    %280 = vmatprep.subr.mxu0 0.0
    %281 = vmatpush1.msra.mxu0 0.0
    %282 = vmatprep.subr.mxu0 0.0
    %283 = vmatpush1.msra.mxu0 0.0
    %284 = vmatprep.subr.mxu0 0.0
    %285 = vmatpush1.msra.mxu0 0.0
    %286 = vmatprep.subr.mxu0 0.0
    %287 = vmatpush1.msra.mxu0 0.0
    %288 = vmatprep.subr.mxu0 0.0
    %289 = vmatpush1.msra.mxu0 0.0
    %290 = vmatprep.subr.mxu0 0.0
    %291 = vmatpush1.msra.mxu0 0.0
    %292 = vmatprep.subr.mxu0 0.0
    %293 = vmatpush1.msra.mxu0 0.0
    %294 = vmatprep.subr.mxu0 0.0
    %295 = vmatpush1.msra.mxu0 0.0
    %296 = vmatprep.subr.mxu0 0.0
    %297 = vmatpush1.msra.mxu0 0.0
    %298 = vmatprep.subr.mxu0 0.0
    %299 = vmatpush1.msra.mxu0 0.0
    %300 = vmatprep.subr.mxu0 0.0
    %301 = vmatpush1.msra.mxu0 0.0
    %302 = vmatprep.subr.mxu0 0.0
    %303 = vmatpush1.msra.mxu0 %v266
    %304 = vmatprep.subr.mxu0 0.0
    %305 = vmatpush1.msra.mxu0 %v265
    %306 = vmatprep.subr.mxu0 0.0
    %307 = vmatpush1.msra.mxu0 %v264
    %308 = vmatprep.subr.mxu0 0.0
    %309 = vmatpush1.msra.mxu0 %v263
    %310 = vmatprep.subr.mxu0 0.0
    %311 = vmatpush2.msra.mxu0 0.0
    %312 = vmatprep.subr.mxu0 0.0
    %313 = vmatpush2.msra.mxu0 0.0
    %314 = vmatprep.subr.mxu0 0.0
    %315 = vmatpush2.msra.mxu0 0.0
    %316 = vmatprep.subr.mxu0 0.0
    %317 = vmatpush2.msra.mxu0 0.0
    %318 = vmatprep.subr.mxu0 0.0
    %319 = vmatpush2.msra.mxu0 0.0
    %320 = vmatprep.subr.mxu0 0.0
    %321 = vmatpush2.msra.mxu0 0.0
    %322 = vmatprep.subr.mxu0 0.0
    %323 = vmatpush2.msra.mxu0 0.0
    %324 = vmatprep.subr.mxu0 0.0
    %325 = vmatpush2.msra.mxu0 0.0
    %326 = vmatprep.subr.mxu0 0.0
    %327 = vmatpush2.msra.mxu0 0.0
    %328 = vmatprep.subr.mxu0 0.0
    %329 = vmatpush2.msra.mxu0 0.0
    %330 = vmatprep.subr.mxu0 0.0
    %331 = vmatpush2.msra.mxu0 0.0
    %332 = vmatprep.subr.mxu0 0.0
    %333 = vmatpush2.msra.mxu0 0.0
    %334 = vmatprep.subr.mxu0 0.0
    %335 = vmatpush2.msra.mxu0 0.0
    %336 = vmatprep.subr.mxu0 0.0
    %337 = vmatpush2.msra.mxu0 0.0
    %338 = vmatprep.subr.mxu0 0.0
    %339 = vmatpush2.msra.mxu0 0.0
    %340 = vmatprep.subr.mxu0 0.0
    %341 = vmatpush2.msra.mxu0 0.0
    %342 = vmatprep.mubr.f32.mxu0 0.0
    %343 = vmatmul.mubr.f32.gmra.mxu0 %v276
    %v344 = vpop.f32.mrf.mxu0
    %v345 = vadd.f32 %v272, %v344
    %v346 = vpop.f32.mrf.mxu0
    %347 = vdwg.mxu0
    %v348 = vxor.u32 %v345, 2147483648
    %v349 = vmul.f32 %v348, 1.442695
    %v350 = vpow.pop %v349
    %v351 = vadd.f32 %v350, 1.0
    %v352 = vrcp.pop %v351
    %v353 = vmul.f32 1.0, %v352
    %v354 = vmul.f32 %v345, %v353
    %v355 = vxor.u32 %v354, 2147483648
    %v356 = vmul.f32 %v355, 1.442695
    %v357 = vpow.pop %v356
    %v358 = vadd.f32 %v357, 1.0
    %v359 = vrcp.pop %v358
    %v360 = vmul.f32 1.0, %v359
    %v361 = vmul.f32 %v354, %v360
    %v362 = vld [vmem:[%s8] sm:$0xff]
    %v363 = vld [vmem:[%s8 + $0x8] sm:$0xff]
    %v364 = vld [vmem:[%s8 + $0x10] sm:$0xff]
    %v365 = vld [vmem:[%s8 + $0x18] sm:$0xff]
    %v366 = vld [vmem:[%s8 + $0x20] sm:$0xff]
    %v367 = vld [vmem:[%s8 + $0x28] sm:$0xff]
    %v368 = vld [vmem:[%s8 + $0x30] sm:$0xff]
    %v369 = vld [vmem:[%s8 + $0x38] sm:$0xff]
    %v370 = vld [vmem:[%s8 + $0x40] sm:$0xff]
    %v371 = vld [vmem:[%s8 + $0x48] sm:$0xff]
    %v372 = vld [vmem:[%s8 + $0x50] sm:$0xff]
    %v373 = vld [vmem:[%s8 + $0x58] sm:$0xff]
    %v374 = vld [vmem:[%s9] sm:$0x7]
    %v376 = vlaneseq
    %v377 = vshrl.u32 %v376, 7
    %v378 = vsub.s32 0, %v377
    %v379 = vrot.slane %v374, %v378
    %v380 = vlaneseq
    %v381 = vshrl.u32 %v380, 7
    %v382 = vsub.s32 1, %v381
    %v383 = vrot.slane %v374, %v382
    %v384 = vlaneseq
    %v385 = vshrl.u32 %v384, 7
    %v386 = vsub.s32 2, %v385
    %v387 = vrot.slane %v374, %v386
    %v392 = vsel %vm274, %v361, 0
    %394 = vmatprep.subr.mxu0 0.0
    %395 = vmatpush1.msra.mxu0 0.0
    %396 = vmatprep.subr.mxu0 0.0
    %397 = vmatpush1.msra.mxu0 0.0
    %398 = vmatprep.subr.mxu0 0.0
    %399 = vmatpush1.msra.mxu0 0.0
    %400 = vmatprep.subr.mxu0 0.0
    %401 = vmatpush1.msra.mxu0 0.0
    %402 = vmatprep.subr.mxu0 0.0
    %403 = vmatpush1.msra.mxu0 0.0
    %404 = vmatprep.subr.mxu0 0.0
    %405 = vmatpush1.msra.mxu0 0.0
    %406 = vmatprep.subr.mxu0 0.0
    %407 = vmatpush1.msra.mxu0 0.0
    %408 = vmatprep.subr.mxu0 0.0
    %409 = vmatpush1.msra.mxu0 0.0
    %410 = vmatprep.subr.mxu0 0.0
    %411 = vmatpush1.msra.mxu0 0.0
    %412 = vmatprep.subr.mxu0 0.0
    %413 = vmatpush1.msra.mxu0 0.0
    %414 = vmatprep.subr.mxu0 0.0
    %415 = vmatpush1.msra.mxu0 0.0
    %416 = vmatprep.subr.mxu0 0.0
    %417 = vmatpush1.msra.mxu0 0.0
    %418 = vmatprep.subr.mxu0 %v372
    %419 = vmatpush1.msra.mxu0 %v371
    %420 = vmatprep.subr.mxu0 %v369
    %421 = vmatpush1.msra.mxu0 %v368
    %422 = vmatprep.subr.mxu0 %v366
    %423 = vmatpush1.msra.mxu0 %v365
    %424 = vmatprep.subr.mxu0 %v363
    %425 = vmatpush1.msra.mxu0 %v362
    %426 = vmatprep.subr.mxu0 0.0
    %427 = vmatpush2.msra.mxu0 0.0
    %428 = vmatprep.subr.mxu0 0.0
    %429 = vmatpush2.msra.mxu0 0.0
    %430 = vmatprep.subr.mxu0 0.0
    %431 = vmatpush2.msra.mxu0 0.0
    %432 = vmatprep.subr.mxu0 0.0
    %433 = vmatpush2.msra.mxu0 0.0
    %434 = vmatprep.subr.mxu0 0.0
    %435 = vmatpush2.msra.mxu0 0.0
    %436 = vmatprep.subr.mxu0 0.0
    %437 = vmatpush2.msra.mxu0 0.0
    %438 = vmatprep.subr.mxu0 0.0
    %439 = vmatpush2.msra.mxu0 0.0
    %440 = vmatprep.subr.mxu0 0.0
    %441 = vmatpush2.msra.mxu0 0.0
    %442 = vmatprep.subr.mxu0 0.0
    %443 = vmatpush2.msra.mxu0 0.0
    %444 = vmatprep.subr.mxu0 0.0
    %445 = vmatpush2.msra.mxu0 0.0
    %446 = vmatprep.subr.mxu0 0.0
    %447 = vmatpush2.msra.mxu0 0.0
    %448 = vmatprep.subr.mxu0 0.0
    %449 = vmatpush2.msra.mxu0 0.0
    %450 = vmatprep.subr.mxu0 0.0
    %451 = vmatpush2.msra.mxu0 0.0
    %452 = vmatprep.subr.mxu0 0.0
    %453 = vmatpush2.msra.mxu0 0.0
    %454 = vmatprep.subr.mxu0 0.0
    %455 = vmatpush2.msra.mxu0 0.0
    %456 = vmatprep.subr.mxu0 0.0
    %457 = vmatpush2.msra.mxu0 0.0
    %458 = vmatprep.mubr.f32.mxu0 0.0
    %459 = vmatmul.mubr.f32.gmra.mxu0 %v392
    %v460 = vpop.f32.mrf.mxu0
    %v461 = vadd.f32 %v379, %v460
    %v462 = vpop.f32.mrf.mxu0
    %v463 = vadd.f32 %v383, %v462
    %464 = vdwg.mxu0
    %465 = vmatprep.subr.mxu0 0.0
    %466 = vmatpush1.msra.mxu0 0.0
    %467 = vmatprep.subr.mxu0 0.0
    %468 = vmatpush1.msra.mxu0 0.0
    %469 = vmatprep.subr.mxu0 0.0
    %470 = vmatpush1.msra.mxu0 0.0
    %471 = vmatprep.subr.mxu0 0.0
    %472 = vmatpush1.msra.mxu0 0.0
    %473 = vmatprep.subr.mxu0 0.0
    %474 = vmatpush1.msra.mxu0 0.0
    %475 = vmatprep.subr.mxu0 0.0
    %476 = vmatpush1.msra.mxu0 0.0
    %477 = vmatprep.subr.mxu0 0.0
    %478 = vmatpush1.msra.mxu0 0.0
    %479 = vmatprep.subr.mxu0 0.0
    %480 = vmatpush1.msra.mxu0 0.0
    %481 = vmatprep.subr.mxu0 0.0
    %482 = vmatpush1.msra.mxu0 0.0
    %483 = vmatprep.subr.mxu0 0.0
    %484 = vmatpush1.msra.mxu0 0.0
    %485 = vmatprep.subr.mxu0 0.0
    %486 = vmatpush1.msra.mxu0 0.0
    %487 = vmatprep.subr.mxu0 0.0
    %488 = vmatpush1.msra.mxu0 0.0
    %489 = vmatprep.subr.mxu0 0.0
    %490 = vmatpush1.msra.mxu0 %v373
    %491 = vmatprep.subr.mxu0 0.0
    %492 = vmatpush1.msra.mxu0 %v370
    %493 = vmatprep.subr.mxu0 0.0
    %494 = vmatpush1.msra.mxu0 %v367
    %495 = vmatprep.subr.mxu0 0.0
    %496 = vmatpush1.msra.mxu0 %v364
    %497 = vmatprep.subr.mxu0 0.0
    %498 = vmatpush2.msra.mxu0 0.0
    %499 = vmatprep.subr.mxu0 0.0
    %500 = vmatpush2.msra.mxu0 0.0
    %501 = vmatprep.subr.mxu0 0.0
    %502 = vmatpush2.msra.mxu0 0.0
    %503 = vmatprep.subr.mxu0 0.0
    %504 = vmatpush2.msra.mxu0 0.0
    %505 = vmatprep.subr.mxu0 0.0
    %506 = vmatpush2.msra.mxu0 0.0
    %507 = vmatprep.subr.mxu0 0.0
    %508 = vmatpush2.msra.mxu0 0.0
    %509 = vmatprep.subr.mxu0 0.0
    %510 = vmatpush2.msra.mxu0 0.0
    %511 = vmatprep.subr.mxu0 0.0
    %512 = vmatpush2.msra.mxu0 0.0
    %513 = vmatprep.subr.mxu0 0.0
    %514 = vmatpush2.msra.mxu0 0.0
    %515 = vmatprep.subr.mxu0 0.0
    %516 = vmatpush2.msra.mxu0 0.0
    %517 = vmatprep.subr.mxu0 0.0
    %518 = vmatpush2.msra.mxu0 0.0
    %519 = vmatprep.subr.mxu0 0.0
    %520 = vmatpush2.msra.mxu0 0.0
    %521 = vmatprep.subr.mxu0 0.0
    %522 = vmatpush2.msra.mxu0 0.0
    %523 = vmatprep.subr.mxu0 0.0
    %524 = vmatpush2.msra.mxu0 0.0
    %525 = vmatprep.subr.mxu0 0.0
    %526 = vmatpush2.msra.mxu0 0.0
    %527 = vmatprep.subr.mxu0 0.0
    %528 = vmatpush2.msra.mxu0 0.0
    %529 = vmatprep.mubr.f32.mxu0 0.0
    %530 = vmatmul.mubr.f32.gmra.mxu0 %v392
    %v531 = vpop.f32.mrf.mxu0
    %v532 = vadd.f32 %v387, %v531
    %v533 = vpop.f32.mrf.mxu0
    %534 = vdwg.mxu0
    %v535 = vlaneseq
    %v536 = vshrl.u32 %v535, 7
    %v537 = vsub.s32 0, %v536
    %v538 = vrot.slane %v461, %v537
    %v539 = vlaneseq
    %v540 = vshrl.u32 %v539, 7
    %v541 = vsub.s32 0, %v540
    %v542 = vrot.slane %v463, %v541
    %v543 = vlaneseq
    %v544 = vshrl.u32 %v543, 7
    %v545 = vsub.s32 0, %v544
    %v546 = vrot.slane %v532, %v545
    %v547 = vlaneseq
    %v548 = vshrl.u32 %v547, 7
    %v549 = vsub.s32 1, %v548
    %v550 = vrot.slane %v461, %v549
    %v551 = vlaneseq
    %v552 = vshrl.u32 %v551, 7
    %v553 = vsub.s32 1, %v552
    %v554 = vrot.slane %v463, %v553
    %v555 = vlaneseq
    %v556 = vshrl.u32 %v555, 7
    %v557 = vsub.s32 1, %v556
    %v558 = vrot.slane %v532, %v557
    %v559 = vld [vmem:[#allocation5] sm:$0xff]
    %v560 = vld [vmem:[#allocation5 + $0x8] sm:$0xff]
    %v561 = vld [vmem:[#allocation7] sm:$0x3]
    %v562 = vld [vmem:[%s7] sm:$0xff]
    %v563 = vld [vmem:[%s7 + $0x8] sm:$0xff]
    %v564 = vld [vmem:[%s7 + $0x10] sm:$0xff]
    %v565 = vld [vmem:[%s7 + $0x18] sm:$0x1]
    %vm566 = vcmask 203776
    %v568 = vsel %vm566, %v559, 0
    %v571 = vsel %vm566, %v560, 0
    %vm573 = vcmask 1040384
    %v575 = vsel %vm573, %v565, 0
    %577 = vmatprep.subr.mxu0 0.0
    %578 = vmatpush1.msra.mxu0 0.0
    %579 = vmatprep.subr.mxu0 0.0
    %580 = vmatpush1.msra.mxu0 0.0
    %581 = vmatprep.subr.mxu0 0.0
    %582 = vmatpush1.msra.mxu0 0.0
    %583 = vmatprep.subr.mxu0 0.0
    %584 = vmatpush1.msra.mxu0 0.0
    %585 = vmatprep.subr.mxu0 0.0
    %586 = vmatpush1.msra.mxu0 0.0
    %587 = vmatprep.subr.mxu0 0.0
    %588 = vmatpush1.msra.mxu0 0.0
    %589 = vmatprep.subr.mxu0 0.0
    %590 = vmatpush1.msra.mxu0 0.0
    %591 = vmatprep.subr.mxu0 0.0
    %592 = vmatpush1.msra.mxu0 0.0
    %593 = vmatprep.subr.mxu0 0.0
    %594 = vmatpush1.msra.mxu0 0.0
    %595 = vmatprep.subr.mxu0 0.0
    %596 = vmatpush1.msra.mxu0 0.0
    %597 = vmatprep.subr.mxu0 0.0
    %598 = vmatpush1.msra.mxu0 0.0
    %599 = vmatprep.subr.mxu0 0.0
    %600 = vmatpush1.msra.mxu0 0.0
    %601 = vmatprep.subr.mxu0 0.0
    %602 = vmatpush1.msra.mxu0 %v575
    %603 = vmatprep.subr.mxu0 0.0
    %604 = vmatpush1.msra.mxu0 %v564
    %605 = vmatprep.subr.mxu0 0.0
    %606 = vmatpush1.msra.mxu0 %v563
    %607 = vmatprep.subr.mxu0 0.0
    %608 = vmatpush1.msra.mxu0 %v562
    %609 = vmatprep.subr.mxu0 0.0
    %610 = vmatpush2.msra.mxu0 0.0
    %611 = vmatprep.subr.mxu0 0.0
    %612 = vmatpush2.msra.mxu0 0.0
    %613 = vmatprep.subr.mxu0 0.0
    %614 = vmatpush2.msra.mxu0 0.0
    %615 = vmatprep.subr.mxu0 0.0
    %616 = vmatpush2.msra.mxu0 0.0
    %617 = vmatprep.subr.mxu0 0.0
    %618 = vmatpush2.msra.mxu0 0.0
    %619 = vmatprep.subr.mxu0 0.0
    %620 = vmatpush2.msra.mxu0 0.0
    %621 = vmatprep.subr.mxu0 0.0
    %622 = vmatpush2.msra.mxu0 0.0
    %623 = vmatprep.subr.mxu0 0.0
    %624 = vmatpush2.msra.mxu0 0.0
    %625 = vmatprep.subr.mxu0 0.0
    %626 = vmatpush2.msra.mxu0 0.0
    %627 = vmatprep.subr.mxu0 0.0
    %628 = vmatpush2.msra.mxu0 0.0
    %629 = vmatprep.subr.mxu0 0.0
    %630 = vmatpush2.msra.mxu0 0.0
    %631 = vmatprep.subr.mxu0 0.0
    %632 = vmatpush2.msra.mxu0 0.0
    %633 = vmatprep.subr.mxu0 0.0
    %634 = vmatpush2.msra.mxu0 0.0
    %635 = vmatprep.subr.mxu0 0.0
    %636 = vmatpush2.msra.mxu0 0.0
    %637 = vmatprep.subr.mxu0 0.0
    %638 = vmatpush2.msra.mxu0 0.0
    %639 = vmatprep.subr.mxu0 0.0
    %640 = vmatpush2.msra.mxu0 0.0
    %641 = vmatprep.mubr.f32.mxu0 0.0
    %642 = vmatmul.mubr.f32.gmra.mxu0 %v568
    %v643 = vpop.f32.mrf.mxu0
    %v644 = vadd.f32 0.0, %v643
    %v645 = vpop.f32.mrf.mxu0
    %646 = vmatprep.mubr.f32.mxu0 0.0
    %647 = vmatmul.mubr.f32.gmra.mxu0 %v571
    %v648 = vpop.f32.mrf.mxu0
    %v649 = vadd.f32 0.0, %v648
    %v650 = vpop.f32.mrf.mxu0
    %651 = vdwg.mxu0
    %v652 = vsel %vm274, %v644, 0.0
    %653 = vadd.xlane.f32.xlu0 %v652
    %v654 = vpop.xlane.xlu0 %653
    %v655 = vsel %vm274, %v649, 0.0
    %656 = vadd.xlane.f32.xlu0 %v655
    %v657 = vpop.xlane.xlu0 %656
    %v658 = vrcp.pop 32.0
    %v659 = vmul.f32 %v654, %v658
    %v660 = vmul.f32 %v657, %v658
    %v661 = vsub.f32 %v644, %v659
    %v662 = vsub.f32 %v649, %v660
    %v663 = vmul.f32 %v661, %v661
    %v664 = vmul.f32 %v662, %v662
    %v665 = vsel %vm274, %v663, 0.0
    %666 = vadd.xlane.f32.xlu0 %v665
    %v667 = vpop.xlane.xlu0 %666
    %v668 = vsel %vm274, %v664, 0.0
    %669 = vadd.xlane.f32.xlu0 %v668
    %v670 = vpop.xlane.xlu0 %669
    %v671 = vmul.f32 %v667, %v658
    %v672 = vmul.f32 %v670, %v658
    %v673 = vadd.f32 %v671, 1e-05
    %v674 = vadd.f32 %v672, 1e-05
    %v675 = vrsqrt.pop %v673
    %v676 = vrsqrt.pop %v674
    %v677 = vmul.f32 %v661, %v675
    %v678 = vmul.f32 %v662, %v676
    %v679 = vadd.f32 %v538, 1.0
    %v680 = vadd.f32 %v550, 1.0
    %v681 = vmul.f32 %v677, %v679
    %v682 = vmul.f32 %v678, %v680
    %685 = vrot.lane.b32.xlu0 %v538, 96
    %v686 = vpop.permute.xlu0 %685
    %687 = vrot.lane.b32.xlu0 %v550, 96
    %v688 = vpop.permute.xlu0 %687
    %v691 = vadd.f32 %v681, %v686
    %v692 = vadd.f32 %v682, %v688
    %v693 = vld [vmem:[%s10] sm:$0xff]
    %v694 = vld [vmem:[%s10 + $0x8] sm:$0xff]
    %v695 = vld [vmem:[%s10 + $0x10] sm:$0xff]
    %v696 = vld [vmem:[%s10 + $0x18] sm:$0xff]
    %v698 = vsel %vm274, %v691, 0
    %v701 = vsel %vm274, %v692, 0
    %703 = vmatprep.subr.mxu0 0.0
    %704 = vmatpush1.msra.mxu0 0.0
    %705 = vmatprep.subr.mxu0 0.0
    %706 = vmatpush1.msra.mxu0 0.0
    %707 = vmatprep.subr.mxu0 0.0
    %708 = vmatpush1.msra.mxu0 0.0
    %709 = vmatprep.subr.mxu0 0.0
    %710 = vmatpush1.msra.mxu0 0.0
    %711 = vmatprep.subr.mxu0 0.0
    %712 = vmatpush1.msra.mxu0 0.0
    %713 = vmatprep.subr.mxu0 0.0
    %714 = vmatpush1.msra.mxu0 0.0
    %715 = vmatprep.subr.mxu0 0.0
    %716 = vmatpush1.msra.mxu0 0.0
    %717 = vmatprep.subr.mxu0 0.0
    %718 = vmatpush1.msra.mxu0 0.0
    %719 = vmatprep.subr.mxu0 0.0
    %720 = vmatpush1.msra.mxu0 0.0
    %721 = vmatprep.subr.mxu0 0.0
    %722 = vmatpush1.msra.mxu0 0.0
    %723 = vmatprep.subr.mxu0 0.0
    %724 = vmatpush1.msra.mxu0 0.0
    %725 = vmatprep.subr.mxu0 0.0
    %726 = vmatpush1.msra.mxu0 0.0
    %727 = vmatprep.subr.mxu0 0.0
    %728 = vmatpush1.msra.mxu0 %v696
    %729 = vmatprep.subr.mxu0 0.0
    %730 = vmatpush1.msra.mxu0 %v695
    %731 = vmatprep.subr.mxu0 0.0
    %732 = vmatpush1.msra.mxu0 %v694
    %733 = vmatprep.subr.mxu0 0.0
    %734 = vmatpush1.msra.mxu0 %v693
    %735 = vmatprep.subr.mxu0 0.0
    %736 = vmatpush2.msra.mxu0 0.0
    %737 = vmatprep.subr.mxu0 0.0
    %738 = vmatpush2.msra.mxu0 0.0
    %739 = vmatprep.subr.mxu0 0.0
    %740 = vmatpush2.msra.mxu0 0.0
    %741 = vmatprep.subr.mxu0 0.0
    %742 = vmatpush2.msra.mxu0 0.0
    %743 = vmatprep.subr.mxu0 0.0
    %744 = vmatpush2.msra.mxu0 0.0
    %745 = vmatprep.subr.mxu0 0.0
    %746 = vmatpush2.msra.mxu0 0.0
    %747 = vmatprep.subr.mxu0 0.0
    %748 = vmatpush2.msra.mxu0 0.0
    %749 = vmatprep.subr.mxu0 0.0
    %750 = vmatpush2.msra.mxu0 0.0
    %751 = vmatprep.subr.mxu0 0.0
    %752 = vmatpush2.msra.mxu0 0.0
    %753 = vmatprep.subr.mxu0 0.0
    %754 = vmatpush2.msra.mxu0 0.0
    %755 = vmatprep.subr.mxu0 0.0
    %756 = vmatpush2.msra.mxu0 0.0
    %757 = vmatprep.subr.mxu0 0.0
    %758 = vmatpush2.msra.mxu0 0.0
    %759 = vmatprep.subr.mxu0 0.0
    %760 = vmatpush2.msra.mxu0 0.0
    %761 = vmatprep.subr.mxu0 0.0
    %762 = vmatpush2.msra.mxu0 0.0
    %763 = vmatprep.subr.mxu0 0.0
    %764 = vmatpush2.msra.mxu0 0.0
    %765 = vmatprep.subr.mxu0 0.0
    %766 = vmatpush2.msra.mxu0 0.0
    %767 = vmatprep.mubr.f32.mxu0 0.0
    %768 = vmatmul.mubr.f32.gmra.mxu0 %v698
    %v769 = vpop.f32.mrf.mxu0
    %v770 = vadd.f32 0.0, %v769
    %v771 = vpop.f32.mrf.mxu0
    %772 = vmatprep.mubr.f32.mxu0 0.0
    %773 = vmatmul.mubr.f32.gmra.mxu0 %v701
    %v774 = vpop.f32.mrf.mxu0
    %v775 = vadd.f32 0.0, %v774
    %v776 = vpop.f32.mrf.mxu0
    %777 = vdwg.mxu0
    %v778 = vld [vmem:[%s11] sm:$0xff]
    %v779 = vld [vmem:[%s11 + $0x8] sm:$0xff]
    %v780 = vld [vmem:[%s11 + $0x10] sm:$0xff]
    %v781 = vld [vmem:[%s11 + $0x18] sm:$0xff]
    %783 = vrot.lane.b32.xlu0 %v770, 96
    %v784 = vpop.permute.xlu0 %783
    %vm785 = vcmask 130048
    %v786 = vsel %vm785, %v770, 0
    %v788 = vsel %vm785, %v784, 0
    %790 = vmatprep.subr.mxu0 0.0
    %791 = vmatpush1.xpose.msra.mxu0 0.0
    %792 = vmatprep.subr.mxu0 0.0
    %793 = vmatpush1.xpose.msra.mxu0 0.0
    %794 = vmatprep.subr.mxu0 0.0
    %795 = vmatpush1.xpose.msra.mxu0 0.0
    %796 = vmatprep.subr.mxu0 0.0
    %797 = vmatpush1.xpose.msra.mxu0 0.0
    %798 = vmatprep.subr.mxu0 0.0
    %799 = vmatpush1.xpose.msra.mxu0 0.0
    %800 = vmatprep.subr.mxu0 0.0
    %801 = vmatpush1.xpose.msra.mxu0 0.0
    %802 = vmatprep.subr.mxu0 0.0
    %803 = vmatpush1.xpose.msra.mxu0 0.0
    %804 = vmatprep.subr.mxu0 0.0
    %805 = vmatpush1.xpose.msra.mxu0 0.0
    %806 = vmatprep.subr.mxu0 0.0
    %807 = vmatpush1.xpose.msra.mxu0 0.0
    %808 = vmatprep.subr.mxu0 0.0
    %809 = vmatpush1.xpose.msra.mxu0 0.0
    %810 = vmatprep.subr.mxu0 0.0
    %811 = vmatpush1.xpose.msra.mxu0 0.0
    %812 = vmatprep.subr.mxu0 0.0
    %813 = vmatpush1.xpose.msra.mxu0 0.0
    %814 = vmatprep.subr.mxu0 0.0
    %815 = vmatpush1.xpose.msra.mxu0 0.0
    %816 = vmatprep.subr.mxu0 0.0
    %817 = vmatpush1.xpose.msra.mxu0 0.0
    %818 = vmatprep.subr.mxu0 0.0
    %819 = vmatpush1.xpose.msra.mxu0 0.0
    %820 = vmatprep.subr.mxu0 0.0
    %821 = vmatpush1.xpose.msra.mxu0 %v788
    %822 = vmatprep.subr.mxu0 0.0
    %823 = vmatpush2.xpose.msra.mxu0 0.0
    %824 = vmatprep.subr.mxu0 0.0
    %825 = vmatpush2.xpose.msra.mxu0 0.0
    %826 = vmatprep.subr.mxu0 0.0
    %827 = vmatpush2.xpose.msra.mxu0 0.0
    %828 = vmatprep.subr.mxu0 0.0
    %829 = vmatpush2.xpose.msra.mxu0 0.0
    %830 = vmatprep.subr.mxu0 0.0
    %831 = vmatpush2.xpose.msra.mxu0 0.0
    %832 = vmatprep.subr.mxu0 0.0
    %833 = vmatpush2.xpose.msra.mxu0 0.0
    %834 = vmatprep.subr.mxu0 0.0
    %835 = vmatpush2.xpose.msra.mxu0 0.0
    %836 = vmatprep.subr.mxu0 0.0
    %837 = vmatpush2.xpose.msra.mxu0 0.0
    %838 = vmatprep.subr.mxu0 0.0
    %839 = vmatpush2.xpose.msra.mxu0 0.0
    %840 = vmatprep.subr.mxu0 0.0
    %841 = vmatpush2.xpose.msra.mxu0 0.0
    %842 = vmatprep.subr.mxu0 0.0
    %843 = vmatpush2.xpose.msra.mxu0 0.0
    %844 = vmatprep.subr.mxu0 0.0
    %845 = vmatpush2.xpose.msra.mxu0 0.0
    %846 = vmatprep.subr.mxu0 0.0
    %847 = vmatpush2.xpose.msra.mxu0 0.0
    %848 = vmatprep.subr.mxu0 0.0
    %849 = vmatpush2.xpose.msra.mxu0 0.0
    %850 = vmatprep.subr.mxu0 0.0
    %851 = vmatpush2.xpose.msra.mxu0 0.0
    %852 = vmatprep.subr.mxu0 0.0
    %853 = vmatpush2.xpose.msra.mxu0 0.0
    %854 = vmatprep.mubr.f32.mxu0 0.0
    %855 = vmatmul.mubr.f32.gmra.mxu0 %v786
    %v856 = vpop.f32.mrf.mxu0
    %v857 = vadd.f32 0.0, %v856
    %v858 = vpop.f32.mrf.mxu0
    %859 = vdwg.mxu0
    %v860 = vmul.f32 %v857, 0.25
    %vm861 = vcmask 64512
    %v862 = vsel %vm861, %v860, -inf
    %863 = vmax.xlane.f32.xlu0 %v862
    %v864 = vpop.xlane.xlu0 %863
    %v865 = vsub.f32 %v860, %v864
    %v866 = vmul.f32 %v865, 1.442695
    %v867 = vpow.pop %v866
    %v868 = vsel %vm861, %v867, 0.0
    %869 = vadd.xlane.f32.xlu0 %v868
    %v870 = vpop.xlane.xlu0 %869
    %v871 = vrcp.pop %v870
    %v872 = vmul.f32 %v867, %v871
    %873 = vrot.lane.b32.xlu0 %v770, 64
    %v874 = vpop.permute.xlu0 %873
    %v877 = vsel %vm861, %v872, 0
    %879 = vmatprep.subr.mxu0 0.0
    %880 = vmatpush1.msra.mxu0 0.0
    %881 = vmatprep.subr.mxu0 0.0
    %882 = vmatpush1.msra.mxu0 0.0
    %883 = vmatprep.subr.mxu0 0.0
    %884 = vmatpush1.msra.mxu0 0.0
    %885 = vmatprep.subr.mxu0 0.0
    %886 = vmatpush1.msra.mxu0 0.0
    %887 = vmatprep.subr.mxu0 0.0
    %888 = vmatpush1.msra.mxu0 0.0
    %889 = vmatprep.subr.mxu0 0.0
    %890 = vmatpush1.msra.mxu0 0.0
    %891 = vmatprep.subr.mxu0 0.0
    %892 = vmatpush1.msra.mxu0 0.0
    %893 = vmatprep.subr.mxu0 0.0
    %894 = vmatpush1.msra.mxu0 0.0
    %895 = vmatprep.subr.mxu0 0.0
    %896 = vmatpush1.msra.mxu0 0.0
    %897 = vmatprep.subr.mxu0 0.0
    %898 = vmatpush1.msra.mxu0 0.0
    %899 = vmatprep.subr.mxu0 0.0
    %900 = vmatpush1.msra.mxu0 0.0
    %901 = vmatprep.subr.mxu0 0.0
    %902 = vmatpush1.msra.mxu0 0.0
    %903 = vmatprep.subr.mxu0 0.0
    %904 = vmatpush1.msra.mxu0 0.0
    %905 = vmatprep.subr.mxu0 0.0
    %906 = vmatpush1.msra.mxu0 0.0
    %907 = vmatprep.subr.mxu0 0.0
    %908 = vmatpush1.msra.mxu0 0.0
    %909 = vmatprep.subr.mxu0 0.0
    %910 = vmatpush1.msra.mxu0 %v874
    %911 = vmatprep.subr.mxu0 0.0
    %912 = vmatpush2.msra.mxu0 0.0
    %913 = vmatprep.subr.mxu0 0.0
    %914 = vmatpush2.msra.mxu0 0.0
    %915 = vmatprep.subr.mxu0 0.0
    %916 = vmatpush2.msra.mxu0 0.0
    %917 = vmatprep.subr.mxu0 0.0
    %918 = vmatpush2.msra.mxu0 0.0
    %919 = vmatprep.subr.mxu0 0.0
    %920 = vmatpush2.msra.mxu0 0.0
    %921 = vmatprep.subr.mxu0 0.0
    %922 = vmatpush2.msra.mxu0 0.0
    %923 = vmatprep.subr.mxu0 0.0
    %924 = vmatpush2.msra.mxu0 0.0
    %925 = vmatprep.subr.mxu0 0.0
    %926 = vmatpush2.msra.mxu0 0.0
    %927 = vmatprep.subr.mxu0 0.0
    %928 = vmatpush2.msra.mxu0 0.0
    %929 = vmatprep.subr.mxu0 0.0
    %930 = vmatpush2.msra.mxu0 0.0
    %931 = vmatprep.subr.mxu0 0.0
    %932 = vmatpush2.msra.mxu0 0.0
    %933 = vmatprep.subr.mxu0 0.0
    %934 = vmatpush2.msra.mxu0 0.0
    %935 = vmatprep.subr.mxu0 0.0
    %936 = vmatpush2.msra.mxu0 0.0
    %937 = vmatprep.subr.mxu0 0.0
    %938 = vmatpush2.msra.mxu0 0.0
    %939 = vmatprep.subr.mxu0 0.0
    %940 = vmatpush2.msra.mxu0 0.0
    %941 = vmatprep.subr.mxu0 0.0
    %942 = vmatpush2.msra.mxu0 0.0
    %943 = vmatprep.mubr.f32.mxu0 0.0
    %944 = vmatmul.mubr.f32.gmra.mxu0 %v877
    %v945 = vpop.f32.mrf.mxu0
    %v946 = vadd.f32 0.0, %v945
    %v947 = vpop.f32.mrf.mxu0
    %948 = vdwg.mxu0
    %949 = vrot.lane.b32.xlu0 %v770, 112
    %v950 = vpop.permute.xlu0 %949
    %951 = vrot.lane.b32.xlu0 %v770, 80
    %v952 = vpop.permute.xlu0 %951
    %v953 = vsel %vm785, %v950, 0
    %v955 = vsel %vm785, %v952, 0
    %957 = vmatprep.subr.mxu0 0.0
    %958 = vmatpush1.xpose.msra.mxu0 0.0
    %959 = vmatprep.subr.mxu0 0.0
    %960 = vmatpush1.xpose.msra.mxu0 0.0
    %961 = vmatprep.subr.mxu0 0.0
    %962 = vmatpush1.xpose.msra.mxu0 0.0
    %963 = vmatprep.subr.mxu0 0.0
    %964 = vmatpush1.xpose.msra.mxu0 0.0
    %965 = vmatprep.subr.mxu0 0.0
    %966 = vmatpush1.xpose.msra.mxu0 0.0
    %967 = vmatprep.subr.mxu0 0.0
    %968 = vmatpush1.xpose.msra.mxu0 0.0
    %969 = vmatprep.subr.mxu0 0.0
    %970 = vmatpush1.xpose.msra.mxu0 0.0
    %971 = vmatprep.subr.mxu0 0.0
    %972 = vmatpush1.xpose.msra.mxu0 0.0
    %973 = vmatprep.subr.mxu0 0.0
    %974 = vmatpush1.xpose.msra.mxu0 0.0
    %975 = vmatprep.subr.mxu0 0.0
    %976 = vmatpush1.xpose.msra.mxu0 0.0
    %977 = vmatprep.subr.mxu0 0.0
    %978 = vmatpush1.xpose.msra.mxu0 0.0
    %979 = vmatprep.subr.mxu0 0.0
    %980 = vmatpush1.xpose.msra.mxu0 0.0
    %981 = vmatprep.subr.mxu0 0.0
    %982 = vmatpush1.xpose.msra.mxu0 0.0
    %983 = vmatprep.subr.mxu0 0.0
    %984 = vmatpush1.xpose.msra.mxu0 0.0
    %985 = vmatprep.subr.mxu0 0.0
    %986 = vmatpush1.xpose.msra.mxu0 0.0
    %987 = vmatprep.subr.mxu0 0.0
    %988 = vmatpush1.xpose.msra.mxu0 %v955
    %989 = vmatprep.subr.mxu0 0.0
    %990 = vmatpush2.xpose.msra.mxu0 0.0
    %991 = vmatprep.subr.mxu0 0.0
    %992 = vmatpush2.xpose.msra.mxu0 0.0
    %993 = vmatprep.subr.mxu0 0.0
    %994 = vmatpush2.xpose.msra.mxu0 0.0
    %995 = vmatprep.subr.mxu0 0.0
    %996 = vmatpush2.xpose.msra.mxu0 0.0
    %997 = vmatprep.subr.mxu0 0.0
    %998 = vmatpush2.xpose.msra.mxu0 0.0
    %999 = vmatprep.subr.mxu0 0.0
    %1000 = vmatpush2.xpose.msra.mxu0 0.0
    %1001 = vmatprep.subr.mxu0 0.0
    %1002 = vmatpush2.xpose.msra.mxu0 0.0
    %1003 = vmatprep.subr.mxu0 0.0
    %1004 = vmatpush2.xpose.msra.mxu0 0.0
    %1005 = vmatprep.subr.mxu0 0.0
    %1006 = vmatpush2.xpose.msra.mxu0 0.0
    %1007 = vmatprep.subr.mxu0 0.0
    %1008 = vmatpush2.xpose.msra.mxu0 0.0
    %1009 = vmatprep.subr.mxu0 0.0
    %1010 = vmatpush2.xpose.msra.mxu0 0.0
    %1011 = vmatprep.subr.mxu0 0.0
    %1012 = vmatpush2.xpose.msra.mxu0 0.0
    %1013 = vmatprep.subr.mxu0 0.0
    %1014 = vmatpush2.xpose.msra.mxu0 0.0
    %1015 = vmatprep.subr.mxu0 0.0
    %1016 = vmatpush2.xpose.msra.mxu0 0.0
    %1017 = vmatprep.subr.mxu0 0.0
    %1018 = vmatpush2.xpose.msra.mxu0 0.0
    %1019 = vmatprep.subr.mxu0 0.0
    %1020 = vmatpush2.xpose.msra.mxu0 0.0
    %1021 = vmatprep.mubr.f32.mxu0 0.0
    %1022 = vmatmul.mubr.f32.gmra.mxu0 %v953
    %v1023 = vpop.f32.mrf.mxu0
    %v1024 = vadd.f32 0.0, %v1023
    %v1025 = vpop.f32.mrf.mxu0
    %1026 = vdwg.mxu0
    %v1027 = vmul.f32 %v1024, 0.25
    %v1028 = vsel %vm861, %v1027, -inf
    %1029 = vmax.xlane.f32.xlu0 %v1028
    %v1030 = vpop.xlane.xlu0 %1029
    %v1031 = vsub.f32 %v1027, %v1030
    %v1032 = vmul.f32 %v1031, 1.442695
    %v1033 = vpow.pop %v1032
    %v1034 = vsel %vm861, %v1033, 0.0
    %1035 = vadd.xlane.f32.xlu0 %v1034
    %v1036 = vpop.xlane.xlu0 %1035
    %v1037 = vrcp.pop %v1036
    %v1038 = vmul.f32 %v1033, %v1037
    %1039 = vrot.lane.b32.xlu0 %v770, 48
    %v1040 = vpop.permute.xlu0 %1039
    %v1043 = vsel %vm861, %v1038, 0
    %1045 = vmatprep.subr.mxu0 0.0
    %1046 = vmatpush1.msra.mxu0 0.0
    %1047 = vmatprep.subr.mxu0 0.0
    %1048 = vmatpush1.msra.mxu0 0.0
    %1049 = vmatprep.subr.mxu0 0.0
    %1050 = vmatpush1.msra.mxu0 0.0
    %1051 = vmatprep.subr.mxu0 0.0
    %1052 = vmatpush1.msra.mxu0 0.0
    %1053 = vmatprep.subr.mxu0 0.0
    %1054 = vmatpush1.msra.mxu0 0.0
    %1055 = vmatprep.subr.mxu0 0.0
    %1056 = vmatpush1.msra.mxu0 0.0
    %1057 = vmatprep.subr.mxu0 0.0
    %1058 = vmatpush1.msra.mxu0 0.0
    %1059 = vmatprep.subr.mxu0 0.0
    %1060 = vmatpush1.msra.mxu0 0.0
    %1061 = vmatprep.subr.mxu0 0.0
    %1062 = vmatpush1.msra.mxu0 0.0
    %1063 = vmatprep.subr.mxu0 0.0
    %1064 = vmatpush1.msra.mxu0 0.0
    %1065 = vmatprep.subr.mxu0 0.0
    %1066 = vmatpush1.msra.mxu0 0.0
    %1067 = vmatprep.subr.mxu0 0.0
    %1068 = vmatpush1.msra.mxu0 0.0
    %1069 = vmatprep.subr.mxu0 0.0
    %1070 = vmatpush1.msra.mxu0 0.0
    %1071 = vmatprep.subr.mxu0 0.0
    %1072 = vmatpush1.msra.mxu0 0.0
    %1073 = vmatprep.subr.mxu0 0.0
    %1074 = vmatpush1.msra.mxu0 0.0
    %1075 = vmatprep.subr.mxu0 0.0
    %1076 = vmatpush1.msra.mxu0 %v1040
    %1077 = vmatprep.subr.mxu0 0.0
    %1078 = vmatpush2.msra.mxu0 0.0
    %1079 = vmatprep.subr.mxu0 0.0
    %1080 = vmatpush2.msra.mxu0 0.0
    %1081 = vmatprep.subr.mxu0 0.0
    %1082 = vmatpush2.msra.mxu0 0.0
    %1083 = vmatprep.subr.mxu0 0.0
    %1084 = vmatpush2.msra.mxu0 0.0
    %1085 = vmatprep.subr.mxu0 0.0
    %1086 = vmatpush2.msra.mxu0 0.0
    %1087 = vmatprep.subr.mxu0 0.0
    %1088 = vmatpush2.msra.mxu0 0.0
    %1089 = vmatprep.subr.mxu0 0.0
    %1090 = vmatpush2.msra.mxu0 0.0
    %1091 = vmatprep.subr.mxu0 0.0
    %1092 = vmatpush2.msra.mxu0 0.0
    %1093 = vmatprep.subr.mxu0 0.0
    %1094 = vmatpush2.msra.mxu0 0.0
    %1095 = vmatprep.subr.mxu0 0.0
    %1096 = vmatpush2.msra.mxu0 0.0
    %1097 = vmatprep.subr.mxu0 0.0
    %1098 = vmatpush2.msra.mxu0 0.0
    %1099 = vmatprep.subr.mxu0 0.0
    %1100 = vmatpush2.msra.mxu0 0.0
    %1101 = vmatprep.subr.mxu0 0.0
    %1102 = vmatpush2.msra.mxu0 0.0
    %1103 = vmatprep.subr.mxu0 0.0
    %1104 = vmatpush2.msra.mxu0 0.0
    %1105 = vmatprep.subr.mxu0 0.0
    %1106 = vmatpush2.msra.mxu0 0.0
    %1107 = vmatprep.subr.mxu0 0.0
    %1108 = vmatpush2.msra.mxu0 0.0
    %1109 = vmatprep.mubr.f32.mxu0 0.0
    %1110 = vmatmul.mubr.f32.gmra.mxu0 %v1043
    %v1111 = vpop.f32.mrf.mxu0
    %v1112 = vadd.f32 0.0, %v1111
    %v1113 = vpop.f32.mrf.mxu0
    %1114 = vdwg.mxu0
    %v1116 = vsel %vm785, %v1112, 0
    %1118 = vmatprep.subr.mxu0 0.0
    %1119 = vmatpush1.msra.mxu0 0.0
    %1120 = vmatprep.subr.mxu0 0.0
    %1121 = vmatpush1.msra.mxu0 0.0
    %1122 = vmatprep.subr.mxu0 0.0
    %1123 = vmatpush1.msra.mxu0 0.0
    %1124 = vmatprep.subr.mxu0 0.0
    %1125 = vmatpush1.msra.mxu0 0.0
    %1126 = vmatprep.subr.mxu0 0.0
    %1127 = vmatpush1.msra.mxu0 0.0
    %1128 = vmatprep.subr.mxu0 0.0
    %1129 = vmatpush1.msra.mxu0 0.0
    %1130 = vmatprep.subr.mxu0 0.0
    %1131 = vmatpush1.msra.mxu0 0.0
    %1132 = vmatprep.subr.mxu0 0.0
    %1133 = vmatpush1.msra.mxu0 0.0
    %1134 = vmatprep.subr.mxu0 0.0
    %1135 = vmatpush1.msra.mxu0 0.0
    %1136 = vmatprep.subr.mxu0 0.0
    %1137 = vmatpush1.msra.mxu0 0.0
    %1138 = vmatprep.subr.mxu0 0.0
    %1139 = vmatpush1.msra.mxu0 0.0
    %1140 = vmatprep.subr.mxu0 0.0
    %1141 = vmatpush1.msra.mxu0 0.0
    %1142 = vmatprep.subr.mxu0 0.0
    %1143 = vmatpush1.msra.mxu0 0.0
    %1144 = vmatprep.subr.mxu0 0.0
    %1145 = vmatpush1.msra.mxu0 0.0
    %1146 = vmatprep.subr.mxu0 0.0
    %1147 = vmatpush1.msra.mxu0 %v781
    %1148 = vmatprep.subr.mxu0 0.0
    %1149 = vmatpush1.msra.mxu0 %v780
    %1150 = vmatprep.subr.mxu0 0.0
    %1151 = vmatpush2.msra.mxu0 0.0
    %1152 = vmatprep.subr.mxu0 0.0
    %1153 = vmatpush2.msra.mxu0 0.0
    %1154 = vmatprep.subr.mxu0 0.0
    %1155 = vmatpush2.msra.mxu0 0.0
    %1156 = vmatprep.subr.mxu0 0.0
    %1157 = vmatpush2.msra.mxu0 0.0
    %1158 = vmatprep.subr.mxu0 0.0
    %1159 = vmatpush2.msra.mxu0 0.0
    %1160 = vmatprep.subr.mxu0 0.0
    %1161 = vmatpush2.msra.mxu0 0.0
    %1162 = vmatprep.subr.mxu0 0.0
    %1163 = vmatpush2.msra.mxu0 0.0
    %1164 = vmatprep.subr.mxu0 0.0
    %1165 = vmatpush2.msra.mxu0 0.0
    %1166 = vmatprep.subr.mxu0 0.0
    %1167 = vmatpush2.msra.mxu0 0.0
    %1168 = vmatprep.subr.mxu0 0.0
    %1169 = vmatpush2.msra.mxu0 0.0
    %1170 = vmatprep.subr.mxu0 0.0
    %1171 = vmatpush2.msra.mxu0 0.0
    %1172 = vmatprep.subr.mxu0 0.0
    %1173 = vmatpush2.msra.mxu0 0.0
    %1174 = vmatprep.subr.mxu0 0.0
    %1175 = vmatpush2.msra.mxu0 0.0
    %1176 = vmatprep.subr.mxu0 0.0
    %1177 = vmatpush2.msra.mxu0 0.0
    %1178 = vmatprep.subr.mxu0 0.0
    %1179 = vmatpush2.msra.mxu0 0.0
    %1180 = vmatprep.subr.mxu0 0.0
    %1181 = vmatpush2.msra.mxu0 0.0
    %1182 = vmatprep.mubr.f32.mxu0 0.0
    %1183 = vmatmul.mubr.f32.gmra.mxu0 %v1116
    %v1184 = vpop.f32.mrf.mxu0
    %v1185 = vadd.f32 0.0, %v1184
    %v1186 = vpop.f32.mrf.mxu0
    %1187 = vdwg.mxu0
    %v1189 = vsel %vm785, %v946, 0
    %1191 = vmatprep.subr.mxu0 0.0
    %1192 = vmatpush1.msra.mxu0 0.0
    %1193 = vmatprep.subr.mxu0 0.0
    %1194 = vmatpush1.msra.mxu0 0.0
    %1195 = vmatprep.subr.mxu0 0.0
    %1196 = vmatpush1.msra.mxu0 0.0
    %1197 = vmatprep.subr.mxu0 0.0
    %1198 = vmatpush1.msra.mxu0 0.0
    %1199 = vmatprep.subr.mxu0 0.0
    %1200 = vmatpush1.msra.mxu0 0.0
    %1201 = vmatprep.subr.mxu0 0.0
    %1202 = vmatpush1.msra.mxu0 0.0
    %1203 = vmatprep.subr.mxu0 0.0
    %1204 = vmatpush1.msra.mxu0 0.0
    %1205 = vmatprep.subr.mxu0 0.0
    %1206 = vmatpush1.msra.mxu0 0.0
    %1207 = vmatprep.subr.mxu0 0.0
    %1208 = vmatpush1.msra.mxu0 0.0
    %1209 = vmatprep.subr.mxu0 0.0
    %1210 = vmatpush1.msra.mxu0 0.0
    %1211 = vmatprep.subr.mxu0 0.0
    %1212 = vmatpush1.msra.mxu0 0.0
    %1213 = vmatprep.subr.mxu0 0.0
    %1214 = vmatpush1.msra.mxu0 0.0
    %1215 = vmatprep.subr.mxu0 0.0
    %1216 = vmatpush1.msra.mxu0 0.0
    %1217 = vmatprep.subr.mxu0 0.0
    %1218 = vmatpush1.msra.mxu0 0.0
    %1219 = vmatprep.subr.mxu0 0.0
    %1220 = vmatpush1.msra.mxu0 %v779
    %1221 = vmatprep.subr.mxu0 0.0
    %1222 = vmatpush1.msra.mxu0 %v778
    %1223 = vmatprep.subr.mxu0 0.0
    %1224 = vmatpush2.msra.mxu0 0.0
    %1225 = vmatprep.subr.mxu0 0.0
    %1226 = vmatpush2.msra.mxu0 0.0
    %1227 = vmatprep.subr.mxu0 0.0
    %1228 = vmatpush2.msra.mxu0 0.0
    %1229 = vmatprep.subr.mxu0 0.0
    %1230 = vmatpush2.msra.mxu0 0.0
    %1231 = vmatprep.subr.mxu0 0.0
    %1232 = vmatpush2.msra.mxu0 0.0
    %1233 = vmatprep.subr.mxu0 0.0
    %1234 = vmatpush2.msra.mxu0 0.0
    %1235 = vmatprep.subr.mxu0 0.0
    %1236 = vmatpush2.msra.mxu0 0.0
    %1237 = vmatprep.subr.mxu0 0.0
    %1238 = vmatpush2.msra.mxu0 0.0
    %1239 = vmatprep.subr.mxu0 0.0
    %1240 = vmatpush2.msra.mxu0 0.0
    %1241 = vmatprep.subr.mxu0 0.0
    %1242 = vmatpush2.msra.mxu0 0.0
    %1243 = vmatprep.subr.mxu0 0.0
    %1244 = vmatpush2.msra.mxu0 0.0
    %1245 = vmatprep.subr.mxu0 0.0
    %1246 = vmatpush2.msra.mxu0 0.0
    %1247 = vmatprep.subr.mxu0 0.0
    %1248 = vmatpush2.msra.mxu0 0.0
    %1249 = vmatprep.subr.mxu0 0.0
    %1250 = vmatpush2.msra.mxu0 0.0
    %1251 = vmatprep.subr.mxu0 0.0
    %1252 = vmatpush2.msra.mxu0 0.0
    %1253 = vmatprep.subr.mxu0 0.0
    %1254 = vmatpush2.msra.mxu0 0.0
    %1255 = vmatprep.mubr.f32.mxu0 0.0
    %1256 = vmatmul.mubr.f32.gmra.mxu0 %v1189
    %v1257 = vpop.f32.mrf.mxu0
    %v1258 = vadd.f32 %v1185, %v1257
    %v1259 = vpop.f32.mrf.mxu0
    %1260 = vdwg.mxu0
    %1262 = vrot.lane.b32.xlu0 %v775, 96
    %v1263 = vpop.permute.xlu0 %1262
    %v1264 = vsel %vm785, %v775, 0
    %v1266 = vsel %vm785, %v1263, 0
    %1268 = vmatprep.subr.mxu0 0.0
    %1269 = vmatpush1.xpose.msra.mxu0 0.0
    %1270 = vmatprep.subr.mxu0 0.0
    %1271 = vmatpush1.xpose.msra.mxu0 0.0
    %1272 = vmatprep.subr.mxu0 0.0
    %1273 = vmatpush1.xpose.msra.mxu0 0.0
    %1274 = vmatprep.subr.mxu0 0.0
    %1275 = vmatpush1.xpose.msra.mxu0 0.0
    %1276 = vmatprep.subr.mxu0 0.0
    %1277 = vmatpush1.xpose.msra.mxu0 0.0
    %1278 = vmatprep.subr.mxu0 0.0
    %1279 = vmatpush1.xpose.msra.mxu0 0.0
    %1280 = vmatprep.subr.mxu0 0.0
    %1281 = vmatpush1.xpose.msra.mxu0 0.0
    %1282 = vmatprep.subr.mxu0 0.0
    %1283 = vmatpush1.xpose.msra.mxu0 0.0
    %1284 = vmatprep.subr.mxu0 0.0
    %1285 = vmatpush1.xpose.msra.mxu0 0.0
    %1286 = vmatprep.subr.mxu0 0.0
    %1287 = vmatpush1.xpose.msra.mxu0 0.0
    %1288 = vmatprep.subr.mxu0 0.0
    %1289 = vmatpush1.xpose.msra.mxu0 0.0
    %1290 = vmatprep.subr.mxu0 0.0
    %1291 = vmatpush1.xpose.msra.mxu0 0.0
    %1292 = vmatprep.subr.mxu0 0.0
    %1293 = vmatpush1.xpose.msra.mxu0 0.0
    %1294 = vmatprep.subr.mxu0 0.0
    %1295 = vmatpush1.xpose.msra.mxu0 0.0
    %1296 = vmatprep.subr.mxu0 0.0
    %1297 = vmatpush1.xpose.msra.mxu0 0.0
    %1298 = vmatprep.subr.mxu0 0.0
    %1299 = vmatpush1.xpose.msra.mxu0 %v1266
    %1300 = vmatprep.subr.mxu0 0.0
    %1301 = vmatpush2.xpose.msra.mxu0 0.0
    %1302 = vmatprep.subr.mxu0 0.0
    %1303 = vmatpush2.xpose.msra.mxu0 0.0
    %1304 = vmatprep.subr.mxu0 0.0
    %1305 = vmatpush2.xpose.msra.mxu0 0.0
    %1306 = vmatprep.subr.mxu0 0.0
    %1307 = vmatpush2.xpose.msra.mxu0 0.0
    %1308 = vmatprep.subr.mxu0 0.0
    %1309 = vmatpush2.xpose.msra.mxu0 0.0
    %1310 = vmatprep.subr.mxu0 0.0
    %1311 = vmatpush2.xpose.msra.mxu0 0.0
    %1312 = vmatprep.subr.mxu0 0.0
    %1313 = vmatpush2.xpose.msra.mxu0 0.0
    %1314 = vmatprep.subr.mxu0 0.0
    %1315 = vmatpush2.xpose.msra.mxu0 0.0
    %1316 = vmatprep.subr.mxu0 0.0
    %1317 = vmatpush2.xpose.msra.mxu0 0.0
    %1318 = vmatprep.subr.mxu0 0.0
    %1319 = vmatpush2.xpose.msra.mxu0 0.0
    %1320 = vmatprep.subr.mxu0 0.0
    %1321 = vmatpush2.xpose.msra.mxu0 0.0
    %1322 = vmatprep.subr.mxu0 0.0
    %1323 = vmatpush2.xpose.msra.mxu0 0.0
    %1324 = vmatprep.subr.mxu0 0.0
    %1325 = vmatpush2.xpose.msra.mxu0 0.0
    %1326 = vmatprep.subr.mxu0 0.0
    %1327 = vmatpush2.xpose.msra.mxu0 0.0
    %1328 = vmatprep.subr.mxu0 0.0
    %1329 = vmatpush2.xpose.msra.mxu0 0.0
    %1330 = vmatprep.subr.mxu0 0.0
    %1331 = vmatpush2.xpose.msra.mxu0 0.0
    %1332 = vmatprep.mubr.f32.mxu0 0.0
    %1333 = vmatmul.mubr.f32.gmra.mxu0 %v1264
    %v1334 = vpop.f32.mrf.mxu0
    %v1335 = vadd.f32 0.0, %v1334
    %v1336 = vpop.f32.mrf.mxu0
    %1337 = vdwg.mxu0
    %v1338 = vmul.f32 %v1335, 0.25
    %v1339 = vsel %vm861, %v1338, -inf
    %1340 = vmax.xlane.f32.xlu0 %v1339
    %v1341 = vpop.xlane.xlu0 %1340
    %v1342 = vsub.f32 %v1338, %v1341
    %v1343 = vmul.f32 %v1342, 1.442695
    %v1344 = vpow.pop %v1343
    %v1345 = vsel %vm861, %v1344, 0.0
    %1346 = vadd.xlane.f32.xlu0 %v1345
    %v1347 = vpop.xlane.xlu0 %1346
    %v1348 = vrcp.pop %v1347
    %v1349 = vmul.f32 %v1344, %v1348
    %1350 = vrot.lane.b32.xlu0 %v775, 64
    %v1351 = vpop.permute.xlu0 %1350
    %v1354 = vsel %vm861, %v1349, 0
    %1356 = vmatprep.subr.mxu0 0.0
    %1357 = vmatpush1.msra.mxu0 0.0
    %1358 = vmatprep.subr.mxu0 0.0
    %1359 = vmatpush1.msra.mxu0 0.0
    %1360 = vmatprep.subr.mxu0 0.0
    %1361 = vmatpush1.msra.mxu0 0.0
    %1362 = vmatprep.subr.mxu0 0.0
    %1363 = vmatpush1.msra.mxu0 0.0
    %1364 = vmatprep.subr.mxu0 0.0
    %1365 = vmatpush1.msra.mxu0 0.0
    %1366 = vmatprep.subr.mxu0 0.0
    %1367 = vmatpush1.msra.mxu0 0.0
    %1368 = vmatprep.subr.mxu0 0.0
    %1369 = vmatpush1.msra.mxu0 0.0
    %1370 = vmatprep.subr.mxu0 0.0
    %1371 = vmatpush1.msra.mxu0 0.0
    %1372 = vmatprep.subr.mxu0 0.0
    %1373 = vmatpush1.msra.mxu0 0.0
    %1374 = vmatprep.subr.mxu0 0.0
    %1375 = vmatpush1.msra.mxu0 0.0
    %1376 = vmatprep.subr.mxu0 0.0
    %1377 = vmatpush1.msra.mxu0 0.0
    %1378 = vmatprep.subr.mxu0 0.0
    %1379 = vmatpush1.msra.mxu0 0.0
    %1380 = vmatprep.subr.mxu0 0.0
    %1381 = vmatpush1.msra.mxu0 0.0
    %1382 = vmatprep.subr.mxu0 0.0
    %1383 = vmatpush1.msra.mxu0 0.0
    %1384 = vmatprep.subr.mxu0 0.0
    %1385 = vmatpush1.msra.mxu0 0.0
    %1386 = vmatprep.subr.mxu0 0.0
    %1387 = vmatpush1.msra.mxu0 %v1351
    %1388 = vmatprep.subr.mxu0 0.0
    %1389 = vmatpush2.msra.mxu0 0.0
    %1390 = vmatprep.subr.mxu0 0.0
    %1391 = vmatpush2.msra.mxu0 0.0
    %1392 = vmatprep.subr.mxu0 0.0
    %1393 = vmatpush2.msra.mxu0 0.0
    %1394 = vmatprep.subr.mxu0 0.0
    %1395 = vmatpush2.msra.mxu0 0.0
    %1396 = vmatprep.subr.mxu0 0.0
    %1397 = vmatpush2.msra.mxu0 0.0
    %1398 = vmatprep.subr.mxu0 0.0
    %1399 = vmatpush2.msra.mxu0 0.0
    %1400 = vmatprep.subr.mxu0 0.0
    %1401 = vmatpush2.msra.mxu0 0.0
    %1402 = vmatprep.subr.mxu0 0.0
    %1403 = vmatpush2.msra.mxu0 0.0
    %1404 = vmatprep.subr.mxu0 0.0
    %1405 = vmatpush2.msra.mxu0 0.0
    %1406 = vmatprep.subr.mxu0 0.0
    %1407 = vmatpush2.msra.mxu0 0.0
    %1408 = vmatprep.subr.mxu0 0.0
    %1409 = vmatpush2.msra.mxu0 0.0
    %1410 = vmatprep.subr.mxu0 0.0
    %1411 = vmatpush2.msra.mxu0 0.0
    %1412 = vmatprep.subr.mxu0 0.0
    %1413 = vmatpush2.msra.mxu0 0.0
    %1414 = vmatprep.subr.mxu0 0.0
    %1415 = vmatpush2.msra.mxu0 0.0
    %1416 = vmatprep.subr.mxu0 0.0
    %1417 = vmatpush2.msra.mxu0 0.0
    %1418 = vmatprep.subr.mxu0 0.0
    %1419 = vmatpush2.msra.mxu0 0.0
    %1420 = vmatprep.mubr.f32.mxu0 0.0
    %1421 = vmatmul.mubr.f32.gmra.mxu0 %v1354
    %v1422 = vpop.f32.mrf.mxu0
    %v1423 = vadd.f32 0.0, %v1422
    %v1424 = vpop.f32.mrf.mxu0
    %1425 = vdwg.mxu0
    %1426 = vrot.lane.b32.xlu0 %v775, 112
    %v1427 = vpop.permute.xlu0 %1426
    %1428 = vrot.lane.b32.xlu0 %v775, 80
    %v1429 = vpop.permute.xlu0 %1428
    %v1430 = vsel %vm785, %v1427, 0
    %v1432 = vsel %vm785, %v1429, 0
    %1434 = vmatprep.subr.mxu0 0.0
    %1435 = vmatpush1.xpose.msra.mxu0 0.0
    %1436 = vmatprep.subr.mxu0 0.0
    %1437 = vmatpush1.xpose.msra.mxu0 0.0
    %1438 = vmatprep.subr.mxu0 0.0
    %1439 = vmatpush1.xpose.msra.mxu0 0.0
    %1440 = vmatprep.subr.mxu0 0.0
    %1441 = vmatpush1.xpose.msra.mxu0 0.0
    %1442 = vmatprep.subr.mxu0 0.0
    %1443 = vmatpush1.xpose.msra.mxu0 0.0
    %1444 = vmatprep.subr.mxu0 0.0
    %1445 = vmatpush1.xpose.msra.mxu0 0.0
    %1446 = vmatprep.subr.mxu0 0.0
    %1447 = vmatpush1.xpose.msra.mxu0 0.0
    %1448 = vmatprep.subr.mxu0 0.0
    %1449 = vmatpush1.xpose.msra.mxu0 0.0
    %1450 = vmatprep.subr.mxu0 0.0
    %1451 = vmatpush1.xpose.msra.mxu0 0.0
    %1452 = vmatprep.subr.mxu0 0.0
    %1453 = vmatpush1.xpose.msra.mxu0 0.0
    %1454 = vmatprep.subr.mxu0 0.0
    %1455 = vmatpush1.xpose.msra.mxu0 0.0
    %1456 = vmatprep.subr.mxu0 0.0
    %1457 = vmatpush1.xpose.msra.mxu0 0.0
    %1458 = vmatprep.subr.mxu0 0.0
    %1459 = vmatpush1.xpose.msra.mxu0 0.0
    %1460 = vmatprep.subr.mxu0 0.0
    %1461 = vmatpush1.xpose.msra.mxu0 0.0
    %1462 = vmatprep.subr.mxu0 0.0
    %1463 = vmatpush1.xpose.msra.mxu0 0.0
    %1464 = vmatprep.subr.mxu0 0.0
    %1465 = vmatpush1.xpose.msra.mxu0 %v1432
    %1466 = vmatprep.subr.mxu0 0.0
    %1467 = vmatpush2.xpose.msra.mxu0 0.0
    %1468 = vmatprep.subr.mxu0 0.0
    %1469 = vmatpush2.xpose.msra.mxu0 0.0
    %1470 = vmatprep.subr.mxu0 0.0
    %1471 = vmatpush2.xpose.msra.mxu0 0.0
    %1472 = vmatprep.subr.mxu0 0.0
    %1473 = vmatpush2.xpose.msra.mxu0 0.0
    %1474 = vmatprep.subr.mxu0 0.0
    %1475 = vmatpush2.xpose.msra.mxu0 0.0
    %1476 = vmatprep.subr.mxu0 0.0
    %1477 = vmatpush2.xpose.msra.mxu0 0.0
    %1478 = vmatprep.subr.mxu0 0.0
    %1479 = vmatpush2.xpose.msra.mxu0 0.0
    %1480 = vmatprep.subr.mxu0 0.0
    %1481 = vmatpush2.xpose.msra.mxu0 0.0
    %1482 = vmatprep.subr.mxu0 0.0
    %1483 = vmatpush2.xpose.msra.mxu0 0.0
    %1484 = vmatprep.subr.mxu0 0.0
    %1485 = vmatpush2.xpose.msra.mxu0 0.0
    %1486 = vmatprep.subr.mxu0 0.0
    %1487 = vmatpush2.xpose.msra.mxu0 0.0
    %1488 = vmatprep.subr.mxu0 0.0
    %1489 = vmatpush2.xpose.msra.mxu0 0.0
    %1490 = vmatprep.subr.mxu0 0.0
    %1491 = vmatpush2.xpose.msra.mxu0 0.0
    %1492 = vmatprep.subr.mxu0 0.0
    %1493 = vmatpush2.xpose.msra.mxu0 0.0
    %1494 = vmatprep.subr.mxu0 0.0
    %1495 = vmatpush2.xpose.msra.mxu0 0.0
    %1496 = vmatprep.subr.mxu0 0.0
    %1497 = vmatpush2.xpose.msra.mxu0 0.0
    %1498 = vmatprep.mubr.f32.mxu0 0.0
    %1499 = vmatmul.mubr.f32.gmra.mxu0 %v1430
    %v1500 = vpop.f32.mrf.mxu0
    %v1501 = vadd.f32 0.0, %v1500
    %v1502 = vpop.f32.mrf.mxu0
    %1503 = vdwg.mxu0
    %v1504 = vmul.f32 %v1501, 0.25
    %v1505 = vsel %vm861, %v1504, -inf
    %1506 = vmax.xlane.f32.xlu0 %v1505
    %v1507 = vpop.xlane.xlu0 %1506
    %v1508 = vsub.f32 %v1504, %v1507
    %v1509 = vmul.f32 %v1508, 1.442695
    %v1510 = vpow.pop %v1509
    %v1511 = vsel %vm861, %v1510, 0.0
    %1512 = vadd.xlane.f32.xlu0 %v1511
    %v1513 = vpop.xlane.xlu0 %1512
    %v1514 = vrcp.pop %v1513
    %v1515 = vmul.f32 %v1510, %v1514
    %1516 = vrot.lane.b32.xlu0 %v775, 48
    %v1517 = vpop.permute.xlu0 %1516
    %v1520 = vsel %vm861, %v1515, 0
    %1522 = vmatprep.subr.mxu0 0.0
    %1523 = vmatpush1.msra.mxu0 0.0
    %1524 = vmatprep.subr.mxu0 0.0
    %1525 = vmatpush1.msra.mxu0 0.0
    %1526 = vmatprep.subr.mxu0 0.0
    %1527 = vmatpush1.msra.mxu0 0.0
    %1528 = vmatprep.subr.mxu0 0.0
    %1529 = vmatpush1.msra.mxu0 0.0
    %1530 = vmatprep.subr.mxu0 0.0
    %1531 = vmatpush1.msra.mxu0 0.0
    %1532 = vmatprep.subr.mxu0 0.0
    %1533 = vmatpush1.msra.mxu0 0.0
    %1534 = vmatprep.subr.mxu0 0.0
    %1535 = vmatpush1.msra.mxu0 0.0
    %1536 = vmatprep.subr.mxu0 0.0
    %1537 = vmatpush1.msra.mxu0 0.0
    %1538 = vmatprep.subr.mxu0 0.0
    %1539 = vmatpush1.msra.mxu0 0.0
    %1540 = vmatprep.subr.mxu0 0.0
    %1541 = vmatpush1.msra.mxu0 0.0
    %1542 = vmatprep.subr.mxu0 0.0
    %1543 = vmatpush1.msra.mxu0 0.0
    %1544 = vmatprep.subr.mxu0 0.0
    %1545 = vmatpush1.msra.mxu0 0.0
    %1546 = vmatprep.subr.mxu0 0.0
    %1547 = vmatpush1.msra.mxu0 0.0
    %1548 = vmatprep.subr.mxu0 0.0
    %1549 = vmatpush1.msra.mxu0 0.0
    %1550 = vmatprep.subr.mxu0 0.0
    %1551 = vmatpush1.msra.mxu0 0.0
    %1552 = vmatprep.subr.mxu0 0.0
    %1553 = vmatpush1.msra.mxu0 %v1517
    %1554 = vmatprep.subr.mxu0 0.0
    %1555 = vmatpush2.msra.mxu0 0.0
    %1556 = vmatprep.subr.mxu0 0.0
    %1557 = vmatpush2.msra.mxu0 0.0
    %1558 = vmatprep.subr.mxu0 0.0
    %1559 = vmatpush2.msra.mxu0 0.0
    %1560 = vmatprep.subr.mxu0 0.0
    %1561 = vmatpush2.msra.mxu0 0.0
    %1562 = vmatprep.subr.mxu0 0.0
    %1563 = vmatpush2.msra.mxu0 0.0
    %1564 = vmatprep.subr.mxu0 0.0
    %1565 = vmatpush2.msra.mxu0 0.0
    %1566 = vmatprep.subr.mxu0 0.0
    %1567 = vmatpush2.msra.mxu0 0.0
    %1568 = vmatprep.subr.mxu0 0.0
    %1569 = vmatpush2.msra.mxu0 0.0
    %1570 = vmatprep.subr.mxu0 0.0
    %1571 = vmatpush2.msra.mxu0 0.0
    %1572 = vmatprep.subr.mxu0 0.0
    %1573 = vmatpush2.msra.mxu0 0.0
    %1574 = vmatprep.subr.mxu0 0.0
    %1575 = vmatpush2.msra.mxu0 0.0
    %1576 = vmatprep.subr.mxu0 0.0
    %1577 = vmatpush2.msra.mxu0 0.0
    %1578 = vmatprep.subr.mxu0 0.0
    %1579 = vmatpush2.msra.mxu0 0.0
    %1580 = vmatprep.subr.mxu0 0.0
    %1581 = vmatpush2.msra.mxu0 0.0
    %1582 = vmatprep.subr.mxu0 0.0
    %1583 = vmatpush2.msra.mxu0 0.0
    %1584 = vmatprep.subr.mxu0 0.0
    %1585 = vmatpush2.msra.mxu0 0.0
    %1586 = vmatprep.mubr.f32.mxu0 0.0
    %1587 = vmatmul.mubr.f32.gmra.mxu0 %v1520
    %v1588 = vpop.f32.mrf.mxu0
    %v1589 = vadd.f32 0.0, %v1588
    %v1590 = vpop.f32.mrf.mxu0
    %1591 = vdwg.mxu0
    %v1593 = vsel %vm785, %v1589, 0
    %1595 = vmatprep.subr.mxu0 0.0
    %1596 = vmatpush1.msra.mxu0 0.0
    %1597 = vmatprep.subr.mxu0 0.0
    %1598 = vmatpush1.msra.mxu0 0.0
    %1599 = vmatprep.subr.mxu0 0.0
    %1600 = vmatpush1.msra.mxu0 0.0
    %1601 = vmatprep.subr.mxu0 0.0
    %1602 = vmatpush1.msra.mxu0 0.0
    %1603 = vmatprep.subr.mxu0 0.0
    %1604 = vmatpush1.msra.mxu0 0.0
    %1605 = vmatprep.subr.mxu0 0.0
    %1606 = vmatpush1.msra.mxu0 0.0
    %1607 = vmatprep.subr.mxu0 0.0
    %1608 = vmatpush1.msra.mxu0 0.0
    %1609 = vmatprep.subr.mxu0 0.0
    %1610 = vmatpush1.msra.mxu0 0.0
    %1611 = vmatprep.subr.mxu0 0.0
    %1612 = vmatpush1.msra.mxu0 0.0
    %1613 = vmatprep.subr.mxu0 0.0
    %1614 = vmatpush1.msra.mxu0 0.0
    %1615 = vmatprep.subr.mxu0 0.0
    %1616 = vmatpush1.msra.mxu0 0.0
    %1617 = vmatprep.subr.mxu0 0.0
    %1618 = vmatpush1.msra.mxu0 0.0
    %1619 = vmatprep.subr.mxu0 0.0
    %1620 = vmatpush1.msra.mxu0 0.0
    %1621 = vmatprep.subr.mxu0 0.0
    %1622 = vmatpush1.msra.mxu0 0.0
    %1623 = vmatprep.subr.mxu0 0.0
    %1624 = vmatpush1.msra.mxu0 %v781
    %1625 = vmatprep.subr.mxu0 0.0
    %1626 = vmatpush1.msra.mxu0 %v780
    %1627 = vmatprep.subr.mxu0 0.0
    %1628 = vmatpush2.msra.mxu0 0.0
    %1629 = vmatprep.subr.mxu0 0.0
    %1630 = vmatpush2.msra.mxu0 0.0
    %1631 = vmatprep.subr.mxu0 0.0
    %1632 = vmatpush2.msra.mxu0 0.0
    %1633 = vmatprep.subr.mxu0 0.0
    %1634 = vmatpush2.msra.mxu0 0.0
    %1635 = vmatprep.subr.mxu0 0.0
    %1636 = vmatpush2.msra.mxu0 0.0
    %1637 = vmatprep.subr.mxu0 0.0
    %1638 = vmatpush2.msra.mxu0 0.0
    %1639 = vmatprep.subr.mxu0 0.0
    %1640 = vmatpush2.msra.mxu0 0.0
    %1641 = vmatprep.subr.mxu0 0.0
    %1642 = vmatpush2.msra.mxu0 0.0
    %1643 = vmatprep.subr.mxu0 0.0
    %1644 = vmatpush2.msra.mxu0 0.0
    %1645 = vmatprep.subr.mxu0 0.0
    %1646 = vmatpush2.msra.mxu0 0.0
    %1647 = vmatprep.subr.mxu0 0.0
    %1648 = vmatpush2.msra.mxu0 0.0
    %1649 = vmatprep.subr.mxu0 0.0
    %1650 = vmatpush2.msra.mxu0 0.0
    %1651 = vmatprep.subr.mxu0 0.0
    %1652 = vmatpush2.msra.mxu0 0.0
    %1653 = vmatprep.subr.mxu0 0.0
    %1654 = vmatpush2.msra.mxu0 0.0
    %1655 = vmatprep.subr.mxu0 0.0
    %1656 = vmatpush2.msra.mxu0 0.0
    %1657 = vmatprep.subr.mxu0 0.0
    %1658 = vmatpush2.msra.mxu0 0.0
    %1659 = vmatprep.mubr.f32.mxu0 0.0
    %1660 = vmatmul.mubr.f32.gmra.mxu0 %v1593
    %v1661 = vpop.f32.mrf.mxu0
    %v1662 = vadd.f32 0.0, %v1661
    %v1663 = vpop.f32.mrf.mxu0
    %1664 = vdwg.mxu0
    %v1666 = vsel %vm785, %v1423, 0
    %1668 = vmatprep.subr.mxu0 0.0
    %1669 = vmatpush1.msra.mxu0 0.0
    %1670 = vmatprep.subr.mxu0 0.0
    %1671 = vmatpush1.msra.mxu0 0.0
    %1672 = vmatprep.subr.mxu0 0.0
    %1673 = vmatpush1.msra.mxu0 0.0
    %1674 = vmatprep.subr.mxu0 0.0
    %1675 = vmatpush1.msra.mxu0 0.0
    %1676 = vmatprep.subr.mxu0 0.0
    %1677 = vmatpush1.msra.mxu0 0.0
    %1678 = vmatprep.subr.mxu0 0.0
    %1679 = vmatpush1.msra.mxu0 0.0
    %1680 = vmatprep.subr.mxu0 0.0
    %1681 = vmatpush1.msra.mxu0 0.0
    %1682 = vmatprep.subr.mxu0 0.0
    %1683 = vmatpush1.msra.mxu0 0.0
    %1684 = vmatprep.subr.mxu0 0.0
    %1685 = vmatpush1.msra.mxu0 0.0
    %1686 = vmatprep.subr.mxu0 0.0
    %1687 = vmatpush1.msra.mxu0 0.0
    %1688 = vmatprep.subr.mxu0 0.0
    %1689 = vmatpush1.msra.mxu0 0.0
    %1690 = vmatprep.subr.mxu0 0.0
    %1691 = vmatpush1.msra.mxu0 0.0
    %1692 = vmatprep.subr.mxu0 0.0
    %1693 = vmatpush1.msra.mxu0 0.0
    %1694 = vmatprep.subr.mxu0 0.0
    %1695 = vmatpush1.msra.mxu0 0.0
    %1696 = vmatprep.subr.mxu0 0.0
    %1697 = vmatpush1.msra.mxu0 %v779
    %1698 = vmatprep.subr.mxu0 0.0
    %1699 = vmatpush1.msra.mxu0 %v778
    %1700 = vmatprep.subr.mxu0 0.0
    %1701 = vmatpush2.msra.mxu0 0.0
    %1702 = vmatprep.subr.mxu0 0.0
    %1703 = vmatpush2.msra.mxu0 0.0
    %1704 = vmatprep.subr.mxu0 0.0
    %1705 = vmatpush2.msra.mxu0 0.0
    %1706 = vmatprep.subr.mxu0 0.0
    %1707 = vmatpush2.msra.mxu0 0.0
    %1708 = vmatprep.subr.mxu0 0.0
    %1709 = vmatpush2.msra.mxu0 0.0
    %1710 = vmatprep.subr.mxu0 0.0
    %1711 = vmatpush2.msra.mxu0 0.0
    %1712 = vmatprep.subr.mxu0 0.0
    %1713 = vmatpush2.msra.mxu0 0.0
    %1714 = vmatprep.subr.mxu0 0.0
    %1715 = vmatpush2.msra.mxu0 0.0
    %1716 = vmatprep.subr.mxu0 0.0
    %1717 = vmatpush2.msra.mxu0 0.0
    %1718 = vmatprep.subr.mxu0 0.0
    %1719 = vmatpush2.msra.mxu0 0.0
    %1720 = vmatprep.subr.mxu0 0.0
    %1721 = vmatpush2.msra.mxu0 0.0
    %1722 = vmatprep.subr.mxu0 0.0
    %1723 = vmatpush2.msra.mxu0 0.0
    %1724 = vmatprep.subr.mxu0 0.0
    %1725 = vmatpush2.msra.mxu0 0.0
    %1726 = vmatprep.subr.mxu0 0.0
    %1727 = vmatpush2.msra.mxu0 0.0
    %1728 = vmatprep.subr.mxu0 0.0
    %1729 = vmatpush2.msra.mxu0 0.0
    %1730 = vmatprep.subr.mxu0 0.0
    %1731 = vmatpush2.msra.mxu0 0.0
    %1732 = vmatprep.mubr.f32.mxu0 0.0
    %1733 = vmatmul.mubr.f32.gmra.mxu0 %v1666
    %v1734 = vpop.f32.mrf.mxu0
    %v1735 = vadd.f32 %v1662, %v1734
    %v1736 = vpop.f32.mrf.mxu0
    %1737 = vdwg.mxu0
    %v1738 = vadd.f32 %v644, %v1258
    %v1739 = vadd.f32 %v649, %v1735
    %v1740 = vld [vmem:[%s12] sm:$0x1]
    %v1742 = vlaneseq
    %v1743 = vshrl.u32 %v1742, 7
    %v1744 = vsub.s32 0, %v1743
    %v1745 = vrot.slane %v1740, %v1744
    %v1747 = vadd.f32 %v1738, %v1745
    %v1748 = vadd.f32 %v1739, %v1745
    %v1749 = vld [vmem:[%s13] sm:$0xff]
    %v1750 = vld [vmem:[%s13 + $0x8] sm:$0xff]
    %v1751 = vld [vmem:[%s13 + $0x10] sm:$0xff]
    %v1752 = vld [vmem:[%s13 + $0x18] sm:$0xff]
    %v1754 = vsel %vm274, %v561, 0
    %1756 = vmatprep.subr.mxu0 0.0
    %1757 = vmatpush1.msra.mxu0 0.0
    %1758 = vmatprep.subr.mxu0 0.0
    %1759 = vmatpush1.msra.mxu0 0.0
    %1760 = vmatprep.subr.mxu0 0.0
    %1761 = vmatpush1.msra.mxu0 0.0
    %1762 = vmatprep.subr.mxu0 0.0
    %1763 = vmatpush1.msra.mxu0 0.0
    %1764 = vmatprep.subr.mxu0 0.0
    %1765 = vmatpush1.msra.mxu0 0.0
    %1766 = vmatprep.subr.mxu0 0.0
    %1767 = vmatpush1.msra.mxu0 0.0
    %1768 = vmatprep.subr.mxu0 0.0
    %1769 = vmatpush1.msra.mxu0 0.0
    %1770 = vmatprep.subr.mxu0 0.0
    %1771 = vmatpush1.msra.mxu0 0.0
    %1772 = vmatprep.subr.mxu0 0.0
    %1773 = vmatpush1.msra.mxu0 0.0
    %1774 = vmatprep.subr.mxu0 0.0
    %1775 = vmatpush1.msra.mxu0 0.0
    %1776 = vmatprep.subr.mxu0 0.0
    %1777 = vmatpush1.msra.mxu0 0.0
    %1778 = vmatprep.subr.mxu0 0.0
    %1779 = vmatpush1.msra.mxu0 0.0
    %1780 = vmatprep.subr.mxu0 0.0
    %1781 = vmatpush1.msra.mxu0 %v1752
    %1782 = vmatprep.subr.mxu0 0.0
    %1783 = vmatpush1.msra.mxu0 %v1751
    %1784 = vmatprep.subr.mxu0 0.0
    %1785 = vmatpush1.msra.mxu0 %v1750
    %1786 = vmatprep.subr.mxu0 0.0
    %1787 = vmatpush1.msra.mxu0 %v1749
    %1788 = vmatprep.subr.mxu0 0.0
    %1789 = vmatpush2.msra.mxu0 0.0
    %1790 = vmatprep.subr.mxu0 0.0
    %1791 = vmatpush2.msra.mxu0 0.0
    %1792 = vmatprep.subr.mxu0 0.0
    %1793 = vmatpush2.msra.mxu0 0.0
    %1794 = vmatprep.subr.mxu0 0.0
    %1795 = vmatpush2.msra.mxu0 0.0
    %1796 = vmatprep.subr.mxu0 0.0
    %1797 = vmatpush2.msra.mxu0 0.0
    %1798 = vmatprep.subr.mxu0 0.0
    %1799 = vmatpush2.msra.mxu0 0.0
    %1800 = vmatprep.subr.mxu0 0.0
    %1801 = vmatpush2.msra.mxu0 0.0
    %1802 = vmatprep.subr.mxu0 0.0
    %1803 = vmatpush2.msra.mxu0 0.0
    %1804 = vmatprep.subr.mxu0 0.0
    %1805 = vmatpush2.msra.mxu0 0.0
    %1806 = vmatprep.subr.mxu0 0.0
    %1807 = vmatpush2.msra.mxu0 0.0
    %1808 = vmatprep.subr.mxu0 0.0
    %1809 = vmatpush2.msra.mxu0 0.0
    %1810 = vmatprep.subr.mxu0 0.0
    %1811 = vmatpush2.msra.mxu0 0.0
    %1812 = vmatprep.subr.mxu0 0.0
    %1813 = vmatpush2.msra.mxu0 0.0
    %1814 = vmatprep.subr.mxu0 0.0
    %1815 = vmatpush2.msra.mxu0 0.0
    %1816 = vmatprep.subr.mxu0 0.0
    %1817 = vmatpush2.msra.mxu0 0.0
    %1818 = vmatprep.subr.mxu0 0.0
    %1819 = vmatpush2.msra.mxu0 0.0
    %1820 = vmatprep.mubr.f32.mxu0 0.0
    %1821 = vmatmul.mubr.f32.gmra.mxu0 %v1754
    %v1822 = vpop.f32.mrf.mxu0
    %v1823 = vadd.f32 0.0, %v1822
    %v1824 = vpop.f32.mrf.mxu0
    %1825 = vdwg.mxu0
    %v1826 = vld [vmem:[%s14] sm:$0xff]
    %v1827 = vld [vmem:[%s14 + $0x8] sm:$0xff]
    %v1828 = vld [vmem:[%s14 + $0x10] sm:$0xff]
    %v1829 = vld [vmem:[%s14 + $0x18] sm:$0xff]
    %v1830 = vld [vmem:[%s15] sm:$0x1]
    %v1832 = vlaneseq
    %v1833 = vshrl.u32 %v1832, 7
    %v1834 = vsub.s32 0, %v1833
    %v1835 = vrot.slane %v1830, %v1834
    %v1838 = vsel %vm274, %v1823, 0
    %1840 = vmatprep.subr.mxu0 0.0
    %1841 = vmatpush1.msra.mxu0 0.0
    %1842 = vmatprep.subr.mxu0 0.0
    %1843 = vmatpush1.msra.mxu0 0.0
    %1844 = vmatprep.subr.mxu0 0.0
    %1845 = vmatpush1.msra.mxu0 0.0
    %1846 = vmatprep.subr.mxu0 0.0
    %1847 = vmatpush1.msra.mxu0 0.0
    %1848 = vmatprep.subr.mxu0 0.0
    %1849 = vmatpush1.msra.mxu0 0.0
    %1850 = vmatprep.subr.mxu0 0.0
    %1851 = vmatpush1.msra.mxu0 0.0
    %1852 = vmatprep.subr.mxu0 0.0
    %1853 = vmatpush1.msra.mxu0 0.0
    %1854 = vmatprep.subr.mxu0 0.0
    %1855 = vmatpush1.msra.mxu0 0.0
    %1856 = vmatprep.subr.mxu0 0.0
    %1857 = vmatpush1.msra.mxu0 0.0
    %1858 = vmatprep.subr.mxu0 0.0
    %1859 = vmatpush1.msra.mxu0 0.0
    %1860 = vmatprep.subr.mxu0 0.0
    %1861 = vmatpush1.msra.mxu0 0.0
    %1862 = vmatprep.subr.mxu0 0.0
    %1863 = vmatpush1.msra.mxu0 0.0
    %1864 = vmatprep.subr.mxu0 0.0
    %1865 = vmatpush1.msra.mxu0 %v1829
    %1866 = vmatprep.subr.mxu0 0.0
    %1867 = vmatpush1.msra.mxu0 %v1828
    %1868 = vmatprep.subr.mxu0 0.0
    %1869 = vmatpush1.msra.mxu0 %v1827
    %1870 = vmatprep.subr.mxu0 0.0
    %1871 = vmatpush1.msra.mxu0 %v1826
    %1872 = vmatprep.subr.mxu0 0.0
    %1873 = vmatpush2.msra.mxu0 0.0
    %1874 = vmatprep.subr.mxu0 0.0
    %1875 = vmatpush2.msra.mxu0 0.0
    %1876 = vmatprep.subr.mxu0 0.0
    %1877 = vmatpush2.msra.mxu0 0.0
    %1878 = vmatprep.subr.mxu0 0.0
    %1879 = vmatpush2.msra.mxu0 0.0
    %1880 = vmatprep.subr.mxu0 0.0
    %1881 = vmatpush2.msra.mxu0 0.0
    %1882 = vmatprep.subr.mxu0 0.0
    %1883 = vmatpush2.msra.mxu0 0.0
    %1884 = vmatprep.subr.mxu0 0.0
    %1885 = vmatpush2.msra.mxu0 0.0
    %1886 = vmatprep.subr.mxu0 0.0
    %1887 = vmatpush2.msra.mxu0 0.0
    %1888 = vmatprep.subr.mxu0 0.0
    %1889 = vmatpush2.msra.mxu0 0.0
    %1890 = vmatprep.subr.mxu0 0.0
    %1891 = vmatpush2.msra.mxu0 0.0
    %1892 = vmatprep.subr.mxu0 0.0
    %1893 = vmatpush2.msra.mxu0 0.0
    %1894 = vmatprep.subr.mxu0 0.0
    %1895 = vmatpush2.msra.mxu0 0.0
    %1896 = vmatprep.subr.mxu0 0.0
    %1897 = vmatpush2.msra.mxu0 0.0
    %1898 = vmatprep.subr.mxu0 0.0
    %1899 = vmatpush2.msra.mxu0 0.0
    %1900 = vmatprep.subr.mxu0 0.0
    %1901 = vmatpush2.msra.mxu0 0.0
    %1902 = vmatprep.subr.mxu0 0.0
    %1903 = vmatpush2.msra.mxu0 0.0
    %1904 = vmatprep.mubr.f32.mxu0 0.0
    %1905 = vmatmul.mubr.f32.gmra.mxu0 %v1838
    %v1906 = vpop.f32.mrf.mxu0
    %v1907 = vadd.f32 %v1835, %v1906
    %v1908 = vpop.f32.mrf.mxu0
    %1909 = vdwg.mxu0
    %v1910 = vlaneseq
    %v1911 = vshrl.u32 %v1910, 7
    %v1912 = vsub.s32 0, %v1911
    %v1913 = vrot.slane %v1907, %v1912
    %v1914 = vlaneseq
    %v1915 = vshrl.u32 %v1914, 7
    %v1916 = vsub.s32 1, %v1915
    %v1917 = vrot.slane %v1907, %v1916
    %v1918 = vadd.f32 %v1747, %v1913
    %v1919 = vadd.f32 %v1748, %v1917
    %v1920 = vsel %vm274, %v1918, 0.0
    %1921 = vadd.xlane.f32.xlu0 %v1920
    %v1922 = vpop.xlane.xlu0 %1921
    %v1923 = vsel %vm274, %v1919, 0.0
    %1924 = vadd.xlane.f32.xlu0 %v1923
    %v1925 = vpop.xlane.xlu0 %1924
    %v1926 = vmul.f32 %v1922, %v658
    %v1927 = vmul.f32 %v1925, %v658
    %v1928 = vsub.f32 %v1918, %v1926
    %v1929 = vsub.f32 %v1919, %v1927
    %v1930 = vmul.f32 %v1928, %v1928
    %v1931 = vmul.f32 %v1929, %v1929
    %v1932 = vsel %vm274, %v1930, 0.0
    %1933 = vadd.xlane.f32.xlu0 %v1932
    %v1934 = vpop.xlane.xlu0 %1933
    %v1935 = vsel %vm274, %v1931, 0.0
    %1936 = vadd.xlane.f32.xlu0 %v1935
    %v1937 = vpop.xlane.xlu0 %1936
    %v1938 = vmul.f32 %v1934, %v658
    %v1939 = vmul.f32 %v1937, %v658
    %v1940 = vadd.f32 %v1938, 1e-05
    %v1941 = vadd.f32 %v1939, 1e-05
    %v1942 = vrsqrt.pop %v1940
    %v1943 = vrsqrt.pop %v1941
    %v1944 = vmul.f32 %v1928, %v1942
    %v1945 = vmul.f32 %v1929, %v1943
    %v1946 = vadd.f32 %v542, 1.0
    %v1947 = vadd.f32 %v554, 1.0
    %v1948 = vmul.f32 %v1944, %v1946
    %v1949 = vmul.f32 %v1945, %v1947
    %1952 = vrot.lane.b32.xlu0 %v542, 96
    %v1953 = vpop.permute.xlu0 %1952
    %1954 = vrot.lane.b32.xlu0 %v554, 96
    %v1955 = vpop.permute.xlu0 %1954
    %v1958 = vadd.f32 %v1948, %v1953
    %v1959 = vadd.f32 %v1949, %v1955
    %v1960 = vld [vmem:[%s16] sm:$0xff]
    %v1961 = vld [vmem:[%s16 + $0x8] sm:$0xff]
    %v1962 = vld [vmem:[%s16 + $0x10] sm:$0xff]
    %v1963 = vld [vmem:[%s16 + $0x18] sm:$0xff]
    %v1964 = vld [vmem:[%s16 + $0x20] sm:$0xff]
    %v1965 = vld [vmem:[%s16 + $0x28] sm:$0xff]
    %v1966 = vld [vmem:[%s16 + $0x30] sm:$0xff]
    %v1967 = vld [vmem:[%s16 + $0x38] sm:$0xff]
    %v1968 = vld [vmem:[%s17] sm:$0x3]
    %v1970 = vlaneseq
    %v1971 = vshrl.u32 %v1970, 7
    %v1972 = vsub.s32 0, %v1971
    %v1973 = vrot.slane %v1968, %v1972
    %v1974 = vlaneseq
    %v1975 = vshrl.u32 %v1974, 7
    %v1976 = vsub.s32 1, %v1975
    %v1977 = vrot.slane %v1968, %v1976
    %v1981 = vsel %vm274, %v1958, 0
    %v1984 = vsel %vm274, %v1959, 0
    %1986 = vmatprep.subr.mxu0 0.0
    %1987 = vmatpush1.msra.mxu0 0.0
    %1988 = vmatprep.subr.mxu0 0.0
    %1989 = vmatpush1.msra.mxu0 0.0
    %1990 = vmatprep.subr.mxu0 0.0
    %1991 = vmatpush1.msra.mxu0 0.0
    %1992 = vmatprep.subr.mxu0 0.0
    %1993 = vmatpush1.msra.mxu0 0.0
    %1994 = vmatprep.subr.mxu0 0.0
    %1995 = vmatpush1.msra.mxu0 0.0
    %1996 = vmatprep.subr.mxu0 0.0
    %1997 = vmatpush1.msra.mxu0 0.0
    %1998 = vmatprep.subr.mxu0 0.0
    %1999 = vmatpush1.msra.mxu0 0.0
    %2000 = vmatprep.subr.mxu0 0.0
    %2001 = vmatpush1.msra.mxu0 0.0
    %2002 = vmatprep.subr.mxu0 0.0
    %2003 = vmatpush1.msra.mxu0 0.0
    %2004 = vmatprep.subr.mxu0 0.0
    %2005 = vmatpush1.msra.mxu0 0.0
    %2006 = vmatprep.subr.mxu0 0.0
    %2007 = vmatpush1.msra.mxu0 0.0
    %2008 = vmatprep.subr.mxu0 0.0
    %2009 = vmatpush1.msra.mxu0 0.0
    %2010 = vmatprep.subr.mxu0 %v1967
    %2011 = vmatpush1.msra.mxu0 %v1966
    %2012 = vmatprep.subr.mxu0 %v1965
    %2013 = vmatpush1.msra.mxu0 %v1964
    %2014 = vmatprep.subr.mxu0 %v1963
    %2015 = vmatpush1.msra.mxu0 %v1962
    %2016 = vmatprep.subr.mxu0 %v1961
    %2017 = vmatpush1.msra.mxu0 %v1960
    %2018 = vmatprep.subr.mxu0 0.0
    %2019 = vmatpush2.msra.mxu0 0.0
    %2020 = vmatprep.subr.mxu0 0.0
    %2021 = vmatpush2.msra.mxu0 0.0
    %2022 = vmatprep.subr.mxu0 0.0
    %2023 = vmatpush2.msra.mxu0 0.0
    %2024 = vmatprep.subr.mxu0 0.0
    %2025 = vmatpush2.msra.mxu0 0.0
    %2026 = vmatprep.subr.mxu0 0.0
    %2027 = vmatpush2.msra.mxu0 0.0
    %2028 = vmatprep.subr.mxu0 0.0
    %2029 = vmatpush2.msra.mxu0 0.0
    %2030 = vmatprep.subr.mxu0 0.0
    %2031 = vmatpush2.msra.mxu0 0.0
    %2032 = vmatprep.subr.mxu0 0.0
    %2033 = vmatpush2.msra.mxu0 0.0
    %2034 = vmatprep.subr.mxu0 0.0
    %2035 = vmatpush2.msra.mxu0 0.0
    %2036 = vmatprep.subr.mxu0 0.0
    %2037 = vmatpush2.msra.mxu0 0.0
    %2038 = vmatprep.subr.mxu0 0.0
    %2039 = vmatpush2.msra.mxu0 0.0
    %2040 = vmatprep.subr.mxu0 0.0
    %2041 = vmatpush2.msra.mxu0 0.0
    %2042 = vmatprep.subr.mxu0 0.0
    %2043 = vmatpush2.msra.mxu0 0.0
    %2044 = vmatprep.subr.mxu0 0.0
    %2045 = vmatpush2.msra.mxu0 0.0
    %2046 = vmatprep.subr.mxu0 0.0
    %2047 = vmatpush2.msra.mxu0 0.0
    %2048 = vmatprep.subr.mxu0 0.0
    %2049 = vmatpush2.msra.mxu0 0.0
    %2050 = vmatprep.mubr.f32.mxu0 0.0
    %2051 = vmatmul.mubr.f32.gmra.mxu0 %v1981
    %v2052 = vpop.f32.mrf.mxu0
    %v2053 = vadd.f32 %v1973, %v2052
    %v2054 = vpop.f32.mrf.mxu0
    %v2055 = vadd.f32 %v1977, %v2054
    %2056 = vmatprep.mubr.f32.mxu0 0.0
    %2057 = vmatmul.mubr.f32.gmra.mxu0 %v1984
    %v2058 = vpop.f32.mrf.mxu0
    %v2059 = vadd.f32 %v1973, %v2058
    %v2060 = vpop.f32.mrf.mxu0
    %v2061 = vadd.f32 %v1977, %v2060
    %2062 = vdwg.mxu0
    %v2063 = vmul.f32 %v2055, %v2055
    %v2064 = vmul.f32 %v2061, %v2061
    %v2065 = vmul.f32 %v2055, %v2063
    %v2066 = vmul.f32 %v2061, %v2064
    %v2067 = vmul.f32 %v2065, 0.044715
    %v2068 = vmul.f32 %v2066, 0.044715
    %v2069 = vadd.f32 %v2055, %v2067
    %v2070 = vadd.f32 %v2061, %v2068
    %v2071 = vmul.f32 %v2069, 0.7978846
    %v2072 = vmul.f32 %v2070, 0.7978846
    %v2073 = vtanh.pop %v2071
    %v2074 = vtanh.pop %v2072
    %v2075 = vadd.f32 %v2073, 1.0
    %v2076 = vadd.f32 %v2074, 1.0
    %v2077 = vmul.f32 %v2075, 0.5
    %v2078 = vmul.f32 %v2076, 0.5
    %v2079 = vmul.f32 %v2055, %v2077
    %v2080 = vmul.f32 %v2061, %v2078
    %v2081 = vmul.f32 %v2053, %v2079
    %v2082 = vmul.f32 %v2059, %v2080
    %v2083 = vld [vmem:[%s18] sm:$0xff]
    %v2084 = vld [vmem:[%s18 + $0x8] sm:$0xff]
    %v2085 = vld [vmem:[%s18 + $0x10] sm:$0xff]
    %v2086 = vld [vmem:[%s18 + $0x18] sm:$0xff]
    %v2087 = vld [vmem:[%s18 + $0x20] sm:$0xff]
    %v2088 = vld [vmem:[%s18 + $0x28] sm:$0xff]
    %v2089 = vld [vmem:[%s18 + $0x30] sm:$0xff]
    %v2090 = vld [vmem:[%s18 + $0x38] sm:$0xff]
    %v2091 = vld [vmem:[%s18 + $0x40] sm:$0xff]
    %v2092 = vld [vmem:[%s18 + $0x48] sm:$0xff]
    %v2093 = vld [vmem:[%s18 + $0x50] sm:$0xff]
    %v2094 = vld [vmem:[%s18 + $0x58] sm:$0xff]
    %v2095 = vld [vmem:[%s18 + $0x60] sm:$0xff]
    %v2096 = vld [vmem:[%s18 + $0x68] sm:$0xff]
    %v2097 = vld [vmem:[%s18 + $0x70] sm:$0xff]
    %v2098 = vld [vmem:[%s18 + $0x78] sm:$0xff]
    %v2099 = vld [vmem:[%s19] sm:$0x1]
    %v2101 = vlaneseq
    %v2102 = vshrl.u32 %v2101, 7
    %v2103 = vsub.s32 0, %v2102
    %v2104 = vrot.slane %v2099, %v2103
    %2106 = vmatprep.subr.mxu0 0.0
    %2107 = vmatpush1.msra.mxu0 %v2098
    %2108 = vmatprep.subr.mxu0 0.0
    %2109 = vmatpush1.msra.mxu0 %v2097
    %2110 = vmatprep.subr.mxu0 0.0
    %2111 = vmatpush1.msra.mxu0 %v2096
    %2112 = vmatprep.subr.mxu0 0.0
    %2113 = vmatpush1.msra.mxu0 %v2095
    %2114 = vmatprep.subr.mxu0 0.0
    %2115 = vmatpush1.msra.mxu0 %v2094
    %2116 = vmatprep.subr.mxu0 0.0
    %2117 = vmatpush1.msra.mxu0 %v2093
    %2118 = vmatprep.subr.mxu0 0.0
    %2119 = vmatpush1.msra.mxu0 %v2092
    %2120 = vmatprep.subr.mxu0 0.0
    %2121 = vmatpush1.msra.mxu0 %v2091
    %2122 = vmatprep.subr.mxu0 0.0
    %2123 = vmatpush1.msra.mxu0 %v2090
    %2124 = vmatprep.subr.mxu0 0.0
    %2125 = vmatpush1.msra.mxu0 %v2089
    %2126 = vmatprep.subr.mxu0 0.0
    %2127 = vmatpush1.msra.mxu0 %v2088
    %2128 = vmatprep.subr.mxu0 0.0
    %2129 = vmatpush1.msra.mxu0 %v2087
    %2130 = vmatprep.subr.mxu0 0.0
    %2131 = vmatpush1.msra.mxu0 %v2086
    %2132 = vmatprep.subr.mxu0 0.0
    %2133 = vmatpush1.msra.mxu0 %v2085
    %2134 = vmatprep.subr.mxu0 0.0
    %2135 = vmatpush1.msra.mxu0 %v2084
    %2136 = vmatprep.subr.mxu0 0.0
    %2137 = vmatpush1.msra.mxu0 %v2083
    %2138 = vmatprep.subr.mxu0 0.0
    %2139 = vmatpush2.msra.mxu0 0.0
    %2140 = vmatprep.subr.mxu0 0.0
    %2141 = vmatpush2.msra.mxu0 0.0
    %2142 = vmatprep.subr.mxu0 0.0
    %2143 = vmatpush2.msra.mxu0 0.0
    %2144 = vmatprep.subr.mxu0 0.0
    %2145 = vmatpush2.msra.mxu0 0.0
    %2146 = vmatprep.subr.mxu0 0.0
    %2147 = vmatpush2.msra.mxu0 0.0
    %2148 = vmatprep.subr.mxu0 0.0
    %2149 = vmatpush2.msra.mxu0 0.0
    %2150 = vmatprep.subr.mxu0 0.0
    %2151 = vmatpush2.msra.mxu0 0.0
    %2152 = vmatprep.subr.mxu0 0.0
    %2153 = vmatpush2.msra.mxu0 0.0
    %2154 = vmatprep.subr.mxu0 0.0
    %2155 = vmatpush2.msra.mxu0 0.0
    %2156 = vmatprep.subr.mxu0 0.0
    %2157 = vmatpush2.msra.mxu0 0.0
    %2158 = vmatprep.subr.mxu0 0.0
    %2159 = vmatpush2.msra.mxu0 0.0
    %2160 = vmatprep.subr.mxu0 0.0
    %2161 = vmatpush2.msra.mxu0 0.0
    %2162 = vmatprep.subr.mxu0 0.0
    %2163 = vmatpush2.msra.mxu0 0.0
    %2164 = vmatprep.subr.mxu0 0.0
    %2165 = vmatpush2.msra.mxu0 0.0
    %2166 = vmatprep.subr.mxu0 0.0
    %2167 = vmatpush2.msra.mxu0 0.0
    %2168 = vmatprep.subr.mxu0 0.0
    %2169 = vmatpush2.msra.mxu0 0.0
    %2170 = vmatprep.mubr.f32.mxu0 0.0
    %2171 = vmatmul.mubr.f32.gmra.mxu0 %v2081
    %v2172 = vpop.f32.mrf.mxu0
    %v2173 = vadd.f32 %v2104, %v2172
    %v2174 = vpop.f32.mrf.mxu0
    %2175 = vmatprep.mubr.f32.mxu0 0.0
    %2176 = vmatmul.mubr.f32.gmra.mxu0 %v2082
    %v2177 = vpop.f32.mrf.mxu0
    %v2178 = vadd.f32 %v2104, %v2177
    %v2179 = vpop.f32.mrf.mxu0
    %2180 = vdwg.mxu0
    %v2181 = vadd.f32 %v1918, %v2173
    %v2182 = vadd.f32 %v1919, %v2178
    %v2183 = vsel %vm274, %v2181, 0.0
    %2184 = vadd.xlane.f32.xlu0 %v2183
    %v2185 = vpop.xlane.xlu0 %2184
    %v2186 = vsel %vm274, %v2182, 0.0
    %2187 = vadd.xlane.f32.xlu0 %v2186
    %v2188 = vpop.xlane.xlu0 %2187
    %v2189 = vmul.f32 %v2185, %v658
    %v2190 = vmul.f32 %v2188, %v658
    %v2191 = vsub.f32 %v2181, %v2189
    %v2192 = vsub.f32 %v2182, %v2190
    %v2193 = vmul.f32 %v2191, %v2191
    %v2194 = vmul.f32 %v2192, %v2192
    %v2195 = vsel %vm274, %v2193, 0.0
    %2196 = vadd.xlane.f32.xlu0 %v2195
    %v2197 = vpop.xlane.xlu0 %2196
    %v2198 = vsel %vm274, %v2194, 0.0
    %2199 = vadd.xlane.f32.xlu0 %v2198
    %v2200 = vpop.xlane.xlu0 %2199
    %v2201 = vmul.f32 %v2197, %v658
    %v2202 = vmul.f32 %v2200, %v658
    %v2203 = vadd.f32 %v2201, 1e-05
    %v2204 = vadd.f32 %v2202, 1e-05
    %v2205 = vrsqrt.pop %v2203
    %v2206 = vrsqrt.pop %v2204
    %v2207 = vmul.f32 %v2191, %v2205
    %v2208 = vmul.f32 %v2192, %v2206
    %2211 = vrot.lane.b32.xlu0 %v1946, 64
    %v2212 = vpop.permute.xlu0 %2211
    %2213 = vrot.lane.b32.xlu0 %v1947, 64
    %v2214 = vpop.permute.xlu0 %2213
    %v2217 = vmul.f32 %v2207, %v2212
    %v2218 = vmul.f32 %v2208, %v2214
    %2219 = vrot.lane.b32.xlu0 %v542, 32
    %v2220 = vpop.permute.xlu0 %2219
    %2221 = vrot.lane.b32.xlu0 %v554, 32
    %v2222 = vpop.permute.xlu0 %2221
    %v2225 = vadd.f32 %v2217, %v2220
    %v2226 = vadd.f32 %v2218, %v2222
    %s2227 = scalar_lea.vmem %s10, 32
    %v2228 = vld [vmem:[%s2227] sm:$0xff]
    %v2229 = vld [vmem:[%s2227 + $0x8] sm:$0xff]
    %v2230 = vld [vmem:[%s2227 + $0x10] sm:$0xff]
    %v2231 = vld [vmem:[%s2227 + $0x18] sm:$0xff]
    %v2233 = vsel %vm274, %v2225, 0
    %v2236 = vsel %vm274, %v2226, 0
    %2238 = vmatprep.subr.mxu0 0.0
    %2239 = vmatpush1.msra.mxu0 0.0
    %2240 = vmatprep.subr.mxu0 0.0
    %2241 = vmatpush1.msra.mxu0 0.0
    %2242 = vmatprep.subr.mxu0 0.0
    %2243 = vmatpush1.msra.mxu0 0.0
    %2244 = vmatprep.subr.mxu0 0.0
    %2245 = vmatpush1.msra.mxu0 0.0
    %2246 = vmatprep.subr.mxu0 0.0
    %2247 = vmatpush1.msra.mxu0 0.0
    %2248 = vmatprep.subr.mxu0 0.0
    %2249 = vmatpush1.msra.mxu0 0.0
    %2250 = vmatprep.subr.mxu0 0.0
    %2251 = vmatpush1.msra.mxu0 0.0
    %2252 = vmatprep.subr.mxu0 0.0
    %2253 = vmatpush1.msra.mxu0 0.0
    %2254 = vmatprep.subr.mxu0 0.0
    %2255 = vmatpush1.msra.mxu0 0.0
    %2256 = vmatprep.subr.mxu0 0.0
    %2257 = vmatpush1.msra.mxu0 0.0
    %2258 = vmatprep.subr.mxu0 0.0
    %2259 = vmatpush1.msra.mxu0 0.0
    %2260 = vmatprep.subr.mxu0 0.0
    %2261 = vmatpush1.msra.mxu0 0.0
    %2262 = vmatprep.subr.mxu0 0.0
    %2263 = vmatpush1.msra.mxu0 %v2231
    %2264 = vmatprep.subr.mxu0 0.0
    %2265 = vmatpush1.msra.mxu0 %v2230
    %2266 = vmatprep.subr.mxu0 0.0
    %2267 = vmatpush1.msra.mxu0 %v2229
    %2268 = vmatprep.subr.mxu0 0.0
    %2269 = vmatpush1.msra.mxu0 %v2228
    %2270 = vmatprep.subr.mxu0 0.0
    %2271 = vmatpush2.msra.mxu0 0.0
    %2272 = vmatprep.subr.mxu0 0.0
    %2273 = vmatpush2.msra.mxu0 0.0
    %2274 = vmatprep.subr.mxu0 0.0
    %2275 = vmatpush2.msra.mxu0 0.0
    %2276 = vmatprep.subr.mxu0 0.0
    %2277 = vmatpush2.msra.mxu0 0.0
    %2278 = vmatprep.subr.mxu0 0.0
    %2279 = vmatpush2.msra.mxu0 0.0
    %2280 = vmatprep.subr.mxu0 0.0
    %2281 = vmatpush2.msra.mxu0 0.0
    %2282 = vmatprep.subr.mxu0 0.0
    %2283 = vmatpush2.msra.mxu0 0.0
    %2284 = vmatprep.subr.mxu0 0.0
    %2285 = vmatpush2.msra.mxu0 0.0
    %2286 = vmatprep.subr.mxu0 0.0
    %2287 = vmatpush2.msra.mxu0 0.0
    %2288 = vmatprep.subr.mxu0 0.0
    %2289 = vmatpush2.msra.mxu0 0.0
    %2290 = vmatprep.subr.mxu0 0.0
    %2291 = vmatpush2.msra.mxu0 0.0
    %2292 = vmatprep.subr.mxu0 0.0
    %2293 = vmatpush2.msra.mxu0 0.0
    %2294 = vmatprep.subr.mxu0 0.0
    %2295 = vmatpush2.msra.mxu0 0.0
    %2296 = vmatprep.subr.mxu0 0.0
    %2297 = vmatpush2.msra.mxu0 0.0
    %2298 = vmatprep.subr.mxu0 0.0
    %2299 = vmatpush2.msra.mxu0 0.0
    %2300 = vmatprep.subr.mxu0 0.0
    %2301 = vmatpush2.msra.mxu0 0.0
    %2302 = vmatprep.mubr.f32.mxu0 0.0
    %2303 = vmatmul.mubr.f32.gmra.mxu0 %v2233
    %v2304 = vpop.f32.mrf.mxu0
    %v2305 = vadd.f32 0.0, %v2304
    %v2306 = vpop.f32.mrf.mxu0
    %2307 = vmatprep.mubr.f32.mxu0 0.0
    %2308 = vmatmul.mubr.f32.gmra.mxu0 %v2236
    %v2309 = vpop.f32.mrf.mxu0
    %v2310 = vadd.f32 0.0, %v2309
    %v2311 = vpop.f32.mrf.mxu0
    %2312 = vdwg.mxu0
    %s2313 = scalar_lea.vmem %s11, 32
    %v2314 = vld [vmem:[%s2313] sm:$0xff]
    %v2315 = vld [vmem:[%s2313 + $0x8] sm:$0xff]
    %v2316 = vld [vmem:[%s2313 + $0x10] sm:$0xff]
    %v2317 = vld [vmem:[%s2313 + $0x18] sm:$0xff]
    %2319 = vrot.lane.b32.xlu0 %v2305, 96
    %v2320 = vpop.permute.xlu0 %2319
    %v2321 = vsel %vm785, %v2305, 0
    %v2323 = vsel %vm785, %v2320, 0
    %2325 = vmatprep.subr.mxu0 0.0
    %2326 = vmatpush1.xpose.msra.mxu0 0.0
    %2327 = vmatprep.subr.mxu0 0.0
    %2328 = vmatpush1.xpose.msra.mxu0 0.0
    %2329 = vmatprep.subr.mxu0 0.0
    %2330 = vmatpush1.xpose.msra.mxu0 0.0
    %2331 = vmatprep.subr.mxu0 0.0
    %2332 = vmatpush1.xpose.msra.mxu0 0.0
    %2333 = vmatprep.subr.mxu0 0.0
    %2334 = vmatpush1.xpose.msra.mxu0 0.0
    %2335 = vmatprep.subr.mxu0 0.0
    %2336 = vmatpush1.xpose.msra.mxu0 0.0
    %2337 = vmatprep.subr.mxu0 0.0
    %2338 = vmatpush1.xpose.msra.mxu0 0.0
    %2339 = vmatprep.subr.mxu0 0.0
    %2340 = vmatpush1.xpose.msra.mxu0 0.0
    %2341 = vmatprep.subr.mxu0 0.0
    %2342 = vmatpush1.xpose.msra.mxu0 0.0
    %2343 = vmatprep.subr.mxu0 0.0
    %2344 = vmatpush1.xpose.msra.mxu0 0.0
    %2345 = vmatprep.subr.mxu0 0.0
    %2346 = vmatpush1.xpose.msra.mxu0 0.0
    %2347 = vmatprep.subr.mxu0 0.0
    %2348 = vmatpush1.xpose.msra.mxu0 0.0
    %2349 = vmatprep.subr.mxu0 0.0
    %2350 = vmatpush1.xpose.msra.mxu0 0.0
    %2351 = vmatprep.subr.mxu0 0.0
    %2352 = vmatpush1.xpose.msra.mxu0 0.0
    %2353 = vmatprep.subr.mxu0 0.0
    %2354 = vmatpush1.xpose.msra.mxu0 0.0
    %2355 = vmatprep.subr.mxu0 0.0
    %2356 = vmatpush1.xpose.msra.mxu0 %v2323
    %2357 = vmatprep.subr.mxu0 0.0
    %2358 = vmatpush2.xpose.msra.mxu0 0.0
    %2359 = vmatprep.subr.mxu0 0.0
    %2360 = vmatpush2.xpose.msra.mxu0 0.0
    %2361 = vmatprep.subr.mxu0 0.0
    %2362 = vmatpush2.xpose.msra.mxu0 0.0
    %2363 = vmatprep.subr.mxu0 0.0
    %2364 = vmatpush2.xpose.msra.mxu0 0.0
    %2365 = vmatprep.subr.mxu0 0.0
    %2366 = vmatpush2.xpose.msra.mxu0 0.0
    %2367 = vmatprep.subr.mxu0 0.0
    %2368 = vmatpush2.xpose.msra.mxu0 0.0
    %2369 = vmatprep.subr.mxu0 0.0
    %2370 = vmatpush2.xpose.msra.mxu0 0.0
    %2371 = vmatprep.subr.mxu0 0.0
    %2372 = vmatpush2.xpose.msra.mxu0 0.0
    %2373 = vmatprep.subr.mxu0 0.0
    %2374 = vmatpush2.xpose.msra.mxu0 0.0
    %2375 = vmatprep.subr.mxu0 0.0
    %2376 = vmatpush2.xpose.msra.mxu0 0.0
    %2377 = vmatprep.subr.mxu0 0.0
    %2378 = vmatpush2.xpose.msra.mxu0 0.0
    %2379 = vmatprep.subr.mxu0 0.0
    %2380 = vmatpush2.xpose.msra.mxu0 0.0
    %2381 = vmatprep.subr.mxu0 0.0
    %2382 = vmatpush2.xpose.msra.mxu0 0.0
    %2383 = vmatprep.subr.mxu0 0.0
    %2384 = vmatpush2.xpose.msra.mxu0 0.0
    %2385 = vmatprep.subr.mxu0 0.0
    %2386 = vmatpush2.xpose.msra.mxu0 0.0
    %2387 = vmatprep.subr.mxu0 0.0
    %2388 = vmatpush2.xpose.msra.mxu0 0.0
    %2389 = vmatprep.mubr.f32.mxu0 0.0
    %2390 = vmatmul.mubr.f32.gmra.mxu0 %v2321
    %v2391 = vpop.f32.mrf.mxu0
    %v2392 = vadd.f32 0.0, %v2391
    %v2393 = vpop.f32.mrf.mxu0
    %2394 = vdwg.mxu0
    %v2395 = vmul.f32 %v2392, 0.25
    %v2396 = vsel %vm861, %v2395, -inf
    %2397 = vmax.xlane.f32.xlu0 %v2396
    %v2398 = vpop.xlane.xlu0 %2397
    %v2399 = vsub.f32 %v2395, %v2398
    %v2400 = vmul.f32 %v2399, 1.442695
    %v2401 = vpow.pop %v2400
    %v2402 = vsel %vm861, %v2401, 0.0
    %2403 = vadd.xlane.f32.xlu0 %v2402
    %v2404 = vpop.xlane.xlu0 %2403
    %v2405 = vrcp.pop %v2404
    %v2406 = vmul.f32 %v2401, %v2405
    %2407 = vrot.lane.b32.xlu0 %v2305, 64
    %v2408 = vpop.permute.xlu0 %2407
    %v2411 = vsel %vm861, %v2406, 0
    %2413 = vmatprep.subr.mxu0 0.0
    %2414 = vmatpush1.msra.mxu0 0.0
    %2415 = vmatprep.subr.mxu0 0.0
    %2416 = vmatpush1.msra.mxu0 0.0
    %2417 = vmatprep.subr.mxu0 0.0
    %2418 = vmatpush1.msra.mxu0 0.0
    %2419 = vmatprep.subr.mxu0 0.0
    %2420 = vmatpush1.msra.mxu0 0.0
    %2421 = vmatprep.subr.mxu0 0.0
    %2422 = vmatpush1.msra.mxu0 0.0
    %2423 = vmatprep.subr.mxu0 0.0
    %2424 = vmatpush1.msra.mxu0 0.0
    %2425 = vmatprep.subr.mxu0 0.0
    %2426 = vmatpush1.msra.mxu0 0.0
    %2427 = vmatprep.subr.mxu0 0.0
    %2428 = vmatpush1.msra.mxu0 0.0
    %2429 = vmatprep.subr.mxu0 0.0
    %2430 = vmatpush1.msra.mxu0 0.0
    %2431 = vmatprep.subr.mxu0 0.0
    %2432 = vmatpush1.msra.mxu0 0.0
    %2433 = vmatprep.subr.mxu0 0.0
    %2434 = vmatpush1.msra.mxu0 0.0
    %2435 = vmatprep.subr.mxu0 0.0
    %2436 = vmatpush1.msra.mxu0 0.0
    %2437 = vmatprep.subr.mxu0 0.0
    %2438 = vmatpush1.msra.mxu0 0.0
    %2439 = vmatprep.subr.mxu0 0.0
    %2440 = vmatpush1.msra.mxu0 0.0
    %2441 = vmatprep.subr.mxu0 0.0
    %2442 = vmatpush1.msra.mxu0 0.0
    %2443 = vmatprep.subr.mxu0 0.0
    %2444 = vmatpush1.msra.mxu0 %v2408
    %2445 = vmatprep.subr.mxu0 0.0
    %2446 = vmatpush2.msra.mxu0 0.0
    %2447 = vmatprep.subr.mxu0 0.0
    %2448 = vmatpush2.msra.mxu0 0.0
    %2449 = vmatprep.subr.mxu0 0.0
    %2450 = vmatpush2.msra.mxu0 0.0
    %2451 = vmatprep.subr.mxu0 0.0
    %2452 = vmatpush2.msra.mxu0 0.0
    %2453 = vmatprep.subr.mxu0 0.0
    %2454 = vmatpush2.msra.mxu0 0.0
    %2455 = vmatprep.subr.mxu0 0.0
    %2456 = vmatpush2.msra.mxu0 0.0
    %2457 = vmatprep.subr.mxu0 0.0
    %2458 = vmatpush2.msra.mxu0 0.0
    %2459 = vmatprep.subr.mxu0 0.0
    %2460 = vmatpush2.msra.mxu0 0.0
    %2461 = vmatprep.subr.mxu0 0.0
    %2462 = vmatpush2.msra.mxu0 0.0
    %2463 = vmatprep.subr.mxu0 0.0
    %2464 = vmatpush2.msra.mxu0 0.0
    %2465 = vmatprep.subr.mxu0 0.0
    %2466 = vmatpush2.msra.mxu0 0.0
    %2467 = vmatprep.subr.mxu0 0.0
    %2468 = vmatpush2.msra.mxu0 0.0
    %2469 = vmatprep.subr.mxu0 0.0
    %2470 = vmatpush2.msra.mxu0 0.0
    %2471 = vmatprep.subr.mxu0 0.0
    %2472 = vmatpush2.msra.mxu0 0.0
    %2473 = vmatprep.subr.mxu0 0.0
    %2474 = vmatpush2.msra.mxu0 0.0
    %2475 = vmatprep.subr.mxu0 0.0
    %2476 = vmatpush2.msra.mxu0 0.0
    %2477 = vmatprep.mubr.f32.mxu0 0.0
    %2478 = vmatmul.mubr.f32.gmra.mxu0 %v2411
    %v2479 = vpop.f32.mrf.mxu0
    %v2480 = vadd.f32 0.0, %v2479
    %v2481 = vpop.f32.mrf.mxu0
    %2482 = vdwg.mxu0
    %2483 = vrot.lane.b32.xlu0 %v2305, 112
    %v2484 = vpop.permute.xlu0 %2483
    %2485 = vrot.lane.b32.xlu0 %v2305, 80
    %v2486 = vpop.permute.xlu0 %2485
    %v2487 = vsel %vm785, %v2484, 0
    %v2489 = vsel %vm785, %v2486, 0
    %2491 = vmatprep.subr.mxu0 0.0
    %2492 = vmatpush1.xpose.msra.mxu0 0.0
    %2493 = vmatprep.subr.mxu0 0.0
    %2494 = vmatpush1.xpose.msra.mxu0 0.0
    %2495 = vmatprep.subr.mxu0 0.0
    %2496 = vmatpush1.xpose.msra.mxu0 0.0
    %2497 = vmatprep.subr.mxu0 0.0
    %2498 = vmatpush1.xpose.msra.mxu0 0.0
    %2499 = vmatprep.subr.mxu0 0.0
    %2500 = vmatpush1.xpose.msra.mxu0 0.0
    %2501 = vmatprep.subr.mxu0 0.0
    %2502 = vmatpush1.xpose.msra.mxu0 0.0
    %2503 = vmatprep.subr.mxu0 0.0
    %2504 = vmatpush1.xpose.msra.mxu0 0.0
    %2505 = vmatprep.subr.mxu0 0.0
    %2506 = vmatpush1.xpose.msra.mxu0 0.0
    %2507 = vmatprep.subr.mxu0 0.0
    %2508 = vmatpush1.xpose.msra.mxu0 0.0
    %2509 = vmatprep.subr.mxu0 0.0
    %2510 = vmatpush1.xpose.msra.mxu0 0.0
    %2511 = vmatprep.subr.mxu0 0.0
    %2512 = vmatpush1.xpose.msra.mxu0 0.0
    %2513 = vmatprep.subr.mxu0 0.0
    %2514 = vmatpush1.xpose.msra.mxu0 0.0
    %2515 = vmatprep.subr.mxu0 0.0
    %2516 = vmatpush1.xpose.msra.mxu0 0.0
    %2517 = vmatprep.subr.mxu0 0.0
    %2518 = vmatpush1.xpose.msra.mxu0 0.0
    %2519 = vmatprep.subr.mxu0 0.0
    %2520 = vmatpush1.xpose.msra.mxu0 0.0
    %2521 = vmatprep.subr.mxu0 0.0
    %2522 = vmatpush1.xpose.msra.mxu0 %v2489
    %2523 = vmatprep.subr.mxu0 0.0
    %2524 = vmatpush2.xpose.msra.mxu0 0.0
    %2525 = vmatprep.subr.mxu0 0.0
    %2526 = vmatpush2.xpose.msra.mxu0 0.0
    %2527 = vmatprep.subr.mxu0 0.0
    %2528 = vmatpush2.xpose.msra.mxu0 0.0
    %2529 = vmatprep.subr.mxu0 0.0
    %2530 = vmatpush2.xpose.msra.mxu0 0.0
    %2531 = vmatprep.subr.mxu0 0.0
    %2532 = vmatpush2.xpose.msra.mxu0 0.0
    %2533 = vmatprep.subr.mxu0 0.0
    %2534 = vmatpush2.xpose.msra.mxu0 0.0
    %2535 = vmatprep.subr.mxu0 0.0
    %2536 = vmatpush2.xpose.msra.mxu0 0.0
    %2537 = vmatprep.subr.mxu0 0.0
    %2538 = vmatpush2.xpose.msra.mxu0 0.0
    %2539 = vmatprep.subr.mxu0 0.0
    %2540 = vmatpush2.xpose.msra.mxu0 0.0
    %2541 = vmatprep.subr.mxu0 0.0
    %2542 = vmatpush2.xpose.msra.mxu0 0.0
    %2543 = vmatprep.subr.mxu0 0.0
    %2544 = vmatpush2.xpose.msra.mxu0 0.0
    %2545 = vmatprep.subr.mxu0 0.0
    %2546 = vmatpush2.xpose.msra.mxu0 0.0
    %2547 = vmatprep.subr.mxu0 0.0
    %2548 = vmatpush2.xpose.msra.mxu0 0.0
    %2549 = vmatprep.subr.mxu0 0.0
    %2550 = vmatpush2.xpose.msra.mxu0 0.0
    %2551 = vmatprep.subr.mxu0 0.0
    %2552 = vmatpush2.xpose.msra.mxu0 0.0
    %2553 = vmatprep.subr.mxu0 0.0
    %2554 = vmatpush2.xpose.msra.mxu0 0.0
    %2555 = vmatprep.mubr.f32.mxu0 0.0
    %2556 = vmatmul.mubr.f32.gmra.mxu0 %v2487
    %v2557 = vpop.f32.mrf.mxu0
    %v2558 = vadd.f32 0.0, %v2557
    %v2559 = vpop.f32.mrf.mxu0
    %2560 = vdwg.mxu0
    %v2561 = vmul.f32 %v2558, 0.25
    %v2562 = vsel %vm861, %v2561, -inf
    %2563 = vmax.xlane.f32.xlu0 %v2562
    %v2564 = vpop.xlane.xlu0 %2563
    %v2565 = vsub.f32 %v2561, %v2564
    %v2566 = vmul.f32 %v2565, 1.442695
    %v2567 = vpow.pop %v2566
    %v2568 = vsel %vm861, %v2567, 0.0
    %2569 = vadd.xlane.f32.xlu0 %v2568
    %v2570 = vpop.xlane.xlu0 %2569
    %v2571 = vrcp.pop %v2570
    %v2572 = vmul.f32 %v2567, %v2571
    %2573 = vrot.lane.b32.xlu0 %v2305, 48
    %v2574 = vpop.permute.xlu0 %2573
    %v2577 = vsel %vm861, %v2572, 0
    %2579 = vmatprep.subr.mxu0 0.0
    %2580 = vmatpush1.msra.mxu0 0.0
    %2581 = vmatprep.subr.mxu0 0.0
    %2582 = vmatpush1.msra.mxu0 0.0
    %2583 = vmatprep.subr.mxu0 0.0
    %2584 = vmatpush1.msra.mxu0 0.0
    %2585 = vmatprep.subr.mxu0 0.0
    %2586 = vmatpush1.msra.mxu0 0.0
    %2587 = vmatprep.subr.mxu0 0.0
    %2588 = vmatpush1.msra.mxu0 0.0
    %2589 = vmatprep.subr.mxu0 0.0
    %2590 = vmatpush1.msra.mxu0 0.0
    %2591 = vmatprep.subr.mxu0 0.0
    %2592 = vmatpush1.msra.mxu0 0.0
    %2593 = vmatprep.subr.mxu0 0.0
    %2594 = vmatpush1.msra.mxu0 0.0
    %2595 = vmatprep.subr.mxu0 0.0
    %2596 = vmatpush1.msra.mxu0 0.0
    %2597 = vmatprep.subr.mxu0 0.0
    %2598 = vmatpush1.msra.mxu0 0.0
    %2599 = vmatprep.subr.mxu0 0.0
    %2600 = vmatpush1.msra.mxu0 0.0
    %2601 = vmatprep.subr.mxu0 0.0
    %2602 = vmatpush1.msra.mxu0 0.0
    %2603 = vmatprep.subr.mxu0 0.0
    %2604 = vmatpush1.msra.mxu0 0.0
    %2605 = vmatprep.subr.mxu0 0.0
    %2606 = vmatpush1.msra.mxu0 0.0
    %2607 = vmatprep.subr.mxu0 0.0
    %2608 = vmatpush1.msra.mxu0 0.0
    %2609 = vmatprep.subr.mxu0 0.0
    %2610 = vmatpush1.msra.mxu0 %v2574
    %2611 = vmatprep.subr.mxu0 0.0
    %2612 = vmatpush2.msra.mxu0 0.0
    %2613 = vmatprep.subr.mxu0 0.0
    %2614 = vmatpush2.msra.mxu0 0.0
    %2615 = vmatprep.subr.mxu0 0.0
    %2616 = vmatpush2.msra.mxu0 0.0
    %2617 = vmatprep.subr.mxu0 0.0
    %2618 = vmatpush2.msra.mxu0 0.0
    %2619 = vmatprep.subr.mxu0 0.0
    %2620 = vmatpush2.msra.mxu0 0.0
    %2621 = vmatprep.subr.mxu0 0.0
    %2622 = vmatpush2.msra.mxu0 0.0
    %2623 = vmatprep.subr.mxu0 0.0
    %2624 = vmatpush2.msra.mxu0 0.0
    %2625 = vmatprep.subr.mxu0 0.0
    %2626 = vmatpush2.msra.mxu0 0.0
    %2627 = vmatprep.subr.mxu0 0.0
    %2628 = vmatpush2.msra.mxu0 0.0
    %2629 = vmatprep.subr.mxu0 0.0
    %2630 = vmatpush2.msra.mxu0 0.0
    %2631 = vmatprep.subr.mxu0 0.0
    %2632 = vmatpush2.msra.mxu0 0.0
    %2633 = vmatprep.subr.mxu0 0.0
    %2634 = vmatpush2.msra.mxu0 0.0
    %2635 = vmatprep.subr.mxu0 0.0
    %2636 = vmatpush2.msra.mxu0 0.0
    %2637 = vmatprep.subr.mxu0 0.0
    %2638 = vmatpush2.msra.mxu0 0.0
    %2639 = vmatprep.subr.mxu0 0.0
    %2640 = vmatpush2.msra.mxu0 0.0
    %2641 = vmatprep.subr.mxu0 0.0
    %2642 = vmatpush2.msra.mxu0 0.0
    %2643 = vmatprep.mubr.f32.mxu0 0.0
    %2644 = vmatmul.mubr.f32.gmra.mxu0 %v2577
    %v2645 = vpop.f32.mrf.mxu0
    %v2646 = vadd.f32 0.0, %v2645
    %v2647 = vpop.f32.mrf.mxu0
    %2648 = vdwg.mxu0
    %v2650 = vsel %vm785, %v2646, 0
    %2652 = vmatprep.subr.mxu0 0.0
    %2653 = vmatpush1.msra.mxu0 0.0
    %2654 = vmatprep.subr.mxu0 0.0
    %2655 = vmatpush1.msra.mxu0 0.0
    %2656 = vmatprep.subr.mxu0 0.0
    %2657 = vmatpush1.msra.mxu0 0.0
    %2658 = vmatprep.subr.mxu0 0.0
    %2659 = vmatpush1.msra.mxu0 0.0
    %2660 = vmatprep.subr.mxu0 0.0
    %2661 = vmatpush1.msra.mxu0 0.0
    %2662 = vmatprep.subr.mxu0 0.0
    %2663 = vmatpush1.msra.mxu0 0.0
    %2664 = vmatprep.subr.mxu0 0.0
    %2665 = vmatpush1.msra.mxu0 0.0
    %2666 = vmatprep.subr.mxu0 0.0
    %2667 = vmatpush1.msra.mxu0 0.0
    %2668 = vmatprep.subr.mxu0 0.0
    %2669 = vmatpush1.msra.mxu0 0.0
    %2670 = vmatprep.subr.mxu0 0.0
    %2671 = vmatpush1.msra.mxu0 0.0
    %2672 = vmatprep.subr.mxu0 0.0
    %2673 = vmatpush1.msra.mxu0 0.0
    %2674 = vmatprep.subr.mxu0 0.0
    %2675 = vmatpush1.msra.mxu0 0.0
    %2676 = vmatprep.subr.mxu0 0.0
    %2677 = vmatpush1.msra.mxu0 0.0
    %2678 = vmatprep.subr.mxu0 0.0
    %2679 = vmatpush1.msra.mxu0 0.0
    %2680 = vmatprep.subr.mxu0 0.0
    %2681 = vmatpush1.msra.mxu0 %v2317
    %2682 = vmatprep.subr.mxu0 0.0
    %2683 = vmatpush1.msra.mxu0 %v2316
    %2684 = vmatprep.subr.mxu0 0.0
    %2685 = vmatpush2.msra.mxu0 0.0
    %2686 = vmatprep.subr.mxu0 0.0
    %2687 = vmatpush2.msra.mxu0 0.0
    %2688 = vmatprep.subr.mxu0 0.0
    %2689 = vmatpush2.msra.mxu0 0.0
    %2690 = vmatprep.subr.mxu0 0.0
    %2691 = vmatpush2.msra.mxu0 0.0
    %2692 = vmatprep.subr.mxu0 0.0
    %2693 = vmatpush2.msra.mxu0 0.0
    %2694 = vmatprep.subr.mxu0 0.0
    %2695 = vmatpush2.msra.mxu0 0.0
    %2696 = vmatprep.subr.mxu0 0.0
    %2697 = vmatpush2.msra.mxu0 0.0
    %2698 = vmatprep.subr.mxu0 0.0
    %2699 = vmatpush2.msra.mxu0 0.0
    %2700 = vmatprep.subr.mxu0 0.0
    %2701 = vmatpush2.msra.mxu0 0.0
    %2702 = vmatprep.subr.mxu0 0.0
    %2703 = vmatpush2.msra.mxu0 0.0
    %2704 = vmatprep.subr.mxu0 0.0
    %2705 = vmatpush2.msra.mxu0 0.0
    %2706 = vmatprep.subr.mxu0 0.0
    %2707 = vmatpush2.msra.mxu0 0.0
    %2708 = vmatprep.subr.mxu0 0.0
    %2709 = vmatpush2.msra.mxu0 0.0
    %2710 = vmatprep.subr.mxu0 0.0
    %2711 = vmatpush2.msra.mxu0 0.0
    %2712 = vmatprep.subr.mxu0 0.0
    %2713 = vmatpush2.msra.mxu0 0.0
    %2714 = vmatprep.subr.mxu0 0.0
    %2715 = vmatpush2.msra.mxu0 0.0
    %2716 = vmatprep.mubr.f32.mxu0 0.0
    %2717 = vmatmul.mubr.f32.gmra.mxu0 %v2650
    %v2718 = vpop.f32.mrf.mxu0
    %v2719 = vadd.f32 0.0, %v2718
    %v2720 = vpop.f32.mrf.mxu0
    %2721 = vdwg.mxu0
    %v2723 = vsel %vm785, %v2480, 0
    %2725 = vmatprep.subr.mxu0 0.0
    %2726 = vmatpush1.msra.mxu0 0.0
    %2727 = vmatprep.subr.mxu0 0.0
    %2728 = vmatpush1.msra.mxu0 0.0
    %2729 = vmatprep.subr.mxu0 0.0
    %2730 = vmatpush1.msra.mxu0 0.0
    %2731 = vmatprep.subr.mxu0 0.0
    %2732 = vmatpush1.msra.mxu0 0.0
    %2733 = vmatprep.subr.mxu0 0.0
    %2734 = vmatpush1.msra.mxu0 0.0
    %2735 = vmatprep.subr.mxu0 0.0
    %2736 = vmatpush1.msra.mxu0 0.0
    %2737 = vmatprep.subr.mxu0 0.0
    %2738 = vmatpush1.msra.mxu0 0.0
    %2739 = vmatprep.subr.mxu0 0.0
    %2740 = vmatpush1.msra.mxu0 0.0
    %2741 = vmatprep.subr.mxu0 0.0
    %2742 = vmatpush1.msra.mxu0 0.0
    %2743 = vmatprep.subr.mxu0 0.0
    %2744 = vmatpush1.msra.mxu0 0.0
    %2745 = vmatprep.subr.mxu0 0.0
    %2746 = vmatpush1.msra.mxu0 0.0
    %2747 = vmatprep.subr.mxu0 0.0
    %2748 = vmatpush1.msra.mxu0 0.0
    %2749 = vmatprep.subr.mxu0 0.0
    %2750 = vmatpush1.msra.mxu0 0.0
    %2751 = vmatprep.subr.mxu0 0.0
    %2752 = vmatpush1.msra.mxu0 0.0
    %2753 = vmatprep.subr.mxu0 0.0
    %2754 = vmatpush1.msra.mxu0 %v2315
    %2755 = vmatprep.subr.mxu0 0.0
    %2756 = vmatpush1.msra.mxu0 %v2314
    %2757 = vmatprep.subr.mxu0 0.0
    %2758 = vmatpush2.msra.mxu0 0.0
    %2759 = vmatprep.subr.mxu0 0.0
    %2760 = vmatpush2.msra.mxu0 0.0
    %2761 = vmatprep.subr.mxu0 0.0
    %2762 = vmatpush2.msra.mxu0 0.0
    %2763 = vmatprep.subr.mxu0 0.0
    %2764 = vmatpush2.msra.mxu0 0.0
    %2765 = vmatprep.subr.mxu0 0.0
    %2766 = vmatpush2.msra.mxu0 0.0
    %2767 = vmatprep.subr.mxu0 0.0
    %2768 = vmatpush2.msra.mxu0 0.0
    %2769 = vmatprep.subr.mxu0 0.0
    %2770 = vmatpush2.msra.mxu0 0.0
    %2771 = vmatprep.subr.mxu0 0.0
    %2772 = vmatpush2.msra.mxu0 0.0
    %2773 = vmatprep.subr.mxu0 0.0
    %2774 = vmatpush2.msra.mxu0 0.0
    %2775 = vmatprep.subr.mxu0 0.0
    %2776 = vmatpush2.msra.mxu0 0.0
    %2777 = vmatprep.subr.mxu0 0.0
    %2778 = vmatpush2.msra.mxu0 0.0
    %2779 = vmatprep.subr.mxu0 0.0
    %2780 = vmatpush2.msra.mxu0 0.0
    %2781 = vmatprep.subr.mxu0 0.0
    %2782 = vmatpush2.msra.mxu0 0.0
    %2783 = vmatprep.subr.mxu0 0.0
    %2784 = vmatpush2.msra.mxu0 0.0
    %2785 = vmatprep.subr.mxu0 0.0
    %2786 = vmatpush2.msra.mxu0 0.0
    %2787 = vmatprep.subr.mxu0 0.0
    %2788 = vmatpush2.msra.mxu0 0.0
    %2789 = vmatprep.mubr.f32.mxu0 0.0
    %2790 = vmatmul.mubr.f32.gmra.mxu0 %v2723
    %v2791 = vpop.f32.mrf.mxu0
    %v2792 = vadd.f32 %v2719, %v2791
    %v2793 = vpop.f32.mrf.mxu0
    %2794 = vdwg.mxu0
    %2796 = vrot.lane.b32.xlu0 %v2310, 96
    %v2797 = vpop.permute.xlu0 %2796
    %v2798 = vsel %vm785, %v2310, 0
    %v2800 = vsel %vm785, %v2797, 0
    %2802 = vmatprep.subr.mxu0 0.0
    %2803 = vmatpush1.xpose.msra.mxu0 0.0
    %2804 = vmatprep.subr.mxu0 0.0
    %2805 = vmatpush1.xpose.msra.mxu0 0.0
    %2806 = vmatprep.subr.mxu0 0.0
    %2807 = vmatpush1.xpose.msra.mxu0 0.0
    %2808 = vmatprep.subr.mxu0 0.0
    %2809 = vmatpush1.xpose.msra.mxu0 0.0
    %2810 = vmatprep.subr.mxu0 0.0
    %2811 = vmatpush1.xpose.msra.mxu0 0.0
    %2812 = vmatprep.subr.mxu0 0.0
    %2813 = vmatpush1.xpose.msra.mxu0 0.0
    %2814 = vmatprep.subr.mxu0 0.0
    %2815 = vmatpush1.xpose.msra.mxu0 0.0
    %2816 = vmatprep.subr.mxu0 0.0
    %2817 = vmatpush1.xpose.msra.mxu0 0.0
    %2818 = vmatprep.subr.mxu0 0.0
    %2819 = vmatpush1.xpose.msra.mxu0 0.0
    %2820 = vmatprep.subr.mxu0 0.0
    %2821 = vmatpush1.xpose.msra.mxu0 0.0
    %2822 = vmatprep.subr.mxu0 0.0
    %2823 = vmatpush1.xpose.msra.mxu0 0.0
    %2824 = vmatprep.subr.mxu0 0.0
    %2825 = vmatpush1.xpose.msra.mxu0 0.0
    %2826 = vmatprep.subr.mxu0 0.0
    %2827 = vmatpush1.xpose.msra.mxu0 0.0
    %2828 = vmatprep.subr.mxu0 0.0
    %2829 = vmatpush1.xpose.msra.mxu0 0.0
    %2830 = vmatprep.subr.mxu0 0.0
    %2831 = vmatpush1.xpose.msra.mxu0 0.0
    %2832 = vmatprep.subr.mxu0 0.0
    %2833 = vmatpush1.xpose.msra.mxu0 %v2800
    %2834 = vmatprep.subr.mxu0 0.0
    %2835 = vmatpush2.xpose.msra.mxu0 0.0
    %2836 = vmatprep.subr.mxu0 0.0
    %2837 = vmatpush2.xpose.msra.mxu0 0.0
    %2838 = vmatprep.subr.mxu0 0.0
    %2839 = vmatpush2.xpose.msra.mxu0 0.0
    %2840 = vmatprep.subr.mxu0 0.0
    %2841 = vmatpush2.xpose.msra.mxu0 0.0
    %2842 = vmatprep.subr.mxu0 0.0
    %2843 = vmatpush2.xpose.msra.mxu0 0.0
    %2844 = vmatprep.subr.mxu0 0.0
    %2845 = vmatpush2.xpose.msra.mxu0 0.0
    %2846 = vmatprep.subr.mxu0 0.0
    %2847 = vmatpush2.xpose.msra.mxu0 0.0
    %2848 = vmatprep.subr.mxu0 0.0
    %2849 = vmatpush2.xpose.msra.mxu0 0.0
    %2850 = vmatprep.subr.mxu0 0.0
    %2851 = vmatpush2.xpose.msra.mxu0 0.0
    %2852 = vmatprep.subr.mxu0 0.0
    %2853 = vmatpush2.xpose.msra.mxu0 0.0
    %2854 = vmatprep.subr.mxu0 0.0
    %2855 = vmatpush2.xpose.msra.mxu0 0.0
    %2856 = vmatprep.subr.mxu0 0.0
    %2857 = vmatpush2.xpose.msra.mxu0 0.0
    %2858 = vmatprep.subr.mxu0 0.0
    %2859 = vmatpush2.xpose.msra.mxu0 0.0
    %2860 = vmatprep.subr.mxu0 0.0
    %2861 = vmatpush2.xpose.msra.mxu0 0.0
    %2862 = vmatprep.subr.mxu0 0.0
    %2863 = vmatpush2.xpose.msra.mxu0 0.0
    %2864 = vmatprep.subr.mxu0 0.0
    %2865 = vmatpush2.xpose.msra.mxu0 0.0
    %2866 = vmatprep.mubr.f32.mxu0 0.0
    %2867 = vmatmul.mubr.f32.gmra.mxu0 %v2798
    %v2868 = vpop.f32.mrf.mxu0
    %v2869 = vadd.f32 0.0, %v2868
    %v2870 = vpop.f32.mrf.mxu0
    %2871 = vdwg.mxu0
    %v2872 = vmul.f32 %v2869, 0.25
    %v2873 = vsel %vm861, %v2872, -inf
    %2874 = vmax.xlane.f32.xlu0 %v2873
    %v2875 = vpop.xlane.xlu0 %2874
    %v2876 = vsub.f32 %v2872, %v2875
    %v2877 = vmul.f32 %v2876, 1.442695
    %v2878 = vpow.pop %v2877
    %v2879 = vsel %vm861, %v2878, 0.0
    %2880 = vadd.xlane.f32.xlu0 %v2879
    %v2881 = vpop.xlane.xlu0 %2880
    %v2882 = vrcp.pop %v2881
    %v2883 = vmul.f32 %v2878, %v2882
    %2884 = vrot.lane.b32.xlu0 %v2310, 64
    %v2885 = vpop.permute.xlu0 %2884
    %v2888 = vsel %vm861, %v2883, 0
    %2890 = vmatprep.subr.mxu0 0.0
    %2891 = vmatpush1.msra.mxu0 0.0
    %2892 = vmatprep.subr.mxu0 0.0
    %2893 = vmatpush1.msra.mxu0 0.0
    %2894 = vmatprep.subr.mxu0 0.0
    %2895 = vmatpush1.msra.mxu0 0.0
    %2896 = vmatprep.subr.mxu0 0.0
    %2897 = vmatpush1.msra.mxu0 0.0
    %2898 = vmatprep.subr.mxu0 0.0
    %2899 = vmatpush1.msra.mxu0 0.0
    %2900 = vmatprep.subr.mxu0 0.0
    %2901 = vmatpush1.msra.mxu0 0.0
    %2902 = vmatprep.subr.mxu0 0.0
    %2903 = vmatpush1.msra.mxu0 0.0
    %2904 = vmatprep.subr.mxu0 0.0
    %2905 = vmatpush1.msra.mxu0 0.0
    %2906 = vmatprep.subr.mxu0 0.0
    %2907 = vmatpush1.msra.mxu0 0.0
    %2908 = vmatprep.subr.mxu0 0.0
    %2909 = vmatpush1.msra.mxu0 0.0
    %2910 = vmatprep.subr.mxu0 0.0
    %2911 = vmatpush1.msra.mxu0 0.0
    %2912 = vmatprep.subr.mxu0 0.0
    %2913 = vmatpush1.msra.mxu0 0.0
    %2914 = vmatprep.subr.mxu0 0.0
    %2915 = vmatpush1.msra.mxu0 0.0
    %2916 = vmatprep.subr.mxu0 0.0
    %2917 = vmatpush1.msra.mxu0 0.0
    %2918 = vmatprep.subr.mxu0 0.0
    %2919 = vmatpush1.msra.mxu0 0.0
    %2920 = vmatprep.subr.mxu0 0.0
    %2921 = vmatpush1.msra.mxu0 %v2885
    %2922 = vmatprep.subr.mxu0 0.0
    %2923 = vmatpush2.msra.mxu0 0.0
    %2924 = vmatprep.subr.mxu0 0.0
    %2925 = vmatpush2.msra.mxu0 0.0
    %2926 = vmatprep.subr.mxu0 0.0
    %2927 = vmatpush2.msra.mxu0 0.0
    %2928 = vmatprep.subr.mxu0 0.0
    %2929 = vmatpush2.msra.mxu0 0.0
    %2930 = vmatprep.subr.mxu0 0.0
    %2931 = vmatpush2.msra.mxu0 0.0
    %2932 = vmatprep.subr.mxu0 0.0
    %2933 = vmatpush2.msra.mxu0 0.0
    %2934 = vmatprep.subr.mxu0 0.0
    %2935 = vmatpush2.msra.mxu0 0.0
    %2936 = vmatprep.subr.mxu0 0.0
    %2937 = vmatpush2.msra.mxu0 0.0
    %2938 = vmatprep.subr.mxu0 0.0
    %2939 = vmatpush2.msra.mxu0 0.0
    %2940 = vmatprep.subr.mxu0 0.0
    %2941 = vmatpush2.msra.mxu0 0.0
    %2942 = vmatprep.subr.mxu0 0.0
    %2943 = vmatpush2.msra.mxu0 0.0
    %2944 = vmatprep.subr.mxu0 0.0
    %2945 = vmatpush2.msra.mxu0 0.0
    %2946 = vmatprep.subr.mxu0 0.0
    %2947 = vmatpush2.msra.mxu0 0.0
    %2948 = vmatprep.subr.mxu0 0.0
    %2949 = vmatpush2.msra.mxu0 0.0
    %2950 = vmatprep.subr.mxu0 0.0
    %2951 = vmatpush2.msra.mxu0 0.0
    %2952 = vmatprep.subr.mxu0 0.0
    %2953 = vmatpush2.msra.mxu0 0.0
    %2954 = vmatprep.mubr.f32.mxu0 0.0
    %2955 = vmatmul.mubr.f32.gmra.mxu0 %v2888
    %v2956 = vpop.f32.mrf.mxu0
    %v2957 = vadd.f32 0.0, %v2956
    %v2958 = vpop.f32.mrf.mxu0
    %2959 = vdwg.mxu0
    %2960 = vrot.lane.b32.xlu0 %v2310, 112
    %v2961 = vpop.permute.xlu0 %2960
    %2962 = vrot.lane.b32.xlu0 %v2310, 80
    %v2963 = vpop.permute.xlu0 %2962
    %v2964 = vsel %vm785, %v2961, 0
    %v2966 = vsel %vm785, %v2963, 0
    %2968 = vmatprep.subr.mxu0 0.0
    %2969 = vmatpush1.xpose.msra.mxu0 0.0
    %2970 = vmatprep.subr.mxu0 0.0
    %2971 = vmatpush1.xpose.msra.mxu0 0.0
    %2972 = vmatprep.subr.mxu0 0.0
    %2973 = vmatpush1.xpose.msra.mxu0 0.0
    %2974 = vmatprep.subr.mxu0 0.0
    %2975 = vmatpush1.xpose.msra.mxu0 0.0
    %2976 = vmatprep.subr.mxu0 0.0
    %2977 = vmatpush1.xpose.msra.mxu0 0.0
    %2978 = vmatprep.subr.mxu0 0.0
    %2979 = vmatpush1.xpose.msra.mxu0 0.0
    %2980 = vmatprep.subr.mxu0 0.0
    %2981 = vmatpush1.xpose.msra.mxu0 0.0
    %2982 = vmatprep.subr.mxu0 0.0
    %2983 = vmatpush1.xpose.msra.mxu0 0.0
    %2984 = vmatprep.subr.mxu0 0.0
    %2985 = vmatpush1.xpose.msra.mxu0 0.0
    %2986 = vmatprep.subr.mxu0 0.0
    %2987 = vmatpush1.xpose.msra.mxu0 0.0
    %2988 = vmatprep.subr.mxu0 0.0
    %2989 = vmatpush1.xpose.msra.mxu0 0.0
    %2990 = vmatprep.subr.mxu0 0.0
    %2991 = vmatpush1.xpose.msra.mxu0 0.0
    %2992 = vmatprep.subr.mxu0 0.0
    %2993 = vmatpush1.xpose.msra.mxu0 0.0
    %2994 = vmatprep.subr.mxu0 0.0
    %2995 = vmatpush1.xpose.msra.mxu0 0.0
    %2996 = vmatprep.subr.mxu0 0.0
    %2997 = vmatpush1.xpose.msra.mxu0 0.0
    %2998 = vmatprep.subr.mxu0 0.0
    %2999 = vmatpush1.xpose.msra.mxu0 %v2966
    %3000 = vmatprep.subr.mxu0 0.0
    %3001 = vmatpush2.xpose.msra.mxu0 0.0
    %3002 = vmatprep.subr.mxu0 0.0
    %3003 = vmatpush2.xpose.msra.mxu0 0.0
    %3004 = vmatprep.subr.mxu0 0.0
    %3005 = vmatpush2.xpose.msra.mxu0 0.0
    %3006 = vmatprep.subr.mxu0 0.0
    %3007 = vmatpush2.xpose.msra.mxu0 0.0
    %3008 = vmatprep.subr.mxu0 0.0
    %3009 = vmatpush2.xpose.msra.mxu0 0.0
    %3010 = vmatprep.subr.mxu0 0.0
    %3011 = vmatpush2.xpose.msra.mxu0 0.0
    %3012 = vmatprep.subr.mxu0 0.0
    %3013 = vmatpush2.xpose.msra.mxu0 0.0
    %3014 = vmatprep.subr.mxu0 0.0
    %3015 = vmatpush2.xpose.msra.mxu0 0.0
    %3016 = vmatprep.subr.mxu0 0.0
    %3017 = vmatpush2.xpose.msra.mxu0 0.0
    %3018 = vmatprep.subr.mxu0 0.0
    %3019 = vmatpush2.xpose.msra.mxu0 0.0
    %3020 = vmatprep.subr.mxu0 0.0
    %3021 = vmatpush2.xpose.msra.mxu0 0.0
    %3022 = vmatprep.subr.mxu0 0.0
    %3023 = vmatpush2.xpose.msra.mxu0 0.0
    %3024 = vmatprep.subr.mxu0 0.0
    %3025 = vmatpush2.xpose.msra.mxu0 0.0
    %3026 = vmatprep.subr.mxu0 0.0
    %3027 = vmatpush2.xpose.msra.mxu0 0.0
    %3028 = vmatprep.subr.mxu0 0.0
    %3029 = vmatpush2.xpose.msra.mxu0 0.0
    %3030 = vmatprep.subr.mxu0 0.0
    %3031 = vmatpush2.xpose.msra.mxu0 0.0
    %3032 = vmatprep.mubr.f32.mxu0 0.0
    %3033 = vmatmul.mubr.f32.gmra.mxu0 %v2964
    %v3034 = vpop.f32.mrf.mxu0
    %v3035 = vadd.f32 0.0, %v3034
    %v3036 = vpop.f32.mrf.mxu0
    %3037 = vdwg.mxu0
    %v3038 = vmul.f32 %v3035, 0.25
    %v3039 = vsel %vm861, %v3038, -inf
    %3040 = vmax.xlane.f32.xlu0 %v3039
    %v3041 = vpop.xlane.xlu0 %3040
    %v3042 = vsub.f32 %v3038, %v3041
    %v3043 = vmul.f32 %v3042, 1.442695
    %v3044 = vpow.pop %v3043
    %v3045 = vsel %vm861, %v3044, 0.0
    %3046 = vadd.xlane.f32.xlu0 %v3045
    %v3047 = vpop.xlane.xlu0 %3046
    %v3048 = vrcp.pop %v3047
    %v3049 = vmul.f32 %v3044, %v3048
    %3050 = vrot.lane.b32.xlu0 %v2310, 48
    %v3051 = vpop.permute.xlu0 %3050
    %v3054 = vsel %vm861, %v3049, 0
    %3056 = vmatprep.subr.mxu0 0.0
    %3057 = vmatpush1.msra.mxu0 0.0
    %3058 = vmatprep.subr.mxu0 0.0
    %3059 = vmatpush1.msra.mxu0 0.0
    %3060 = vmatprep.subr.mxu0 0.0
    %3061 = vmatpush1.msra.mxu0 0.0
    %3062 = vmatprep.subr.mxu0 0.0
    %3063 = vmatpush1.msra.mxu0 0.0
    %3064 = vmatprep.subr.mxu0 0.0
    %3065 = vmatpush1.msra.mxu0 0.0
    %3066 = vmatprep.subr.mxu0 0.0
    %3067 = vmatpush1.msra.mxu0 0.0
    %3068 = vmatprep.subr.mxu0 0.0
    %3069 = vmatpush1.msra.mxu0 0.0
    %3070 = vmatprep.subr.mxu0 0.0
    %3071 = vmatpush1.msra.mxu0 0.0
    %3072 = vmatprep.subr.mxu0 0.0
    %3073 = vmatpush1.msra.mxu0 0.0
    %3074 = vmatprep.subr.mxu0 0.0
    %3075 = vmatpush1.msra.mxu0 0.0
    %3076 = vmatprep.subr.mxu0 0.0
    %3077 = vmatpush1.msra.mxu0 0.0
    %3078 = vmatprep.subr.mxu0 0.0
    %3079 = vmatpush1.msra.mxu0 0.0
    %3080 = vmatprep.subr.mxu0 0.0
    %3081 = vmatpush1.msra.mxu0 0.0
    %3082 = vmatprep.subr.mxu0 0.0
    %3083 = vmatpush1.msra.mxu0 0.0
    %3084 = vmatprep.subr.mxu0 0.0
    %3085 = vmatpush1.msra.mxu0 0.0
    %3086 = vmatprep.subr.mxu0 0.0
    %3087 = vmatpush1.msra.mxu0 %v3051
    %3088 = vmatprep.subr.mxu0 0.0
    %3089 = vmatpush2.msra.mxu0 0.0
    %3090 = vmatprep.subr.mxu0 0.0
    %3091 = vmatpush2.msra.mxu0 0.0
    %3092 = vmatprep.subr.mxu0 0.0
    %3093 = vmatpush2.msra.mxu0 0.0
    %3094 = vmatprep.subr.mxu0 0.0
    %3095 = vmatpush2.msra.mxu0 0.0
    %3096 = vmatprep.subr.mxu0 0.0
    %3097 = vmatpush2.msra.mxu0 0.0
    %3098 = vmatprep.subr.mxu0 0.0
    %3099 = vmatpush2.msra.mxu0 0.0
    %3100 = vmatprep.subr.mxu0 0.0
    %3101 = vmatpush2.msra.mxu0 0.0
    %3102 = vmatprep.subr.mxu0 0.0
    %3103 = vmatpush2.msra.mxu0 0.0
    %3104 = vmatprep.subr.mxu0 0.0
    %3105 = vmatpush2.msra.mxu0 0.0
    %3106 = vmatprep.subr.mxu0 0.0
    %3107 = vmatpush2.msra.mxu0 0.0
    %3108 = vmatprep.subr.mxu0 0.0
    %3109 = vmatpush2.msra.mxu0 0.0
    %3110 = vmatprep.subr.mxu0 0.0
    %3111 = vmatpush2.msra.mxu0 0.0
    %3112 = vmatprep.subr.mxu0 0.0
    %3113 = vmatpush2.msra.mxu0 0.0
    %3114 = vmatprep.subr.mxu0 0.0
    %3115 = vmatpush2.msra.mxu0 0.0
    %3116 = vmatprep.subr.mxu0 0.0
    %3117 = vmatpush2.msra.mxu0 0.0
    %3118 = vmatprep.subr.mxu0 0.0
    %3119 = vmatpush2.msra.mxu0 0.0
    %3120 = vmatprep.mubr.f32.mxu0 0.0
    %3121 = vmatmul.mubr.f32.gmra.mxu0 %v3054
    %v3122 = vpop.f32.mrf.mxu0
    %v3123 = vadd.f32 0.0, %v3122
    %v3124 = vpop.f32.mrf.mxu0
    %3125 = vdwg.mxu0
    %v3127 = vsel %vm785, %v3123, 0
    %3129 = vmatprep.subr.mxu0 0.0
    %3130 = vmatpush1.msra.mxu0 0.0
    %3131 = vmatprep.subr.mxu0 0.0
    %3132 = vmatpush1.msra.mxu0 0.0
    %3133 = vmatprep.subr.mxu0 0.0
    %3134 = vmatpush1.msra.mxu0 0.0
    %3135 = vmatprep.subr.mxu0 0.0
    %3136 = vmatpush1.msra.mxu0 0.0
    %3137 = vmatprep.subr.mxu0 0.0
    %3138 = vmatpush1.msra.mxu0 0.0
    %3139 = vmatprep.subr.mxu0 0.0
    %3140 = vmatpush1.msra.mxu0 0.0
    %3141 = vmatprep.subr.mxu0 0.0
    %3142 = vmatpush1.msra.mxu0 0.0
    %3143 = vmatprep.subr.mxu0 0.0
    %3144 = vmatpush1.msra.mxu0 0.0
    %3145 = vmatprep.subr.mxu0 0.0
    %3146 = vmatpush1.msra.mxu0 0.0
    %3147 = vmatprep.subr.mxu0 0.0
    %3148 = vmatpush1.msra.mxu0 0.0
    %3149 = vmatprep.subr.mxu0 0.0
    %3150 = vmatpush1.msra.mxu0 0.0
    %3151 = vmatprep.subr.mxu0 0.0
    %3152 = vmatpush1.msra.mxu0 0.0
    %3153 = vmatprep.subr.mxu0 0.0
    %3154 = vmatpush1.msra.mxu0 0.0
    %3155 = vmatprep.subr.mxu0 0.0
    %3156 = vmatpush1.msra.mxu0 0.0
    %3157 = vmatprep.subr.mxu0 0.0
    %3158 = vmatpush1.msra.mxu0 %v2317
    %3159 = vmatprep.subr.mxu0 0.0
    %3160 = vmatpush1.msra.mxu0 %v2316
    %3161 = vmatprep.subr.mxu0 0.0
    %3162 = vmatpush2.msra.mxu0 0.0
    %3163 = vmatprep.subr.mxu0 0.0
    %3164 = vmatpush2.msra.mxu0 0.0
    %3165 = vmatprep.subr.mxu0 0.0
    %3166 = vmatpush2.msra.mxu0 0.0
    %3167 = vmatprep.subr.mxu0 0.0
    %3168 = vmatpush2.msra.mxu0 0.0
    %3169 = vmatprep.subr.mxu0 0.0
    %3170 = vmatpush2.msra.mxu0 0.0
    %3171 = vmatprep.subr.mxu0 0.0
    %3172 = vmatpush2.msra.mxu0 0.0
    %3173 = vmatprep.subr.mxu0 0.0
    %3174 = vmatpush2.msra.mxu0 0.0
    %3175 = vmatprep.subr.mxu0 0.0
    %3176 = vmatpush2.msra.mxu0 0.0
    %3177 = vmatprep.subr.mxu0 0.0
    %3178 = vmatpush2.msra.mxu0 0.0
    %3179 = vmatprep.subr.mxu0 0.0
    %3180 = vmatpush2.msra.mxu0 0.0
    %3181 = vmatprep.subr.mxu0 0.0
    %3182 = vmatpush2.msra.mxu0 0.0
    %3183 = vmatprep.subr.mxu0 0.0
    %3184 = vmatpush2.msra.mxu0 0.0
    %3185 = vmatprep.subr.mxu0 0.0
    %3186 = vmatpush2.msra.mxu0 0.0
    %3187 = vmatprep.subr.mxu0 0.0
    %3188 = vmatpush2.msra.mxu0 0.0
    %3189 = vmatprep.subr.mxu0 0.0
    %3190 = vmatpush2.msra.mxu0 0.0
    %3191 = vmatprep.subr.mxu0 0.0
    %3192 = vmatpush2.msra.mxu0 0.0
    %3193 = vmatprep.mubr.f32.mxu0 0.0
    %3194 = vmatmul.mubr.f32.gmra.mxu0 %v3127
    %v3195 = vpop.f32.mrf.mxu0
    %v3196 = vadd.f32 0.0, %v3195
    %v3197 = vpop.f32.mrf.mxu0
    %3198 = vdwg.mxu0
    %v3200 = vsel %vm785, %v2957, 0
    %3202 = vmatprep.subr.mxu0 0.0
    %3203 = vmatpush1.msra.mxu0 0.0
    %3204 = vmatprep.subr.mxu0 0.0
    %3205 = vmatpush1.msra.mxu0 0.0
    %3206 = vmatprep.subr.mxu0 0.0
    %3207 = vmatpush1.msra.mxu0 0.0
    %3208 = vmatprep.subr.mxu0 0.0
    %3209 = vmatpush1.msra.mxu0 0.0
    %3210 = vmatprep.subr.mxu0 0.0
    %3211 = vmatpush1.msra.mxu0 0.0
    %3212 = vmatprep.subr.mxu0 0.0
    %3213 = vmatpush1.msra.mxu0 0.0
    %3214 = vmatprep.subr.mxu0 0.0
    %3215 = vmatpush1.msra.mxu0 0.0
    %3216 = vmatprep.subr.mxu0 0.0
    %3217 = vmatpush1.msra.mxu0 0.0
    %3218 = vmatprep.subr.mxu0 0.0
    %3219 = vmatpush1.msra.mxu0 0.0
    %3220 = vmatprep.subr.mxu0 0.0
    %3221 = vmatpush1.msra.mxu0 0.0
    %3222 = vmatprep.subr.mxu0 0.0
    %3223 = vmatpush1.msra.mxu0 0.0
    %3224 = vmatprep.subr.mxu0 0.0
    %3225 = vmatpush1.msra.mxu0 0.0
    %3226 = vmatprep.subr.mxu0 0.0
    %3227 = vmatpush1.msra.mxu0 0.0
    %3228 = vmatprep.subr.mxu0 0.0
    %3229 = vmatpush1.msra.mxu0 0.0
    %3230 = vmatprep.subr.mxu0 0.0
    %3231 = vmatpush1.msra.mxu0 %v2315
    %3232 = vmatprep.subr.mxu0 0.0
    %3233 = vmatpush1.msra.mxu0 %v2314
    %3234 = vmatprep.subr.mxu0 0.0
    %3235 = vmatpush2.msra.mxu0 0.0
    %3236 = vmatprep.subr.mxu0 0.0
    %3237 = vmatpush2.msra.mxu0 0.0
    %3238 = vmatprep.subr.mxu0 0.0
    %3239 = vmatpush2.msra.mxu0 0.0
    %3240 = vmatprep.subr.mxu0 0.0
    %3241 = vmatpush2.msra.mxu0 0.0
    %3242 = vmatprep.subr.mxu0 0.0
    %3243 = vmatpush2.msra.mxu0 0.0
    %3244 = vmatprep.subr.mxu0 0.0
    %3245 = vmatpush2.msra.mxu0 0.0
    %3246 = vmatprep.subr.mxu0 0.0
    %3247 = vmatpush2.msra.mxu0 0.0
    %3248 = vmatprep.subr.mxu0 0.0
    %3249 = vmatpush2.msra.mxu0 0.0
    %3250 = vmatprep.subr.mxu0 0.0
    %3251 = vmatpush2.msra.mxu0 0.0
    %3252 = vmatprep.subr.mxu0 0.0
    %3253 = vmatpush2.msra.mxu0 0.0
    %3254 = vmatprep.subr.mxu0 0.0
    %3255 = vmatpush2.msra.mxu0 0.0
    %3256 = vmatprep.subr.mxu0 0.0
    %3257 = vmatpush2.msra.mxu0 0.0
    %3258 = vmatprep.subr.mxu0 0.0
    %3259 = vmatpush2.msra.mxu0 0.0
    %3260 = vmatprep.subr.mxu0 0.0
    %3261 = vmatpush2.msra.mxu0 0.0
    %3262 = vmatprep.subr.mxu0 0.0
    %3263 = vmatpush2.msra.mxu0 0.0
    %3264 = vmatprep.subr.mxu0 0.0
    %3265 = vmatpush2.msra.mxu0 0.0
    %3266 = vmatprep.mubr.f32.mxu0 0.0
    %3267 = vmatmul.mubr.f32.gmra.mxu0 %v3200
    %v3268 = vpop.f32.mrf.mxu0
    %v3269 = vadd.f32 %v3196, %v3268
    %v3270 = vpop.f32.mrf.mxu0
    %3271 = vdwg.mxu0
    %v3272 = vadd.f32 %v2181, %v2792
    %v3273 = vadd.f32 %v2182, %v3269
    %s3274 = scalar_lea.vmem %s12, 1
    %v3275 = vld [vmem:[%s3274] sm:$0x1]
    %v3277 = vlaneseq
    %v3278 = vshrl.u32 %v3277, 7
    %v3279 = vsub.s32 0, %v3278
    %v3280 = vrot.slane %v3275, %v3279
    %v3282 = vadd.f32 %v3272, %v3280
    %v3283 = vadd.f32 %v3273, %v3280
    %s3284 = scalar_lea.vmem %s13, 32
    %v3285 = vld [vmem:[%s3284] sm:$0xff]
    %v3286 = vld [vmem:[%s3284 + $0x8] sm:$0xff]
    %v3287 = vld [vmem:[%s3284 + $0x10] sm:$0xff]
    %v3288 = vld [vmem:[%s3284 + $0x18] sm:$0xff]
    %3289 = vmatprep.subr.mxu0 0.0
    %3290 = vmatpush1.msra.mxu0 0.0
    %3291 = vmatprep.subr.mxu0 0.0
    %3292 = vmatpush1.msra.mxu0 0.0
    %3293 = vmatprep.subr.mxu0 0.0
    %3294 = vmatpush1.msra.mxu0 0.0
    %3295 = vmatprep.subr.mxu0 0.0
    %3296 = vmatpush1.msra.mxu0 0.0
    %3297 = vmatprep.subr.mxu0 0.0
    %3298 = vmatpush1.msra.mxu0 0.0
    %3299 = vmatprep.subr.mxu0 0.0
    %3300 = vmatpush1.msra.mxu0 0.0
    %3301 = vmatprep.subr.mxu0 0.0
    %3302 = vmatpush1.msra.mxu0 0.0
    %3303 = vmatprep.subr.mxu0 0.0
    %3304 = vmatpush1.msra.mxu0 0.0
    %3305 = vmatprep.subr.mxu0 0.0
    %3306 = vmatpush1.msra.mxu0 0.0
    %3307 = vmatprep.subr.mxu0 0.0
    %3308 = vmatpush1.msra.mxu0 0.0
    %3309 = vmatprep.subr.mxu0 0.0
    %3310 = vmatpush1.msra.mxu0 0.0
    %3311 = vmatprep.subr.mxu0 0.0
    %3312 = vmatpush1.msra.mxu0 0.0
    %3313 = vmatprep.subr.mxu0 0.0
    %3314 = vmatpush1.msra.mxu0 %v3288
    %3315 = vmatprep.subr.mxu0 0.0
    %3316 = vmatpush1.msra.mxu0 %v3287
    %3317 = vmatprep.subr.mxu0 0.0
    %3318 = vmatpush1.msra.mxu0 %v3286
    %3319 = vmatprep.subr.mxu0 0.0
    %3320 = vmatpush1.msra.mxu0 %v3285
    %3321 = vmatprep.subr.mxu0 0.0
    %3322 = vmatpush2.msra.mxu0 0.0
    %3323 = vmatprep.subr.mxu0 0.0
    %3324 = vmatpush2.msra.mxu0 0.0
    %3325 = vmatprep.subr.mxu0 0.0
    %3326 = vmatpush2.msra.mxu0 0.0
    %3327 = vmatprep.subr.mxu0 0.0
    %3328 = vmatpush2.msra.mxu0 0.0
    %3329 = vmatprep.subr.mxu0 0.0
    %3330 = vmatpush2.msra.mxu0 0.0
    %3331 = vmatprep.subr.mxu0 0.0
    %3332 = vmatpush2.msra.mxu0 0.0
    %3333 = vmatprep.subr.mxu0 0.0
    %3334 = vmatpush2.msra.mxu0 0.0
    %3335 = vmatprep.subr.mxu0 0.0
    %3336 = vmatpush2.msra.mxu0 0.0
    %3337 = vmatprep.subr.mxu0 0.0
    %3338 = vmatpush2.msra.mxu0 0.0
    %3339 = vmatprep.subr.mxu0 0.0
    %3340 = vmatpush2.msra.mxu0 0.0
    %3341 = vmatprep.subr.mxu0 0.0
    %3342 = vmatpush2.msra.mxu0 0.0
    %3343 = vmatprep.subr.mxu0 0.0
    %3344 = vmatpush2.msra.mxu0 0.0
    %3345 = vmatprep.subr.mxu0 0.0
    %3346 = vmatpush2.msra.mxu0 0.0
    %3347 = vmatprep.subr.mxu0 0.0
    %3348 = vmatpush2.msra.mxu0 0.0
    %3349 = vmatprep.subr.mxu0 0.0
    %3350 = vmatpush2.msra.mxu0 0.0
    %3351 = vmatprep.subr.mxu0 0.0
    %3352 = vmatpush2.msra.mxu0 0.0
    %3353 = vmatprep.mubr.f32.mxu0 0.0
    %3354 = vmatmul.mubr.f32.gmra.mxu0 %v1754
    %v3355 = vpop.f32.mrf.mxu0
    %v3356 = vadd.f32 0.0, %v3355
    %v3357 = vpop.f32.mrf.mxu0
    %3358 = vdwg.mxu0
    %s3359 = scalar_lea.vmem %s14, 32
    %v3360 = vld [vmem:[%s3359] sm:$0xff]
    %v3361 = vld [vmem:[%s3359 + $0x8] sm:$0xff]
    %v3362 = vld [vmem:[%s3359 + $0x10] sm:$0xff]
    %v3363 = vld [vmem:[%s3359 + $0x18] sm:$0xff]
    %s3364 = scalar_lea.vmem %s15, 1
    %v3365 = vld [vmem:[%s3364] sm:$0x1]
    %v3367 = vlaneseq
    %v3368 = vshrl.u32 %v3367, 7
    %v3369 = vsub.s32 0, %v3368
    %v3370 = vrot.slane %v3365, %v3369
    %v3373 = vsel %vm274, %v3356, 0
    %3375 = vmatprep.subr.mxu0 0.0
    %3376 = vmatpush1.msra.mxu0 0.0
    %3377 = vmatprep.subr.mxu0 0.0
    %3378 = vmatpush1.msra.mxu0 0.0
    %3379 = vmatprep.subr.mxu0 0.0
    %3380 = vmatpush1.msra.mxu0 0.0
    %3381 = vmatprep.subr.mxu0 0.0
    %3382 = vmatpush1.msra.mxu0 0.0
    %3383 = vmatprep.subr.mxu0 0.0
    %3384 = vmatpush1.msra.mxu0 0.0
    %3385 = vmatprep.subr.mxu0 0.0
    %3386 = vmatpush1.msra.mxu0 0.0
    %3387 = vmatprep.subr.mxu0 0.0
    %3388 = vmatpush1.msra.mxu0 0.0
    %3389 = vmatprep.subr.mxu0 0.0
    %3390 = vmatpush1.msra.mxu0 0.0
    %3391 = vmatprep.subr.mxu0 0.0
    %3392 = vmatpush1.msra.mxu0 0.0
    %3393 = vmatprep.subr.mxu0 0.0
    %3394 = vmatpush1.msra.mxu0 0.0
    %3395 = vmatprep.subr.mxu0 0.0
    %3396 = vmatpush1.msra.mxu0 0.0
    %3397 = vmatprep.subr.mxu0 0.0
    %3398 = vmatpush1.msra.mxu0 0.0
    %3399 = vmatprep.subr.mxu0 0.0
    %3400 = vmatpush1.msra.mxu0 %v3363
    %3401 = vmatprep.subr.mxu0 0.0
    %3402 = vmatpush1.msra.mxu0 %v3362
    %3403 = vmatprep.subr.mxu0 0.0
    %3404 = vmatpush1.msra.mxu0 %v3361
    %3405 = vmatprep.subr.mxu0 0.0
    %3406 = vmatpush1.msra.mxu0 %v3360
    %3407 = vmatprep.subr.mxu0 0.0
    %3408 = vmatpush2.msra.mxu0 0.0
    %3409 = vmatprep.subr.mxu0 0.0
    %3410 = vmatpush2.msra.mxu0 0.0
    %3411 = vmatprep.subr.mxu0 0.0
    %3412 = vmatpush2.msra.mxu0 0.0
    %3413 = vmatprep.subr.mxu0 0.0
    %3414 = vmatpush2.msra.mxu0 0.0
    %3415 = vmatprep.subr.mxu0 0.0
    %3416 = vmatpush2.msra.mxu0 0.0
    %3417 = vmatprep.subr.mxu0 0.0
    %3418 = vmatpush2.msra.mxu0 0.0
    %3419 = vmatprep.subr.mxu0 0.0
    %3420 = vmatpush2.msra.mxu0 0.0
    %3421 = vmatprep.subr.mxu0 0.0
    %3422 = vmatpush2.msra.mxu0 0.0
    %3423 = vmatprep.subr.mxu0 0.0
    %3424 = vmatpush2.msra.mxu0 0.0
    %3425 = vmatprep.subr.mxu0 0.0
    %3426 = vmatpush2.msra.mxu0 0.0
    %3427 = vmatprep.subr.mxu0 0.0
    %3428 = vmatpush2.msra.mxu0 0.0
    %3429 = vmatprep.subr.mxu0 0.0
    %3430 = vmatpush2.msra.mxu0 0.0
    %3431 = vmatprep.subr.mxu0 0.0
    %3432 = vmatpush2.msra.mxu0 0.0
    %3433 = vmatprep.subr.mxu0 0.0
    %3434 = vmatpush2.msra.mxu0 0.0
    %3435 = vmatprep.subr.mxu0 0.0
    %3436 = vmatpush2.msra.mxu0 0.0
    %3437 = vmatprep.subr.mxu0 0.0
    %3438 = vmatpush2.msra.mxu0 0.0
    %3439 = vmatprep.mubr.f32.mxu0 0.0
    %3440 = vmatmul.mubr.f32.gmra.mxu0 %v3373
    %v3441 = vpop.f32.mrf.mxu0
    %v3442 = vadd.f32 %v3370, %v3441
    %v3443 = vpop.f32.mrf.mxu0
    %3444 = vdwg.mxu0
    %v3445 = vlaneseq
    %v3446 = vshrl.u32 %v3445, 7
    %v3447 = vsub.s32 0, %v3446
    %v3448 = vrot.slane %v3442, %v3447
    %v3449 = vlaneseq
    %v3450 = vshrl.u32 %v3449, 7
    %v3451 = vsub.s32 1, %v3450
    %v3452 = vrot.slane %v3442, %v3451
    %v3453 = vadd.f32 %v3282, %v3448
    %v3454 = vadd.f32 %v3283, %v3452
    %v3455 = vsel %vm274, %v3453, 0.0
    %3456 = vadd.xlane.f32.xlu0 %v3455
    %v3457 = vpop.xlane.xlu0 %3456
    %v3458 = vsel %vm274, %v3454, 0.0
    %3459 = vadd.xlane.f32.xlu0 %v3458
    %v3460 = vpop.xlane.xlu0 %3459
    %v3461 = vmul.f32 %v3457, %v658
    %v3462 = vmul.f32 %v3460, %v658
    %v3463 = vsub.f32 %v3453, %v3461
    %v3464 = vsub.f32 %v3454, %v3462
    %v3465 = vmul.f32 %v3463, %v3463
    %v3466 = vmul.f32 %v3464, %v3464
    %v3467 = vsel %vm274, %v3465, 0.0
    %3468 = vadd.xlane.f32.xlu0 %v3467
    %v3469 = vpop.xlane.xlu0 %3468
    %v3470 = vsel %vm274, %v3466, 0.0
    %3471 = vadd.xlane.f32.xlu0 %v3470
    %v3472 = vpop.xlane.xlu0 %3471
    %v3473 = vmul.f32 %v3469, %v658
    %v3474 = vmul.f32 %v3472, %v658
    %v3475 = vadd.f32 %v3473, 1e-05
    %v3476 = vadd.f32 %v3474, 1e-05
    %v3477 = vrsqrt.pop %v3475
    %v3478 = vrsqrt.pop %v3476
    %v3479 = vmul.f32 %v3463, %v3477
    %v3480 = vmul.f32 %v3464, %v3478
    %v3481 = vadd.f32 %v546, 1.0
    %v3482 = vadd.f32 %v558, 1.0
    %3485 = vrot.lane.b32.xlu0 %v3481, 64
    %v3486 = vpop.permute.xlu0 %3485
    %3487 = vrot.lane.b32.xlu0 %v3482, 64
    %v3488 = vpop.permute.xlu0 %3487
    %v3491 = vmul.f32 %v3479, %v3486
    %v3492 = vmul.f32 %v3480, %v3488
    %3495 = vrot.lane.b32.xlu0 %v546, 32
    %v3496 = vpop.permute.xlu0 %3495
    %3497 = vrot.lane.b32.xlu0 %v558, 32
    %v3498 = vpop.permute.xlu0 %3497
    %v3501 = vadd.f32 %v3491, %v3496
    %v3502 = vadd.f32 %v3492, %v3498
    %s3503 = scalar_lea.vmem %s16, 64
    %v3504 = vld [vmem:[%s3503] sm:$0xff]
    %v3505 = vld [vmem:[%s3503 + $0x8] sm:$0xff]
    %v3506 = vld [vmem:[%s3503 + $0x10] sm:$0xff]
    %v3507 = vld [vmem:[%s3503 + $0x18] sm:$0xff]
    %v3508 = vld [vmem:[%s3503 + $0x20] sm:$0xff]
    %v3509 = vld [vmem:[%s3503 + $0x28] sm:$0xff]
    %v3510 = vld [vmem:[%s3503 + $0x30] sm:$0xff]
    %v3511 = vld [vmem:[%s3503 + $0x38] sm:$0xff]
    %s3512 = scalar_lea.vmem %s17, 2
    %v3513 = vld [vmem:[%s3512] sm:$0x3]
    %v3515 = vlaneseq
    %v3516 = vshrl.u32 %v3515, 7
    %v3517 = vsub.s32 0, %v3516
    %v3518 = vrot.slane %v3513, %v3517
    %v3519 = vlaneseq
    %v3520 = vshrl.u32 %v3519, 7
    %v3521 = vsub.s32 1, %v3520
    %v3522 = vrot.slane %v3513, %v3521
    %v3526 = vsel %vm274, %v3501, 0
    %v3529 = vsel %vm274, %v3502, 0
    %3531 = vmatprep.subr.mxu0 0.0
    %3532 = vmatpush1.msra.mxu0 0.0
    %3533 = vmatprep.subr.mxu0 0.0
    %3534 = vmatpush1.msra.mxu0 0.0
    %3535 = vmatprep.subr.mxu0 0.0
    %3536 = vmatpush1.msra.mxu0 0.0
    %3537 = vmatprep.subr.mxu0 0.0
    %3538 = vmatpush1.msra.mxu0 0.0
    %3539 = vmatprep.subr.mxu0 0.0
    %3540 = vmatpush1.msra.mxu0 0.0
    %3541 = vmatprep.subr.mxu0 0.0
    %3542 = vmatpush1.msra.mxu0 0.0
    %3543 = vmatprep.subr.mxu0 0.0
    %3544 = vmatpush1.msra.mxu0 0.0
    %3545 = vmatprep.subr.mxu0 0.0
    %3546 = vmatpush1.msra.mxu0 0.0
    %3547 = vmatprep.subr.mxu0 0.0
    %3548 = vmatpush1.msra.mxu0 0.0
    %3549 = vmatprep.subr.mxu0 0.0
    %3550 = vmatpush1.msra.mxu0 0.0
    %3551 = vmatprep.subr.mxu0 0.0
    %3552 = vmatpush1.msra.mxu0 0.0
    %3553 = vmatprep.subr.mxu0 0.0
    %3554 = vmatpush1.msra.mxu0 0.0
    %3555 = vmatprep.subr.mxu0 %v3511
    %3556 = vmatpush1.msra.mxu0 %v3510
    %3557 = vmatprep.subr.mxu0 %v3509
    %3558 = vmatpush1.msra.mxu0 %v3508
    %3559 = vmatprep.subr.mxu0 %v3507
    %3560 = vmatpush1.msra.mxu0 %v3506
    %3561 = vmatprep.subr.mxu0 %v3505
    %3562 = vmatpush1.msra.mxu0 %v3504
    %3563 = vmatprep.subr.mxu0 0.0
    %3564 = vmatpush2.msra.mxu0 0.0
    %3565 = vmatprep.subr.mxu0 0.0
    %3566 = vmatpush2.msra.mxu0 0.0
    %3567 = vmatprep.subr.mxu0 0.0
    %3568 = vmatpush2.msra.mxu0 0.0
    %3569 = vmatprep.subr.mxu0 0.0
    %3570 = vmatpush2.msra.mxu0 0.0
    %3571 = vmatprep.subr.mxu0 0.0
    %3572 = vmatpush2.msra.mxu0 0.0
    %3573 = vmatprep.subr.mxu0 0.0
    %3574 = vmatpush2.msra.mxu0 0.0
    %3575 = vmatprep.subr.mxu0 0.0
    %3576 = vmatpush2.msra.mxu0 0.0
    %3577 = vmatprep.subr.mxu0 0.0
    %3578 = vmatpush2.msra.mxu0 0.0
    %3579 = vmatprep.subr.mxu0 0.0
    %3580 = vmatpush2.msra.mxu0 0.0
    %3581 = vmatprep.subr.mxu0 0.0
    %3582 = vmatpush2.msra.mxu0 0.0
    %3583 = vmatprep.subr.mxu0 0.0
    %3584 = vmatpush2.msra.mxu0 0.0
    %3585 = vmatprep.subr.mxu0 0.0
    %3586 = vmatpush2.msra.mxu0 0.0
    %3587 = vmatprep.subr.mxu0 0.0
    %3588 = vmatpush2.msra.mxu0 0.0
    %3589 = vmatprep.subr.mxu0 0.0
    %3590 = vmatpush2.msra.mxu0 0.0
    %3591 = vmatprep.subr.mxu0 0.0
    %3592 = vmatpush2.msra.mxu0 0.0
    %3593 = vmatprep.subr.mxu0 0.0
    %3594 = vmatpush2.msra.mxu0 0.0
    %3595 = vmatprep.mubr.f32.mxu0 0.0
    %3596 = vmatmul.mubr.f32.gmra.mxu0 %v3526
    %v3597 = vpop.f32.mrf.mxu0
    %v3598 = vadd.f32 %v3518, %v3597
    %v3599 = vpop.f32.mrf.mxu0
    %v3600 = vadd.f32 %v3522, %v3599
    %3601 = vmatprep.mubr.f32.mxu0 0.0
    %3602 = vmatmul.mubr.f32.gmra.mxu0 %v3529
    %v3603 = vpop.f32.mrf.mxu0
    %v3604 = vadd.f32 %v3518, %v3603
    %v3605 = vpop.f32.mrf.mxu0
    %v3606 = vadd.f32 %v3522, %v3605
    %3607 = vdwg.mxu0
    %v3608 = vmul.f32 %v3600, %v3600
    %v3609 = vmul.f32 %v3606, %v3606
    %v3610 = vmul.f32 %v3600, %v3608
    %v3611 = vmul.f32 %v3606, %v3609
    %v3612 = vmul.f32 %v3610, 0.044715
    %v3613 = vmul.f32 %v3611, 0.044715
    %v3614 = vadd.f32 %v3600, %v3612
    %v3615 = vadd.f32 %v3606, %v3613
    %v3616 = vmul.f32 %v3614, 0.7978846
    %v3617 = vmul.f32 %v3615, 0.7978846
    %v3618 = vtanh.pop %v3616
    %v3619 = vtanh.pop %v3617
    %v3620 = vadd.f32 %v3618, 1.0
    %v3621 = vadd.f32 %v3619, 1.0
    %v3622 = vmul.f32 %v3620, 0.5
    %v3623 = vmul.f32 %v3621, 0.5
    %v3624 = vmul.f32 %v3600, %v3622
    %v3625 = vmul.f32 %v3606, %v3623
    %v3626 = vmul.f32 %v3598, %v3624
    %v3627 = vmul.f32 %v3604, %v3625
    %s3628 = scalar_lea.vmem %s18, 128
    %v3629 = vld [vmem:[%s3628] sm:$0xff]
    %v3630 = vld [vmem:[%s3628 + $0x8] sm:$0xff]
    %v3631 = vld [vmem:[%s3628 + $0x10] sm:$0xff]
    %v3632 = vld [vmem:[%s3628 + $0x18] sm:$0xff]
    %v3633 = vld [vmem:[%s3628 + $0x20] sm:$0xff]
    %v3634 = vld [vmem:[%s3628 + $0x28] sm:$0xff]
    %v3635 = vld [vmem:[%s3628 + $0x30] sm:$0xff]
    %v3636 = vld [vmem:[%s3628 + $0x38] sm:$0xff]
    %v3637 = vld [vmem:[%s3628 + $0x40] sm:$0xff]
    %v3638 = vld [vmem:[%s3628 + $0x48] sm:$0xff]
    %v3639 = vld [vmem:[%s3628 + $0x50] sm:$0xff]
    %v3640 = vld [vmem:[%s3628 + $0x58] sm:$0xff]
    %v3641 = vld [vmem:[%s3628 + $0x60] sm:$0xff]
    %v3642 = vld [vmem:[%s3628 + $0x68] sm:$0xff]
    %v3643 = vld [vmem:[%s3628 + $0x70] sm:$0xff]
    %v3644 = vld [vmem:[%s3628 + $0x78] sm:$0xff]
    %s3645 = scalar_lea.vmem %s19, 1
    %v3646 = vld [vmem:[%s3645] sm:$0x1]
    %v3648 = vlaneseq
    %v3649 = vshrl.u32 %v3648, 7
    %v3650 = vsub.s32 0, %v3649
    %v3651 = vrot.slane %v3646, %v3650
    %3653 = vmatprep.subr.mxu0 0.0
    %3654 = vmatpush1.msra.mxu0 %v3644
    %3655 = vmatprep.subr.mxu0 0.0
    %3656 = vmatpush1.msra.mxu0 %v3643
    %3657 = vmatprep.subr.mxu0 0.0
    %3658 = vmatpush1.msra.mxu0 %v3642
    %3659 = vmatprep.subr.mxu0 0.0
    %3660 = vmatpush1.msra.mxu0 %v3641
    %3661 = vmatprep.subr.mxu0 0.0
    %3662 = vmatpush1.msra.mxu0 %v3640
    %3663 = vmatprep.subr.mxu0 0.0
    %3664 = vmatpush1.msra.mxu0 %v3639
    %3665 = vmatprep.subr.mxu0 0.0
    %3666 = vmatpush1.msra.mxu0 %v3638
    %3667 = vmatprep.subr.mxu0 0.0
    %3668 = vmatpush1.msra.mxu0 %v3637
    %3669 = vmatprep.subr.mxu0 0.0
    %3670 = vmatpush1.msra.mxu0 %v3636
    %3671 = vmatprep.subr.mxu0 0.0
    %3672 = vmatpush1.msra.mxu0 %v3635
    %3673 = vmatprep.subr.mxu0 0.0
    %3674 = vmatpush1.msra.mxu0 %v3634
    %3675 = vmatprep.subr.mxu0 0.0
    %3676 = vmatpush1.msra.mxu0 %v3633
    %3677 = vmatprep.subr.mxu0 0.0
    %3678 = vmatpush1.msra.mxu0 %v3632
    %3679 = vmatprep.subr.mxu0 0.0
    %3680 = vmatpush1.msra.mxu0 %v3631
    %3681 = vmatprep.subr.mxu0 0.0
    %3682 = vmatpush1.msra.mxu0 %v3630
    %3683 = vmatprep.subr.mxu0 0.0
    %3684 = vmatpush1.msra.mxu0 %v3629
    %3685 = vmatprep.subr.mxu0 0.0
    %3686 = vmatpush2.msra.mxu0 0.0
    %3687 = vmatprep.subr.mxu0 0.0
    %3688 = vmatpush2.msra.mxu0 0.0
    %3689 = vmatprep.subr.mxu0 0.0
    %3690 = vmatpush2.msra.mxu0 0.0
    %3691 = vmatprep.subr.mxu0 0.0
    %3692 = vmatpush2.msra.mxu0 0.0
    %3693 = vmatprep.subr.mxu0 0.0
    %3694 = vmatpush2.msra.mxu0 0.0
    %3695 = vmatprep.subr.mxu0 0.0
    %3696 = vmatpush2.msra.mxu0 0.0
    %3697 = vmatprep.subr.mxu0 0.0
    %3698 = vmatpush2.msra.mxu0 0.0
    %3699 = vmatprep.subr.mxu0 0.0
    %3700 = vmatpush2.msra.mxu0 0.0
    %3701 = vmatprep.subr.mxu0 0.0
    %3702 = vmatpush2.msra.mxu0 0.0
    %3703 = vmatprep.subr.mxu0 0.0
    %3704 = vmatpush2.msra.mxu0 0.0
    %3705 = vmatprep.subr.mxu0 0.0
    %3706 = vmatpush2.msra.mxu0 0.0
    %3707 = vmatprep.subr.mxu0 0.0
    %3708 = vmatpush2.msra.mxu0 0.0
    %3709 = vmatprep.subr.mxu0 0.0
    %3710 = vmatpush2.msra.mxu0 0.0
    %3711 = vmatprep.subr.mxu0 0.0
    %3712 = vmatpush2.msra.mxu0 0.0
    %3713 = vmatprep.subr.mxu0 0.0
    %3714 = vmatpush2.msra.mxu0 0.0
    %3715 = vmatprep.subr.mxu0 0.0
    %3716 = vmatpush2.msra.mxu0 0.0
    %3717 = vmatprep.mubr.f32.mxu0 0.0
    %3718 = vmatmul.mubr.f32.gmra.mxu0 %v3626
    %v3719 = vpop.f32.mrf.mxu0
    %v3720 = vadd.f32 %v3651, %v3719
    %v3721 = vpop.f32.mrf.mxu0
    %3722 = vmatprep.mubr.f32.mxu0 0.0
    %3723 = vmatmul.mubr.f32.gmra.mxu0 %v3627
    %v3724 = vpop.f32.mrf.mxu0
    %v3725 = vadd.f32 %v3651, %v3724
    %v3726 = vpop.f32.mrf.mxu0
    %3727 = vdwg.mxu0
    %v3728 = vadd.f32 %v3453, %v3720
    %v3729 = vadd.f32 %v3454, %v3725
    %v3730 = vsel %vm274, %v3728, 0.0
    %3731 = vadd.xlane.f32.xlu0 %v3730
    %v3732 = vpop.xlane.xlu0 %3731
    %v3733 = vsel %vm274, %v3729, 0.0
    %3734 = vadd.xlane.f32.xlu0 %v3733
    %v3735 = vpop.xlane.xlu0 %3734
    %v3736 = vmul.f32 %v3732, %v658
    %v3737 = vmul.f32 %v3735, %v658
    %v3738 = vsub.f32 %v3728, %v3736
    %v3739 = vsub.f32 %v3729, %v3737
    %v3740 = vmul.f32 %v3738, %v3738
    %v3741 = vmul.f32 %v3739, %v3739
    %v3742 = vsel %vm274, %v3740, 0.0
    %3743 = vadd.xlane.f32.xlu0 %v3742
    %v3744 = vpop.xlane.xlu0 %3743
    %v3745 = vsel %vm274, %v3741, 0.0
    %3746 = vadd.xlane.f32.xlu0 %v3745
    %v3747 = vpop.xlane.xlu0 %3746
    %v3748 = vmul.f32 %v3744, %v658
    %v3749 = vmul.f32 %v3747, %v658
    %v3750 = vadd.f32 %v3748, 1e-05
    %v3751 = vadd.f32 %v3749, 1e-05
    %v3752 = vrsqrt.pop %v3750
    %v3753 = vrsqrt.pop %v3751
    %v3754 = vmul.f32 %v3738, %v3752
    %v3755 = vmul.f32 %v3739, %v3753
    %v3756 = vld [vmem:[%s20] sm:$0x1]
    %v3758 = vlaneseq
    %v3759 = vshrl.u32 %v3758, 7
    %v3760 = vsub.s32 0, %v3759
    %v3761 = vrot.slane %v3756, %v3760
    %v3763 = vmul.f32 %v3754, %v3761
    %v3764 = vmul.f32 %v3755, %v3761
    %v3765 = vld [vmem:[%s21] sm:$0x1]
    %v3767 = vlaneseq
    %v3768 = vshrl.u32 %v3767, 7
    %v3769 = vsub.s32 0, %v3768
    %v3770 = vrot.slane %v3765, %v3769
    %v3772 = vadd.f32 %v3763, %v3770
    %v3773 = vadd.f32 %v3764, %v3770
    %v3774 = vld [vmem:[%s22] sm:$0xff]
    %v3775 = vld [vmem:[%s22 + $0x8] sm:$0xff]
    %v3776 = vld [vmem:[%s22 + $0x10] sm:$0xff]
    %v3777 = vld [vmem:[%s22 + $0x18] sm:$0xff]
    %v3779 = vsel %vm274, %v3772, 0
    %v3782 = vsel %vm274, %v3773, 0
    %3784 = vmatprep.subr.mxu0 0.0
    %3785 = vmatpush1.msra.mxu0 0.0
    %3786 = vmatprep.subr.mxu0 0.0
    %3787 = vmatpush1.msra.mxu0 0.0
    %3788 = vmatprep.subr.mxu0 0.0
    %3789 = vmatpush1.msra.mxu0 0.0
    %3790 = vmatprep.subr.mxu0 0.0
    %3791 = vmatpush1.msra.mxu0 0.0
    %3792 = vmatprep.subr.mxu0 0.0
    %3793 = vmatpush1.msra.mxu0 0.0
    %3794 = vmatprep.subr.mxu0 0.0
    %3795 = vmatpush1.msra.mxu0 0.0
    %3796 = vmatprep.subr.mxu0 0.0
    %3797 = vmatpush1.msra.mxu0 0.0
    %3798 = vmatprep.subr.mxu0 0.0
    %3799 = vmatpush1.msra.mxu0 0.0
    %3800 = vmatprep.subr.mxu0 0.0
    %3801 = vmatpush1.msra.mxu0 0.0
    %3802 = vmatprep.subr.mxu0 0.0
    %3803 = vmatpush1.msra.mxu0 0.0
    %3804 = vmatprep.subr.mxu0 0.0
    %3805 = vmatpush1.msra.mxu0 0.0
    %3806 = vmatprep.subr.mxu0 0.0
    %3807 = vmatpush1.msra.mxu0 0.0
    %3808 = vmatprep.subr.mxu0 0.0
    %3809 = vmatpush1.msra.mxu0 %v3777
    %3810 = vmatprep.subr.mxu0 0.0
    %3811 = vmatpush1.msra.mxu0 %v3776
    %3812 = vmatprep.subr.mxu0 0.0
    %3813 = vmatpush1.msra.mxu0 %v3775
    %3814 = vmatprep.subr.mxu0 0.0
    %3815 = vmatpush1.msra.mxu0 %v3774
    %3816 = vmatprep.subr.mxu0 0.0
    %3817 = vmatpush2.msra.mxu0 0.0
    %3818 = vmatprep.subr.mxu0 0.0
    %3819 = vmatpush2.msra.mxu0 0.0
    %3820 = vmatprep.subr.mxu0 0.0
    %3821 = vmatpush2.msra.mxu0 0.0
    %3822 = vmatprep.subr.mxu0 0.0
    %3823 = vmatpush2.msra.mxu0 0.0
    %3824 = vmatprep.subr.mxu0 0.0
    %3825 = vmatpush2.msra.mxu0 0.0
    %3826 = vmatprep.subr.mxu0 0.0
    %3827 = vmatpush2.msra.mxu0 0.0
    %3828 = vmatprep.subr.mxu0 0.0
    %3829 = vmatpush2.msra.mxu0 0.0
    %3830 = vmatprep.subr.mxu0 0.0
    %3831 = vmatpush2.msra.mxu0 0.0
    %3832 = vmatprep.subr.mxu0 0.0
    %3833 = vmatpush2.msra.mxu0 0.0
    %3834 = vmatprep.subr.mxu0 0.0
    %3835 = vmatpush2.msra.mxu0 0.0
    %3836 = vmatprep.subr.mxu0 0.0
    %3837 = vmatpush2.msra.mxu0 0.0
    %3838 = vmatprep.subr.mxu0 0.0
    %3839 = vmatpush2.msra.mxu0 0.0
    %3840 = vmatprep.subr.mxu0 0.0
    %3841 = vmatpush2.msra.mxu0 0.0
    %3842 = vmatprep.subr.mxu0 0.0
    %3843 = vmatpush2.msra.mxu0 0.0
    %3844 = vmatprep.subr.mxu0 0.0
    %3845 = vmatpush2.msra.mxu0 0.0
    %3846 = vmatprep.subr.mxu0 0.0
    %3847 = vmatpush2.msra.mxu0 0.0
    %3848 = vmatprep.mubr.f32.mxu0 0.0
    %3849 = vmatmul.mubr.f32.gmra.mxu0 %v3779
    %v3850 = vpop.f32.mrf.mxu0
    %v3851 = vadd.f32 0.0, %v3850
    %v3852 = vpop.f32.mrf.mxu0
    %3853 = vmatprep.mubr.f32.mxu0 0.0
    %3854 = vmatmul.mubr.f32.gmra.mxu0 %v3782
    %v3855 = vpop.f32.mrf.mxu0
    %v3856 = vadd.f32 0.0, %v3855
    %v3857 = vpop.f32.mrf.mxu0
    %3858 = vdwg.mxu0
    %3859 = vst [vmem:[#allocation11] sm:$0xff] %v3851
    %3860 = vst [vmem:[#allocation11 + $0x8] sm:$0xff] %v3856
    // Predicated region
    $region114: #{tpu_custom_call.1} parent=1 // pred_check
      _
    $region115: #{tpu_custom_call.1} parent=1 // pred_check_branch
      %3862 = sbr.rel (0) target = $region117
    $region116: #{tpu_custom_call.1} parent=1 // pred_region
      %s3864 = ssub.s32 256, 256
      %3865 = vsyncadd [#allocation4], %s3864
      %s3866 = sshll.u32 [#allocation11], 4
      %s3867 = int_to_ptr.vmem [resolvable:$true] %s3866
      %3872 = dma.vmem_to_hbm [thread:$0]  %s3867, 256, %s23, [#allocation4], 128, 128, 8
    $region117: #{tpu_custom_call.1} parent=1 // pred_fallthru
      _
    // Predicated region
    $region118: #{tpu_custom_call.1} parent=1 // pred_check
      _
    $region119: #{tpu_custom_call.1} parent=1 // pred_check_branch
      %3874 = sbr.rel (0) target = $region121
    $region120: #{tpu_custom_call.1} parent=1 // pred_region
      %3875 = dma.done [#allocation4], 256
    $region121: #{tpu_custom_call.1} parent=1 // pred_fallthru
      _
    %3876 = vsyncpa [#allocation3], 1
    %3877 = vsyncpa [#allocation6], 1
    %3878 = vsyncpa [#allocation9], 1
    %3879 = vsyncpa [#allocation4], 1

</llo_original>
